<compile_context>
chip_gen: v7x
topology: tpu7x:2x2x1
jax: 0.10.0
libtpu: 0.0.40
codegen_flags: <defaults>
</compile_context>

<pallas_src>
import jax
import jax.numpy as jnp
from jax.experimental import pallas as pl
from jax.experimental.pallas import tpu as pltpu

ZS_DIM = 512


def _elu(y):
    # ELU(alpha=1).  (expm1 would be marginally more accurate for tiny |y|; the
    # exp-1 form is kept for its guaranteed Mosaic lowering -- the difference is
    # orders of magnitude below the test tolerance.)
    return jnp.where(y > 0, y, jnp.exp(jnp.minimum(y, 0.0)) - 1.0)


# ============================================================================
# Kernel 1: fused conv stack (conv1..conv4 + bias + ELU), one batch element per
#           grid step, channels-last activations resident in VMEM scratch.
#
# Geometry for 84x84 inputs (implied by Linear(1568 = 32*7*7, 512)):
#   conv1 3x3 s2 : 84x84 -> 41x41
#   conv2 3x3 s2 : 41x41 -> 20x20
#   conv3 3x3 s2 : 20x20 ->  9x9
#   conv4 3x3 s1 :  9x9  ->  7x7
# ============================================================================
def _cnn_stack_kernel(p1_ref, w1_ref, w2_ref, w3_ref, w4_ref, b_ref,
                      o_ref, a1, a2, a3):
    # ---- conv1: patches were im2col'ed in the wrapper (rows = 41*41 output
    #      positions, K = 9*C).  One (41, K) x (K, 32) dot per output row.
    w1 = w1_ref[...]                       # (9*C, 32) bf16, hoisted
    b1 = b_ref[0:1, :]                     # (1, 32)   f32

    def c1_row(oh, carry):
        x = p1_ref[pl.ds(oh * 41, 41), :].astype(jnp.bfloat16)
        y = jnp.dot(x, w1, preferred_element_type=jnp.float32) + b1
        a1[pl.ds(oh * 41, 41), :] = _elu(y)
        return carry

    jax.lax.fori_loop(0, 41, c1_row, 0)

    # ---- conv2..conv4: 9 shifted (strided) row loads from the VMEM-resident
    #      activation + per-tap (Wo, Cin) x (Cin, 32) MXU dots, f32 accumulator.
    def conv3x3(src, dst, Wi, Ho, Wo, stride, w_ref, li):
        ws = [w_ref[t] for t in range(9)]  # hoisted: 9 x (Cin, 32) bf16
        bias = b_ref[li:li + 1, :]         # (1, 32) f32

        def row(oh, carry):
            base = stride * oh * Wi
            acc = jnp.zeros((Wo, 32), jnp.float32)
            for t in range(9):
                i, j = t // 3, t % 3
                start = base + i * Wi + j
                if stride == 1:
                    x = src[pl.ds(start, Wo), :]
                else:
                    x = src[pl.ds(start, Wo, stride), :]
                acc = acc + jnp.dot(x.astype(jnp.bfloat16), ws[t],
                                    preferred_element_type=jnp.float32)
            dst[pl.ds(oh * Wo, Wo), :] = _elu(acc + bias)
            return carry

        jax.lax.fori_loop(0, Ho, row, 0)

    conv3x3(a1, a2, 41, 20, 20, 2, w2_ref, 1)
    conv3x3(a2, a3, 20, 9, 9, 2, w3_ref, 2)
    conv3x3(a3, o_ref, 9, 7, 7, 1, w4_ref, 3)


def _im2col3x3_s2(x_nhwc):
    """(B, H, W, C) -> (B, Ho*Wo, 9*C) patches for a 3x3 stride-2 valid conv.
    K order = (tap, cin) with tap = i*3+j, matching the prepped conv1 weight."""
    B, H, W, C = x_nhwc.shape
    Ho = (H - 3) // 2 + 1
    Wo = (W - 3) // 2 + 1
    taps = [x_nhwc[:, i:i + 2 * Ho:2, j:j + 2 * Wo:2, :]
            for i in range(3) for j in range(3)]
    p = jnp.stack(taps, axis=3)            # (B, Ho, Wo, 9, C)
    return p.reshape(B, Ho * Wo, 9 * C)


def _conv_stack(p1, w1, w2, w3, w4, b_all):
    B, npos, k1 = p1.shape
    return pl.pallas_call(
        _cnn_stack_kernel,
        grid=(B,),
        in_specs=[
            pl.BlockSpec((None, npos, k1), lambda b: (b, 0, 0)),
            pl.BlockSpec(w1.shape, lambda b: (0, 0)),
            pl.BlockSpec(w2.shape, lambda b: (0, 0, 0)),
            pl.BlockSpec(w3.shape, lambda b: (0, 0, 0)),
            pl.BlockSpec(w4.shape, lambda b: (0, 0, 0)),
            pl.BlockSpec(b_all.shape, lambda b: (0, 0)),
        ],
        out_specs=pl.BlockSpec((None, 49, 32), lambda b: (b, 0, 0)),
        out_shape=jax.ShapeDtypeStruct((B, 49, 32), jnp.float32),
        scratch_shapes=[
            pltpu.VMEM((41 * 41, 32), jnp.float32),   # conv1 output
            pltpu.VMEM((20 * 20, 32), jnp.float32),   # conv2 output
            pltpu.VMEM((9 * 9, 32), jnp.float32),     # conv3 output
        ],
        compiler_params=pltpu.CompilerParams(
            dimension_semantics=("parallel",)),
    )(p1, w1, w2, w3, w4, b_all)


# ============================================================================
# Kernel 2 / MLP kernel: fused stack of  Linear -> LayerNorm -> ELU
# (all weights resident in VMEM, bf16 MXU dots, f32 LN/ELU, lane-dense N=512)
# ============================================================================
def _make_linstack_kernel(n_layers):
    def kernel(*refs):
        x_ref = refs[0]
        w_refs = refs[1:1 + n_layers]
        b_ref = refs[1 + n_layers]
        o_ref = refs[2 + n_layers]
        h = x_ref[...].astype(jnp.bfloat16)
        y = None
        for li in range(n_layers):
            y = jnp.dot(h, w_refs[li][...],
                        preferred_element_type=jnp.float32)
            y = y + b_ref[li:li + 1, :]
            mu = jnp.mean(y, axis=-1, keepdims=True)
            var = jnp.mean((y - mu) ** 2, axis=-1, keepdims=True)
            y = _elu((y - mu) * jax.lax.rsqrt(var + 1e-5))
            if li + 1 < n_layers:
                h = y.astype(jnp.bfloat16)
        o_ref[...] = y
    return kernel


def _linear_ln_elu_stack(x, weights, b_stack):
    M0, K = x.shape
    M = ((M0 + 7) // 8) * 8                 # sublane-align the row count
    if M != M0:
        x = jnp.pad(x, ((0, M - M0), (0, 0)))
    n = len(weights)
    N = weights[-1].shape[1]
    in_specs = [pl.BlockSpec((M, K), lambda i: (0, 0))]
    in_specs += [pl.BlockSpec(w.shape, lambda i: (0, 0)) for w in weights]
    in_specs += [pl.BlockSpec(b_stack.shape, lambda i: (0, 0))]
    out = pl.pallas_call(
        _make_linstack_kernel(n),
        grid=(1,),
        in_specs=in_specs,
        out_specs=pl.BlockSpec((M, N), lambda i: (0, 0)),
        out_shape=jax.ShapeDtypeStruct((M, N), jnp.float32),
    )(x, *weights, b_stack)
    return out[:M0]


# ============================================================================
# Forward passes
# ============================================================================
@jax.jit
def cnn_forward(state_nchw, p):
    B, C, H, W = state_nchw.shape
    assert H == 84 and W == 84, "conv stack + Linear(1568, .) implies 84x84"
    x = jnp.transpose(state_nchw, (0, 2, 3, 1))        # one-time NCHW -> NHWC
    p1 = _im2col3x3_s2(x)                              # (B, 1681, 9*C) f32
    z = _conv_stack(p1, p["w1"], p["w2"], p["w3"], p["w4"], p["b_all"])
    feat = z.reshape(B, 49 * 32)                       # row-major (pos, chan)
    return _linear_ln_elu_stack(feat, [p["lin_w"]], p["lin_b"])


@jax.jit
def mlp_forward(state, p):
    return _linear_ln_elu_stack(state, list(p["ws"]), p["b_stack"])


def state_encoder_forward(state, prepped_params, image_observation_space):
    if image_observation_space:
        return cnn_forward(state, prepped_params)
    return mlp_forward(state, prepped_params)


# ============================================================================
# One-time parameter preparation (PyTorch layout -> kernel layout)
# ============================================================================
def prepare_params(params, image_observation_space):
    if image_observation_space:
        w1 = params["c1_w"]                           # (32, C, 3, 3)
        C = w1.shape[1]
        # fold  x/255 - 0.5  into conv1:  W1' = W1/255,  b1' = b1 - 0.5*sum(W1)
        w1_s = w1 / 255.0
        b1_s = params["c1_b"] - 0.5 * jnp.sum(w1, axis=(1, 2, 3))

        def conv_w(w):                                # (O,Cin,3,3) -> (9,Cin,O)
            O, Ci, _, _ = w.shape
            return w.transpose(2, 3, 1, 0).reshape(9, Ci, O).astype(jnp.bfloat16)

        # conv1 weight flattened over (tap, cin) to match the im2col K order
        w1_flat = w1_s.transpose(2, 3, 1, 0).reshape(9 * C, 32).astype(jnp.bfloat16)
        # PyTorch flattens conv4 output as (chan, pos); our features are
        # (pos, chan) -> permute lin_w rows once here instead of transposing
        # activations on every forward pass.
        lin_w = params["lin_w"].reshape(32, 49, ZS_DIM)
        lin_w = lin_w.transpose(1, 0, 2).reshape(49 * 32, ZS_DIM)
        return {
            "w1": w1_flat,
            "w2": conv_w(params["c2_w"]),
            "w3": conv_w(params["c3_w"]),
            "w4": conv_w(params["c4_w"]),
            "b_all": jnp.stack([b1_s, params["c2_b"], params["c3_b"],
                                params["c4_b"]]).astype(jnp.float32),
            "lin_w": lin_w.astype(jnp.bfloat16),
            "lin_b": params["lin_b"].reshape(1, ZS_DIM).astype(jnp.float32),
        }
    ws = [params["m1_w"].astype(jnp.bfloat16),
          params["m2_w"].astype(jnp.bfloat16),
          params["m3_w"].astype(jnp.bfloat16)]
    b_stack = jnp.stack([params["m1_b"], params["m2_b"],
                         params["m3_b"]]).astype(jnp.float32)
    return {"ws": ws, "b_stack": b_stack}


# ============================================================================
# Deterministic parameter init (xavier_uniform with relu gain, zero bias) --
# PyTorch-faithful shapes/semantics.
# ============================================================================
def _xavier_uniform(key, shape, fan_in, fan_out, gain):
    bound = gain * (6.0 / (fan_in + fan_out)) ** 0.5
    return jax.random.uniform(key, shape, jnp.float32, -bound, bound)


def init_params(key, image_observation_space, state_channels):
    gain = 2.0 ** 0.5  # nn.init.calculate_gain('relu')
    p = {}
    if image_observation_space:
        keys = jax.random.split(key, 5)
        conv_shapes = [(32, state_channels, 3, 3), (32, 32, 3, 3),
                       (32, 32, 3, 3), (32, 32, 3, 3)]
        for n, (k_, sh) in enumerate(zip(keys[:4], conv_shapes), start=1):
            O, C, kh, kw = sh
            p[f"c{n}_w"] = _xavier_uniform(k_, sh, C * kh * kw, O * kh * kw, gain)
            p[f"c{n}_b"] = jnp.zeros((O,), jnp.float32)
        p["lin_w"] = _xavier_uniform(keys[4], (1568, ZS_DIM), 1568, ZS_DIM, gain)
        p["lin_b"] = jnp.zeros((ZS_DIM,), jnp.float32)
    else:
        keys = jax.random.split(key, 3)
        dims = [(state_channels, 512), (512, 512), (512, ZS_DIM)]
        for n, (k_, (din, dout)) in enumerate(zip(keys, dims), start=1):
            p[f"m{n}_w"] = _xavier_uniform(k_, (din, dout), din, dout, gain)
            p[f"m{n}_b"] = jnp.zeros((dout,), jnp.float32)
    return p


# ============================================================================
# Pure-JAX f32 reference (correctness check only, uses raw PyTorch-layout params)
# ============================================================================
def _ln(x):
    mu = jnp.mean(x, -1, keepdims=True)
    var = jnp.mean((x - mu) ** 2, -1, keepdims=True)
    return (x - mu) * jax.lax.rsqrt(var + 1e-5)


def ref_cnn(state, p):
    x = state / 255.0 - 0.5

    def conv(x, w, b, s):
        y = jax.lax.conv_general_dilated(
            x, w, (s, s), "VALID", dimension_numbers=("NCHW", "OIHW", "NCHW"))
        return _elu(y + b.reshape(1, -1, 1, 1))

    x = conv(x, p["c1_w"], p["c1_b"], 2)
    x = conv(x, p["c2_w"], p["c2_b"], 2)
    x = conv(x, p["c3_w"], p["c3_b"], 2)
    x = conv(x, p["c4_w"], p["c4_b"], 1)
    x = x.reshape(state.shape[0], -1)
    return _elu(_ln(x @ p["lin_w"] + p["lin_b"]))


def ref_mlp(state, p):
    x = _elu(_ln(state @ p["m1_w"] + p["m1_b"]))
    x = _elu(_ln(x @ p["m2_w"] + p["m2_b"]))
    x = _elu(_ln(x @ p["m3_w"] + p["m3_b"]))
    return x


# ----------------------------------------------------------------------------
if __name__ == "__main__":
    key = jax.random.PRNGKey(0)
    k_img, k_vec, k_pi, k_pm = jax.random.split(key, 4)

    # --- image branch: the conv stack + Linear(1568, 512) implies 84x84 inputs
    B, C = 2, 4
    img = jax.random.uniform(k_img, (B, C, 84, 84), jnp.float32, 0.0, 255.0)
    p_img = init_params(k_pi, True, C)
    prep_img = prepare_params(p_img, True)
    out_img = jax.block_until_ready(state_encoder_forward(img, prep_img, True))
    assert out_img.shape == (B, ZS_DIM)
    ref_i = ref_cnn(img, p_img)
    assert jnp.allclose(out_img, ref_i, atol=5e-2, rtol=5e-2), \
        float(jnp.max(jnp.abs(out_img - ref_i)))

    # --- vector (MLP) branch
    Bm, Cm = 8, 32
    vec = jax.random.normal(k_vec, (Bm, Cm), jnp.float32)
    p_mlp = init_params(k_pm, False, Cm)
    prep_mlp = prepare_params(p_mlp, False)
    out_mlp = jax.block_until_ready(state_encoder_forward(vec, prep_mlp, False))
    assert out_mlp.shape == (Bm, ZS_DIM)
    ref_m = ref_mlp(vec, p_mlp)
    assert jnp.allclose(out_mlp, ref_m, atol=5e-2, rtol=5e-2), \
        float(jnp.max(jnp.abs(out_mlp - ref_m)))

    print("KERNEL_OK")
</pallas_src>

<mosaic_0001>
module attributes {stable_mosaic.version = 11 : i64} {
  func.func @_cnn_stack_kernel(%arg0: i32, %arg1: memref<1x1681x36xf32, #tpu.memory_space<vmem>>, %arg2: memref<36x32xbf16, #tpu.memory_space<vmem>>, %arg3: memref<9x32x32xbf16, #tpu.memory_space<vmem>>, %arg4: memref<9x32x32xbf16, #tpu.memory_space<vmem>>, %arg5: memref<9x32x32xbf16, #tpu.memory_space<vmem>>, %arg6: memref<4x32xf32, #tpu.memory_space<vmem>>, %arg7: memref<1x49x32xf32, #tpu.memory_space<vmem>>, %arg8: memref<1681x32xf32, #tpu.memory_space<vmem>>, %arg9: memref<400x32xf32, #tpu.memory_space<vmem>>, %arg10: memref<81x32xf32, #tpu.memory_space<vmem>>) attributes {dimension_semantics = [#tpu.dimension_semantics<parallel>], iteration_bounds = array<i64: 2>, scalar_prefetch = 0 : i64, scratch_operands = 3 : i64, tpu.core_type = #tpu.core_type<tc>, window_params = [{transform_indices = @transform_0, window_bounds = array<i64: 1, 1681, 36>}, {pipeline_mode = #tpu.pipeline_mode<synchronous>, transform_indices = @transform_1, window_bounds = array<i64: 36, 32>}, {pipeline_mode = #tpu.pipeline_mode<synchronous>, transform_indices = @transform_2, window_bounds = array<i64: 9, 32, 32>}, {pipeline_mode = #tpu.pipeline_mode<synchronous>, transform_indices = @transform_3, window_bounds = array<i64: 9, 32, 32>}, {pipeline_mode = #tpu.pipeline_mode<synchronous>, transform_indices = @transform_4, window_bounds = array<i64: 9, 32, 32>}, {pipeline_mode = #tpu.pipeline_mode<synchronous>, transform_indices = @transform_5, window_bounds = array<i64: 4, 32>}, {transform_indices = @transform_6, window_bounds = array<i64: 1, 49, 32>}]} {
    %c0 = arith.constant 0 : index
    %c0_0 = arith.constant 0 : index
    %0 = vector.load %arg2[%c0, %c0_0] : memref<36x32xbf16, #tpu.memory_space<vmem>>, vector<36x32xbf16>
    %c0_1 = arith.constant 0 : index
    %c0_2 = arith.constant 0 : index
    %1 = vector.load %arg6[%c0_1, %c0_2] : memref<4x32xf32, #tpu.memory_space<vmem>>, vector<1x32xf32>
    %c0_i32 = arith.constant 0 : i32
    %c41_i32 = arith.constant 41 : i32
    %2 = arith.addi %c0_i32, %c41_i32 : i32
    %c1_i32 = arith.constant 1 : i32
    scf.for %arg11 = %c0_i32 to %2 step %c1_i32  : i32 {
      %c41_i32_92 = arith.constant 41 : i32
      %63 = arith.muli %arg11, %c41_i32_92 : i32
      %c0_93 = arith.constant 0 : index
      %64 = arith.index_cast %63 : i32 to index
      %c0_94 = arith.constant 0 : index
      %65 = vector.load %arg1[%c0_93, %64, %c0_94] : memref<1x1681x36xf32, #tpu.memory_space<vmem>>, vector<1x41x36xf32>
      %66 = vector.shape_cast %65 : vector<1x41x36xf32> to vector<41x36xf32>
      %67 = arith.truncf %66 : vector<41x36xf32> to vector<41x36xbf16>
      %cst = arith.constant dense<0.000000e+00> : vector<41x32xf32>
      %68 = tpu.matmul %67, %0, %cst {dimension_numbers = #tpu.dot_dimension_numbers<[1], [0], [0], [1], [0, 0, 1, 1], [], []>} : vector<41x36xbf16>, vector<36x32xbf16>, vector<41x32xf32> -> vector<41x32xf32>
      %69 = vector.broadcast %1 : vector<1x32xf32> to vector<41x32xf32>
      %70 = arith.addf %68, %69 : vector<41x32xf32>
      %cst_95 = arith.constant 0.000000e+00 : f32
      %71 = vector.broadcast %cst_95 : f32 to vector<41x32xf32>
      %72 = arith.cmpf ogt, %70, %71 : vector<41x32xf32>
      %cst_96 = arith.constant 0.000000e+00 : f32
      %73 = vector.broadcast %cst_96 : f32 to vector<41x32xf32>
      %74 = arith.minimumf %70, %73 : vector<41x32xf32>
      %75 = math.exp %74 : vector<41x32xf32>
      %cst_97 = arith.constant 1.000000e+00 : f32
      %76 = vector.broadcast %cst_97 : f32 to vector<41x32xf32>
      %77 = arith.subf %75, %76 : vector<41x32xf32>
      %78 = arith.select %72, %70, %77 : vector<41x32xi1>, vector<41x32xf32>
      %c41_i32_98 = arith.constant 41 : i32
      %79 = arith.muli %arg11, %c41_i32_98 : i32
      %80 = arith.index_cast %79 : i32 to index
      %c0_99 = arith.constant 0 : index
      %81 = vector.load %arg8[%80, %c0_99] : memref<1681x32xf32, #tpu.memory_space<vmem>>, vector<41x32xf32>
      tpu.vector_store %arg8[%80, %c0_99], %78 {strides = array<i32>} : memref<1681x32xf32, #tpu.memory_space<vmem>>, vector<41x32xf32>,
    }
    %c41_i32_3 = arith.constant 41 : i32
    %c0_4 = arith.constant 0 : index
    %c0_5 = arith.constant 0 : index
    %c0_6 = arith.constant 0 : index
    %3 = vector.load %arg3[%c0_4, %c0_5, %c0_6] : memref<9x32x32xbf16, #tpu.memory_space<vmem>>, vector<1x32x32xbf16>
    %4 = vector.shape_cast %3 : vector<1x32x32xbf16> to vector<32x32xbf16>
    %c1 = arith.constant 1 : index
    %c0_7 = arith.constant 0 : index
    %c0_8 = arith.constant 0 : index
    %5 = vector.load %arg3[%c1, %c0_7, %c0_8] : memref<9x32x32xbf16, #tpu.memory_space<vmem>>, vector<1x32x32xbf16>
    %6 = vector.shape_cast %5 : vector<1x32x32xbf16> to vector<32x32xbf16>
    %c2 = arith.constant 2 : index
    %c0_9 = arith.constant 0 : index
    %c0_10 = arith.constant 0 : index
    %7 = vector.load %arg3[%c2, %c0_9, %c0_10] : memref<9x32x32xbf16, #tpu.memory_space<vmem>>, vector<1x32x32xbf16>
    %8 = vector.shape_cast %7 : vector<1x32x32xbf16> to vector<32x32xbf16>
    %c3 = arith.constant 3 : index
    %c0_11 = arith.constant 0 : index
    %c0_12 = arith.constant 0 : index
    %9 = vector.load %arg3[%c3, %c0_11, %c0_12] : memref<9x32x32xbf16, #tpu.memory_space<vmem>>, vector<1x32x32xbf16>
    %10 = vector.shape_cast %9 : vector<1x32x32xbf16> to vector<32x32xbf16>
    %c4 = arith.constant 4 : index
    %c0_13 = arith.constant 0 : index
    %c0_14 = arith.constant 0 : index
    %11 = vector.load %arg3[%c4, %c0_13, %c0_14] : memref<9x32x32xbf16, #tpu.memory_space<vmem>>, vector<1x32x32xbf16>
    %12 = vector.shape_cast %11 : vector<1x32x32xbf16> to vector<32x32xbf16>
    %c5 = arith.constant 5 : index
    %c0_15 = arith.constant 0 : index
    %c0_16 = arith.constant 0 : index
    %13 = vector.load %arg3[%c5, %c0_15, %c0_16] : memref<9x32x32xbf16, #tpu.memory_space<vmem>>, vector<1x32x32xbf16>
    %14 = vector.shape_cast %13 : vector<1x32x32xbf16> to vector<32x32xbf16>
    %c6 = arith.constant 6 : index
    %c0_17 = arith.constant 0 : index
    %c0_18 = arith.constant 0 : index
    %15 = vector.load %arg3[%c6, %c0_17, %c0_18] : memref<9x32x32xbf16, #tpu.memory_space<vmem>>, vector<1x32x32xbf16>
    %16 = vector.shape_cast %15 : vector<1x32x32xbf16> to vector<32x32xbf16>
    %c7 = arith.constant 7 : index
    %c0_19 = arith.constant 0 : index
    %c0_20 = arith.constant 0 : index
    %17 = vector.load %arg3[%c7, %c0_19, %c0_20] : memref<9x32x32xbf16, #tpu.memory_space<vmem>>, vector<1x32x32xbf16>
    %18 = vector.shape_cast %17 : vector<1x32x32xbf16> to vector<32x32xbf16>
    %c8 = arith.constant 8 : index
    %c0_21 = arith.constant 0 : index
    %c0_22 = arith.constant 0 : index
    %19 = vector.load %arg3[%c8, %c0_21, %c0_22] : memref<9x32x32xbf16, #tpu.memory_space<vmem>>, vector<1x32x32xbf16>
    %20 = vector.shape_cast %19 : vector<1x32x32xbf16> to vector<32x32xbf16>
    %c1_23 = arith.constant 1 : index
    %c0_24 = arith.constant 0 : index
    %21 = vector.load %arg6[%c1_23, %c0_24] : memref<4x32xf32, #tpu.memory_space<vmem>>, vector<1x32xf32>
    %c0_i32_25 = arith.constant 0 : i32
    %c20_i32 = arith.constant 20 : i32
    %22 = arith.addi %c0_i32_25, %c20_i32 : i32
    %c1_i32_26 = arith.constant 1 : i32
    scf.for %arg11 = %c0_i32_25 to %22 step %c1_i32_26  : i32 {
      %c2_i32 = arith.constant 2 : i32
      %63 = arith.muli %c2_i32, %arg11 : i32
      %c41_i32_92 = arith.constant 41 : i32
      %64 = arith.muli %63, %c41_i32_92 : i32
      %cst = arith.constant 0.000000e+00 : f32
      %65 = vector.broadcast %cst : f32 to vector<20x32xf32>
      %c0_i32_93 = arith.constant 0 : i32
      %66 = arith.addi %64, %c0_i32_93 : i32
      %c0_i32_94 = arith.constant 0 : i32
      %67 = arith.addi %66, %c0_i32_94 : i32
      %68 = arith.index_cast %67 : i32 to index
      %c0_95 = arith.constant 0 : index
      %69 = tpu.strided_load %arg8[%68, %c0_95] {strides = array<i32: 2, 1>} : memref<1681x32xf32, #tpu.memory_space<vmem>>, vector<20x32xf32>
      %70 = arith.truncf %69 : vector<20x32xf32> to vector<20x32xbf16>
      %cst_96 = arith.constant dense<0.000000e+00> : vector<20x32xf32>
      %71 = tpu.matmul %70, %4, %cst_96 {dimension_numbers = #tpu.dot_dimension_numbers<[1], [0], [0], [1], [0, 0, 1, 1], [], []>} : vector<20x32xbf16>, vector<32x32xbf16>, vector<20x32xf32> -> vector<20x32xf32>
      %72 = arith.addf %65, %71 : vector<20x32xf32>
      %c0_i32_97 = arith.constant 0 : i32
      %73 = arith.addi %64, %c0_i32_97 : i32
      %c1_i32_98 = arith.constant 1 : i32
      %74 = arith.addi %73, %c1_i32_98 : i32
      %75 = arith.index_cast %74 : i32 to index
      %c0_99 = arith.constant 0 : index
      %76 = tpu.strided_load %arg8[%75, %c0_99] {strides = array<i32: 2, 1>} : memref<1681x32xf32, #tpu.memory_space<vmem>>, vector<20x32xf32>
      %77 = arith.truncf %76 : vector<20x32xf32> to vector<20x32xbf16>
      %cst_100 = arith.constant dense<0.000000e+00> : vector<20x32xf32>
      %78 = tpu.matmul %77, %6, %cst_100 {dimension_numbers = #tpu.dot_dimension_numbers<[1], [0], [0], [1], [0, 0, 1, 1], [], []>} : vector<20x32xbf16>, vector<32x32xbf16>, vector<20x32xf32> -> vector<20x32xf32>
      %79 = arith.addf %72, %78 : vector<20x32xf32>
      %c0_i32_101 = arith.constant 0 : i32
      %80 = arith.addi %64, %c0_i32_101 : i32
      %c2_i32_102 = arith.constant 2 : i32
      %81 = arith.addi %80, %c2_i32_102 : i32
      %82 = arith.index_cast %81 : i32 to index
      %c0_103 = arith.constant 0 : index
      %83 = tpu.strided_load %arg8[%82, %c0_103] {strides = array<i32: 2, 1>} : memref<1681x32xf32, #tpu.memory_space<vmem>>, vector<20x32xf32>
      %84 = arith.truncf %83 : vector<20x32xf32> to vector<20x32xbf16>
      %cst_104 = arith.constant dense<0.000000e+00> : vector<20x32xf32>
      %85 = tpu.matmul %84, %8, %cst_104 {dimension_numbers = #tpu.dot_dimension_numbers<[1], [0], [0], [1], [0, 0, 1, 1], [], []>} : vector<20x32xbf16>, vector<32x32xbf16>, vector<20x32xf32> -> vector<20x32xf32>
      %86 = arith.addf %79, %85 : vector<20x32xf32>
      %c41_i32_105 = arith.constant 41 : i32
      %87 = arith.addi %64, %c41_i32_105 : i32
      %c0_i32_106 = arith.constant 0 : i32
      %88 = arith.addi %87, %c0_i32_106 : i32
      %89 = arith.index_cast %88 : i32 to index
      %c0_107 = arith.constant 0 : index
      %90 = tpu.strided_load %arg8[%89, %c0_107] {strides = array<i32: 2, 1>} : memref<1681x32xf32, #tpu.memory_space<vmem>>, vector<20x32xf32>
      %91 = arith.truncf %90 : vector<20x32xf32> to vector<20x32xbf16>
      %cst_108 = arith.constant dense<0.000000e+00> : vector<20x32xf32>
      %92 = tpu.matmul %91, %10, %cst_108 {dimension_numbers = #tpu.dot_dimension_numbers<[1], [0], [0], [1], [0, 0, 1, 1], [], []>} : vector<20x32xbf16>, vector<32x32xbf16>, vector<20x32xf32> -> vector<20x32xf32>
      %93 = arith.addf %86, %92 : vector<20x32xf32>
      %c41_i32_109 = arith.constant 41 : i32
      %94 = arith.addi %64, %c41_i32_109 : i32
      %c1_i32_110 = arith.constant 1 : i32
      %95 = arith.addi %94, %c1_i32_110 : i32
      %96 = arith.index_cast %95 : i32 to index
      %c0_111 = arith.constant 0 : index
      %97 = tpu.strided_load %arg8[%96, %c0_111] {strides = array<i32: 2, 1>} : memref<1681x32xf32, #tpu.memory_space<vmem>>, vector<20x32xf32>
      %98 = arith.truncf %97 : vector<20x32xf32> to vector<20x32xbf16>
      %cst_112 = arith.constant dense<0.000000e+00> : vector<20x32xf32>
      %99 = tpu.matmul %98, %12, %cst_112 {dimension_numbers = #tpu.dot_dimension_numbers<[1], [0], [0], [1], [0, 0, 1, 1], [], []>} : vector<20x32xbf16>, vector<32x32xbf16>, vector<20x32xf32> -> vector<20x32xf32>
      %100 = arith.addf %93, %99 : vector<20x32xf32>
      %c41_i32_113 = arith.constant 41 : i32
      %101 = arith.addi %64, %c41_i32_113 : i32
      %c2_i32_114 = arith.constant 2 : i32
      %102 = arith.addi %101, %c2_i32_114 : i32
      %103 = arith.index_cast %102 : i32 to index
      %c0_115 = arith.constant 0 : index
      %104 = tpu.strided_load %arg8[%103, %c0_115] {strides = array<i32: 2, 1>} : memref<1681x32xf32, #tpu.memory_space<vmem>>, vector<20x32xf32>
      %105 = arith.truncf %104 : vector<20x32xf32> to vector<20x32xbf16>
      %cst_116 = arith.constant dense<0.000000e+00> : vector<20x32xf32>
      %106 = tpu.matmul %105, %14, %cst_116 {dimension_numbers = #tpu.dot_dimension_numbers<[1], [0], [0], [1], [0, 0, 1, 1], [], []>} : vector<20x32xbf16>, vector<32x32xbf16>, vector<20x32xf32> -> vector<20x32xf32>
      %107 = arith.addf %100, %106 : vector<20x32xf32>
      %c82_i32 = arith.constant 82 : i32
      %108 = arith.addi %64, %c82_i32 : i32
      %c0_i32_117 = arith.constant 0 : i32
      %109 = arith.addi %108, %c0_i32_117 : i32
      %110 = arith.index_cast %109 : i32 to index
      %c0_118 = arith.constant 0 : index
      %111 = tpu.strided_load %arg8[%110, %c0_118] {strides = array<i32: 2, 1>} : memref<1681x32xf32, #tpu.memory_space<vmem>>, vector<20x32xf32>
      %112 = arith.truncf %111 : vector<20x32xf32> to vector<20x32xbf16>
      %cst_119 = arith.constant dense<0.000000e+00> : vector<20x32xf32>
      %113 = tpu.matmul %112, %16, %cst_119 {dimension_numbers = #tpu.dot_dimension_numbers<[1], [0], [0], [1], [0, 0, 1, 1], [], []>} : vector<20x32xbf16>, vector<32x32xbf16>, vector<20x32xf32> -> vector<20x32xf32>
      %114 = arith.addf %107, %113 : vector<20x32xf32>
      %c82_i32_120 = arith.constant 82 : i32
      %115 = arith.addi %64, %c82_i32_120 : i32
      %c1_i32_121 = arith.constant 1 : i32
      %116 = arith.addi %115, %c1_i32_121 : i32
      %117 = arith.index_cast %116 : i32 to index
      %c0_122 = arith.constant 0 : index
      %118 = tpu.strided_load %arg8[%117, %c0_122] {strides = array<i32: 2, 1>} : memref<1681x32xf32, #tpu.memory_space<vmem>>, vector<20x32xf32>
      %119 = arith.truncf %118 : vector<20x32xf32> to vector<20x32xbf16>
      %cst_123 = arith.constant dense<0.000000e+00> : vector<20x32xf32>
      %120 = tpu.matmul %119, %18, %cst_123 {dimension_numbers = #tpu.dot_dimension_numbers<[1], [0], [0], [1], [0, 0, 1, 1], [], []>} : vector<20x32xbf16>, vector<32x32xbf16>, vector<20x32xf32> -> vector<20x32xf32>
      %121 = arith.addf %114, %120 : vector<20x32xf32>
      %c82_i32_124 = arith.constant 82 : i32
      %122 = arith.addi %64, %c82_i32_124 : i32
      %c2_i32_125 = arith.constant 2 : i32
      %123 = arith.addi %122, %c2_i32_125 : i32
      %124 = arith.index_cast %123 : i32 to index
      %c0_126 = arith.constant 0 : index
      %125 = tpu.strided_load %arg8[%124, %c0_126] {strides = array<i32: 2, 1>} : memref<1681x32xf32, #tpu.memory_space<vmem>>, vector<20x32xf32>
      %126 = arith.truncf %125 : vector<20x32xf32> to vector<20x32xbf16>
      %cst_127 = arith.constant dense<0.000000e+00> : vector<20x32xf32>
      %127 = tpu.matmul %126, %20, %cst_127 {dimension_numbers = #tpu.dot_dimension_numbers<[1], [0], [0], [1], [0, 0, 1, 1], [], []>} : vector<20x32xbf16>, vector<32x32xbf16>, vector<20x32xf32> -> vector<20x32xf32>
      %128 = arith.addf %121, %127 : vector<20x32xf32>
      %129 = vector.broadcast %21 : vector<1x32xf32> to vector<20x32xf32>
      %130 = arith.addf %128, %129 : vector<20x32xf32>
      %cst_128 = arith.constant 0.000000e+00 : f32
      %131 = vector.broadcast %cst_128 : f32 to vector<20x32xf32>
      %132 = arith.cmpf ogt, %130, %131 : vector<20x32xf32>
      %cst_129 = arith.constant 0.000000e+00 : f32
      %133 = vector.broadcast %cst_129 : f32 to vector<20x32xf32>
      %134 = arith.minimumf %130, %133 : vector<20x32xf32>
      %135 = math.exp %134 : vector<20x32xf32>
      %cst_130 = arith.constant 1.000000e+00 : f32
      %136 = vector.broadcast %cst_130 : f32 to vector<20x32xf32>
      %137 = arith.subf %135, %136 : vector<20x32xf32>
      %138 = arith.select %132, %130, %137 : vector<20x32xi1>, vector<20x32xf32>
      %c20_i32_131 = arith.constant 20 : i32
      %139 = arith.muli %arg11, %c20_i32_131 : i32
      %140 = arith.index_cast %139 : i32 to index
      %c0_132 = arith.constant 0 : index
      %141 = vector.load %arg9[%140, %c0_132] : memref<400x32xf32, #tpu.memory_space<vmem>>, vector<20x32xf32>
      tpu.vector_store %arg9[%140, %c0_132], %138 {strides = array<i32>} : memref<400x32xf32, #tpu.memory_space<vmem>>, vector<20x32xf32>,
    }
    %c20_i32_27 = arith.constant 20 : i32
    %c0_28 = arith.constant 0 : index
    %c0_29 = arith.constant 0 : index
    %c0_30 = arith.constant 0 : index
    %23 = vector.load %arg4[%c0_28, %c0_29, %c0_30] : memref<9x32x32xbf16, #tpu.memory_space<vmem>>, vector<1x32x32xbf16>
    %24 = vector.shape_cast %23 : vector<1x32x32xbf16> to vector<32x32xbf16>
    %c1_31 = arith.constant 1 : index
    %c0_32 = arith.constant 0 : index
    %c0_33 = arith.constant 0 : index
    %25 = vector.load %arg4[%c1_31, %c0_32, %c0_33] : memref<9x32x32xbf16, #tpu.memory_space<vmem>>, vector<1x32x32xbf16>
    %26 = vector.shape_cast %25 : vector<1x32x32xbf16> to vector<32x32xbf16>
    %c2_34 = arith.constant 2 : index
    %c0_35 = arith.constant 0 : index
    %c0_36 = arith.constant 0 : index
    %27 = vector.load %arg4[%c2_34, %c0_35, %c0_36] : memref<9x32x32xbf16, #tpu.memory_space<vmem>>, vector<1x32x32xbf16>
    %28 = vector.shape_cast %27 : vector<1x32x32xbf16> to vector<32x32xbf16>
    %c3_37 = arith.constant 3 : index
    %c0_38 = arith.constant 0 : index
    %c0_39 = arith.constant 0 : index
    %29 = vector.load %arg4[%c3_37, %c0_38, %c0_39] : memref<9x32x32xbf16, #tpu.memory_space<vmem>>, vector<1x32x32xbf16>
    %30 = vector.shape_cast %29 : vector<1x32x32xbf16> to vector<32x32xbf16>
    %c4_40 = arith.constant 4 : index
    %c0_41 = arith.constant 0 : index
    %c0_42 = arith.constant 0 : index
    %31 = vector.load %arg4[%c4_40, %c0_41, %c0_42] : memref<9x32x32xbf16, #tpu.memory_space<vmem>>, vector<1x32x32xbf16>
    %32 = vector.shape_cast %31 : vector<1x32x32xbf16> to vector<32x32xbf16>
    %c5_43 = arith.constant 5 : index
    %c0_44 = arith.constant 0 : index
    %c0_45 = arith.constant 0 : index
    %33 = vector.load %arg4[%c5_43, %c0_44, %c0_45] : memref<9x32x32xbf16, #tpu.memory_space<vmem>>, vector<1x32x32xbf16>
    %34 = vector.shape_cast %33 : vector<1x32x32xbf16> to vector<32x32xbf16>
    %c6_46 = arith.constant 6 : index
    %c0_47 = arith.constant 0 : index
    %c0_48 = arith.constant 0 : index
    %35 = vector.load %arg4[%c6_46, %c0_47, %c0_48] : memref<9x32x32xbf16, #tpu.memory_space<vmem>>, vector<1x32x32xbf16>
    %36 = vector.shape_cast %35 : vector<1x32x32xbf16> to vector<32x32xbf16>
    %c7_49 = arith.constant 7 : index
    %c0_50 = arith.constant 0 : index
    %c0_51 = arith.constant 0 : index
    %37 = vector.load %arg4[%c7_49, %c0_50, %c0_51] : memref<9x32x32xbf16, #tpu.memory_space<vmem>>, vector<1x32x32xbf16>
    %38 = vector.shape_cast %37 : vector<1x32x32xbf16> to vector<32x32xbf16>
    %c8_52 = arith.constant 8 : index
    %c0_53 = arith.constant 0 : index
    %c0_54 = arith.constant 0 : index
    %39 = vector.load %arg4[%c8_52, %c0_53, %c0_54] : memref<9x32x32xbf16, #tpu.memory_space<vmem>>, vector<1x32x32xbf16>
    %40 = vector.shape_cast %39 : vector<1x32x32xbf16> to vector<32x32xbf16>
    %c2_55 = arith.constant 2 : index
    %c0_56 = arith.constant 0 : index
    %41 = vector.load %arg6[%c2_55, %c0_56] : memref<4x32xf32, #tpu.memory_space<vmem>>, vector<1x32xf32>
    %c0_i32_57 = arith.constant 0 : i32
    %c9_i32 = arith.constant 9 : i32
    %42 = arith.addi %c0_i32_57, %c9_i32 : i32
    %c1_i32_58 = arith.constant 1 : i32
    scf.for %arg11 = %c0_i32_57 to %42 step %c1_i32_58  : i32 {
      %c2_i32 = arith.constant 2 : i32
      %63 = arith.muli %c2_i32, %arg11 : i32
      %c20_i32_92 = arith.constant 20 : i32
      %64 = arith.muli %63, %c20_i32_92 : i32
      %cst = arith.constant 0.000000e+00 : f32
      %65 = vector.broadcast %cst : f32 to vector<9x32xf32>
      %c0_i32_93 = arith.constant 0 : i32
      %66 = arith.addi %64, %c0_i32_93 : i32
      %c0_i32_94 = arith.constant 0 : i32
      %67 = arith.addi %66, %c0_i32_94 : i32
      %68 = arith.index_cast %67 : i32 to index
      %c0_95 = arith.constant 0 : index
      %69 = tpu.strided_load %arg9[%68, %c0_95] {strides = array<i32: 2, 1>} : memref<400x32xf32, #tpu.memory_space<vmem>>, vector<9x32xf32>
      %70 = arith.truncf %69 : vector<9x32xf32> to vector<9x32xbf16>
      %cst_96 = arith.constant dense<0.000000e+00> : vector<9x32xf32>
      %71 = tpu.matmul %70, %24, %cst_96 {dimension_numbers = #tpu.dot_dimension_numbers<[1], [0], [0], [1], [0, 0, 1, 1], [], []>} : vector<9x32xbf16>, vector<32x32xbf16>, vector<9x32xf32> -> vector<9x32xf32>
      %72 = arith.addf %65, %71 : vector<9x32xf32>
      %c0_i32_97 = arith.constant 0 : i32
      %73 = arith.addi %64, %c0_i32_97 : i32
      %c1_i32_98 = arith.constant 1 : i32
      %74 = arith.addi %73, %c1_i32_98 : i32
      %75 = arith.index_cast %74 : i32 to index
      %c0_99 = arith.constant 0 : index
      %76 = tpu.strided_load %arg9[%75, %c0_99] {strides = array<i32: 2, 1>} : memref<400x32xf32, #tpu.memory_space<vmem>>, vector<9x32xf32>
      %77 = arith.truncf %76 : vector<9x32xf32> to vector<9x32xbf16>
      %cst_100 = arith.constant dense<0.000000e+00> : vector<9x32xf32>
      %78 = tpu.matmul %77, %26, %cst_100 {dimension_numbers = #tpu.dot_dimension_numbers<[1], [0], [0], [1], [0, 0, 1, 1], [], []>} : vector<9x32xbf16>, vector<32x32xbf16>, vector<9x32xf32> -> vector<9x32xf32>
      %79 = arith.addf %72, %78 : vector<9x32xf32>
      %c0_i32_101 = arith.constant 0 : i32
      %80 = arith.addi %64, %c0_i32_101 : i32
      %c2_i32_102 = arith.constant 2 : i32
      %81 = arith.addi %80, %c2_i32_102 : i32
      %82 = arith.index_cast %81 : i32 to index
      %c0_103 = arith.constant 0 : index
      %83 = tpu.strided_load %arg9[%82, %c0_103] {strides = array<i32: 2, 1>} : memref<400x32xf32, #tpu.memory_space<vmem>>, vector<9x32xf32>
      %84 = arith.truncf %83 : vector<9x32xf32> to vector<9x32xbf16>
      %cst_104 = arith.constant dense<0.000000e+00> : vector<9x32xf32>
      %85 = tpu.matmul %84, %28, %cst_104 {dimension_numbers = #tpu.dot_dimension_numbers<[1], [0], [0], [1], [0, 0, 1, 1], [], []>} : vector<9x32xbf16>, vector<32x32xbf16>, vector<9x32xf32> -> vector<9x32xf32>
      %86 = arith.addf %79, %85 : vector<9x32xf32>
      %c20_i32_105 = arith.constant 20 : i32
      %87 = arith.addi %64, %c20_i32_105 : i32
      %c0_i32_106 = arith.constant 0 : i32
      %88 = arith.addi %87, %c0_i32_106 : i32
      %89 = arith.index_cast %88 : i32 to index
      %c0_107 = arith.constant 0 : index
      %90 = tpu.strided_load %arg9[%89, %c0_107] {strides = array<i32: 2, 1>} : memref<400x32xf32, #tpu.memory_space<vmem>>, vector<9x32xf32>
      %91 = arith.truncf %90 : vector<9x32xf32> to vector<9x32xbf16>
      %cst_108 = arith.constant dense<0.000000e+00> : vector<9x32xf32>
      %92 = tpu.matmul %91, %30, %cst_108 {dimension_numbers = #tpu.dot_dimension_numbers<[1], [0], [0], [1], [0, 0, 1, 1], [], []>} : vector<9x32xbf16>, vector<32x32xbf16>, vector<9x32xf32> -> vector<9x32xf32>
      %93 = arith.addf %86, %92 : vector<9x32xf32>
      %c20_i32_109 = arith.constant 20 : i32
      %94 = arith.addi %64, %c20_i32_109 : i32
      %c1_i32_110 = arith.constant 1 : i32
      %95 = arith.addi %94, %c1_i32_110 : i32
      %96 = arith.index_cast %95 : i32 to index
      %c0_111 = arith.constant 0 : index
      %97 = tpu.strided_load %arg9[%96, %c0_111] {strides = array<i32: 2, 1>} : memref<400x32xf32, #tpu.memory_space<vmem>>, vector<9x32xf32>
      %98 = arith.truncf %97 : vector<9x32xf32> to vector<9x32xbf16>
      %cst_112 = arith.constant dense<0.000000e+00> : vector<9x32xf32>
      %99 = tpu.matmul %98, %32, %cst_112 {dimension_numbers = #tpu.dot_dimension_numbers<[1], [0], [0], [1], [0, 0, 1, 1], [], []>} : vector<9x32xbf16>, vector<32x32xbf16>, vector<9x32xf32> -> vector<9x32xf32>
      %100 = arith.addf %93, %99 : vector<9x32xf32>
      %c20_i32_113 = arith.constant 20 : i32
      %101 = arith.addi %64, %c20_i32_113 : i32
      %c2_i32_114 = arith.constant 2 : i32
      %102 = arith.addi %101, %c2_i32_114 : i32
      %103 = arith.index_cast %102 : i32 to index
      %c0_115 = arith.constant 0 : index
      %104 = tpu.strided_load %arg9[%103, %c0_115] {strides = array<i32: 2, 1>} : memref<400x32xf32, #tpu.memory_space<vmem>>, vector<9x32xf32>
      %105 = arith.truncf %104 : vector<9x32xf32> to vector<9x32xbf16>
      %cst_116 = arith.constant dense<0.000000e+00> : vector<9x32xf32>
      %106 = tpu.matmul %105, %34, %cst_116 {dimension_numbers = #tpu.dot_dimension_numbers<[1], [0], [0], [1], [0, 0, 1, 1], [], []>} : vector<9x32xbf16>, vector<32x32xbf16>, vector<9x32xf32> -> vector<9x32xf32>
      %107 = arith.addf %100, %106 : vector<9x32xf32>
      %c40_i32 = arith.constant 40 : i32
      %108 = arith.addi %64, %c40_i32 : i32
      %c0_i32_117 = arith.constant 0 : i32
      %109 = arith.addi %108, %c0_i32_117 : i32
      %110 = arith.index_cast %109 : i32 to index
      %c0_118 = arith.constant 0 : index
      %111 = tpu.strided_load %arg9[%110, %c0_118] {strides = array<i32: 2, 1>} : memref<400x32xf32, #tpu.memory_space<vmem>>, vector<9x32xf32>
      %112 = arith.truncf %111 : vector<9x32xf32> to vector<9x32xbf16>
      %cst_119 = arith.constant dense<0.000000e+00> : vector<9x32xf32>
      %113 = tpu.matmul %112, %36, %cst_119 {dimension_numbers = #tpu.dot_dimension_numbers<[1], [0], [0], [1], [0, 0, 1, 1], [], []>} : vector<9x32xbf16>, vector<32x32xbf16>, vector<9x32xf32> -> vector<9x32xf32>
      %114 = arith.addf %107, %113 : vector<9x32xf32>
      %c40_i32_120 = arith.constant 40 : i32
      %115 = arith.addi %64, %c40_i32_120 : i32
      %c1_i32_121 = arith.constant 1 : i32
      %116 = arith.addi %115, %c1_i32_121 : i32
      %117 = arith.index_cast %116 : i32 to index
      %c0_122 = arith.constant 0 : index
      %118 = tpu.strided_load %arg9[%117, %c0_122] {strides = array<i32: 2, 1>} : memref<400x32xf32, #tpu.memory_space<vmem>>, vector<9x32xf32>
      %119 = arith.truncf %118 : vector<9x32xf32> to vector<9x32xbf16>
      %cst_123 = arith.constant dense<0.000000e+00> : vector<9x32xf32>
      %120 = tpu.matmul %119, %38, %cst_123 {dimension_numbers = #tpu.dot_dimension_numbers<[1], [0], [0], [1], [0, 0, 1, 1], [], []>} : vector<9x32xbf16>, vector<32x32xbf16>, vector<9x32xf32> -> vector<9x32xf32>
      %121 = arith.addf %114, %120 : vector<9x32xf32>
      %c40_i32_124 = arith.constant 40 : i32
      %122 = arith.addi %64, %c40_i32_124 : i32
      %c2_i32_125 = arith.constant 2 : i32
      %123 = arith.addi %122, %c2_i32_125 : i32
      %124 = arith.index_cast %123 : i32 to index
      %c0_126 = arith.constant 0 : index
      %125 = tpu.strided_load %arg9[%124, %c0_126] {strides = array<i32: 2, 1>} : memref<400x32xf32, #tpu.memory_space<vmem>>, vector<9x32xf32>
      %126 = arith.truncf %125 : vector<9x32xf32> to vector<9x32xbf16>
      %cst_127 = arith.constant dense<0.000000e+00> : vector<9x32xf32>
      %127 = tpu.matmul %126, %40, %cst_127 {dimension_numbers = #tpu.dot_dimension_numbers<[1], [0], [0], [1], [0, 0, 1, 1], [], []>} : vector<9x32xbf16>, vector<32x32xbf16>, vector<9x32xf32> -> vector<9x32xf32>
      %128 = arith.addf %121, %127 : vector<9x32xf32>
      %129 = vector.broadcast %41 : vector<1x32xf32> to vector<9x32xf32>
      %130 = arith.addf %128, %129 : vector<9x32xf32>
      %cst_128 = arith.constant 0.000000e+00 : f32
      %131 = vector.broadcast %cst_128 : f32 to vector<9x32xf32>
      %132 = arith.cmpf ogt, %130, %131 : vector<9x32xf32>
      %cst_129 = arith.constant 0.000000e+00 : f32
      %133 = vector.broadcast %cst_129 : f32 to vector<9x32xf32>
      %134 = arith.minimumf %130, %133 : vector<9x32xf32>
      %135 = math.exp %134 : vector<9x32xf32>
      %cst_130 = arith.constant 1.000000e+00 : f32
      %136 = vector.broadcast %cst_130 : f32 to vector<9x32xf32>
      %137 = arith.subf %135, %136 : vector<9x32xf32>
      %138 = arith.select %132, %130, %137 : vector<9x32xi1>, vector<9x32xf32>
      %c9_i32_131 = arith.constant 9 : i32
      %139 = arith.muli %arg11, %c9_i32_131 : i32
      %140 = arith.index_cast %139 : i32 to index
      %c0_132 = arith.constant 0 : index
      %141 = vector.load %arg10[%140, %c0_132] : memref<81x32xf32, #tpu.memory_space<vmem>>, vector<9x32xf32>
      tpu.vector_store %arg10[%140, %c0_132], %138 {strides = array<i32>} : memref<81x32xf32, #tpu.memory_space<vmem>>, vector<9x32xf32>,
    }
    %c9_i32_59 = arith.constant 9 : i32
    %c0_60 = arith.constant 0 : index
    %c0_61 = arith.constant 0 : index
    %c0_62 = arith.constant 0 : index
    %43 = vector.load %arg5[%c0_60, %c0_61, %c0_62] : memref<9x32x32xbf16, #tpu.memory_space<vmem>>, vector<1x32x32xbf16>
    %44 = vector.shape_cast %43 : vector<1x32x32xbf16> to vector<32x32xbf16>
    %c1_63 = arith.constant 1 : index
    %c0_64 = arith.constant 0 : index
    %c0_65 = arith.constant 0 : index
    %45 = vector.load %arg5[%c1_63, %c0_64, %c0_65] : memref<9x32x32xbf16, #tpu.memory_space<vmem>>, vector<1x32x32xbf16>
    %46 = vector.shape_cast %45 : vector<1x32x32xbf16> to vector<32x32xbf16>
    %c2_66 = arith.constant 2 : index
    %c0_67 = arith.constant 0 : index
    %c0_68 = arith.constant 0 : index
    %47 = vector.load %arg5[%c2_66, %c0_67, %c0_68] : memref<9x32x32xbf16, #tpu.memory_space<vmem>>, vector<1x32x32xbf16>
    %48 = vector.shape_cast %47 : vector<1x32x32xbf16> to vector<32x32xbf16>
    %c3_69 = arith.constant 3 : index
    %c0_70 = arith.constant 0 : index
    %c0_71 = arith.constant 0 : index
    %49 = vector.load %arg5[%c3_69, %c0_70, %c0_71] : memref<9x32x32xbf16, #tpu.memory_space<vmem>>, vector<1x32x32xbf16>
    %50 = vector.shape_cast %49 : vector<1x32x32xbf16> to vector<32x32xbf16>
    %c4_72 = arith.constant 4 : index
    %c0_73 = arith.constant 0 : index
    %c0_74 = arith.constant 0 : index
    %51 = vector.load %arg5[%c4_72, %c0_73, %c0_74] : memref<9x32x32xbf16, #tpu.memory_space<vmem>>, vector<1x32x32xbf16>
    %52 = vector.shape_cast %51 : vector<1x32x32xbf16> to vector<32x32xbf16>
    %c5_75 = arith.constant 5 : index
    %c0_76 = arith.constant 0 : index
    %c0_77 = arith.constant 0 : index
    %53 = vector.load %arg5[%c5_75, %c0_76, %c0_77] : memref<9x32x32xbf16, #tpu.memory_space<vmem>>, vector<1x32x32xbf16>
    %54 = vector.shape_cast %53 : vector<1x32x32xbf16> to vector<32x32xbf16>
    %c6_78 = arith.constant 6 : index
    %c0_79 = arith.constant 0 : index
    %c0_80 = arith.constant 0 : index
    %55 = vector.load %arg5[%c6_78, %c0_79, %c0_80] : memref<9x32x32xbf16, #tpu.memory_space<vmem>>, vector<1x32x32xbf16>
    %56 = vector.shape_cast %55 : vector<1x32x32xbf16> to vector<32x32xbf16>
    %c7_81 = arith.constant 7 : index
    %c0_82 = arith.constant 0 : index
    %c0_83 = arith.constant 0 : index
    %57 = vector.load %arg5[%c7_81, %c0_82, %c0_83] : memref<9x32x32xbf16, #tpu.memory_space<vmem>>, vector<1x32x32xbf16>
    %58 = vector.shape_cast %57 : vector<1x32x32xbf16> to vector<32x32xbf16>
    %c8_84 = arith.constant 8 : index
    %c0_85 = arith.constant 0 : index
    %c0_86 = arith.constant 0 : index
    %59 = vector.load %arg5[%c8_84, %c0_85, %c0_86] : memref<9x32x32xbf16, #tpu.memory_space<vmem>>, vector<1x32x32xbf16>
    %60 = vector.shape_cast %59 : vector<1x32x32xbf16> to vector<32x32xbf16>
    %c3_87 = arith.constant 3 : index
    %c0_88 = arith.constant 0 : index
    %61 = vector.load %arg6[%c3_87, %c0_88] : memref<4x32xf32, #tpu.memory_space<vmem>>, vector<1x32xf32>
    %c0_i32_89 = arith.constant 0 : i32
    %c7_i32 = arith.constant 7 : i32
    %62 = arith.addi %c0_i32_89, %c7_i32 : i32
    %c1_i32_90 = arith.constant 1 : i32
    scf.for %arg11 = %c0_i32_89 to %62 step %c1_i32_90  : i32 {
      %c1_i32_92 = arith.constant 1 : i32
      %63 = arith.muli %c1_i32_92, %arg11 : i32
      %c9_i32_93 = arith.constant 9 : i32
      %64 = arith.muli %63, %c9_i32_93 : i32
      %cst = arith.constant 0.000000e+00 : f32
      %65 = vector.broadcast %cst : f32 to vector<7x32xf32>
      %c0_i32_94 = arith.constant 0 : i32
      %66 = arith.addi %64, %c0_i32_94 : i32
      %c0_i32_95 = arith.constant 0 : i32
      %67 = arith.addi %66, %c0_i32_95 : i32
      %68 = arith.index_cast %67 : i32 to index
      %c0_96 = arith.constant 0 : index
      %69 = vector.load %arg10[%68, %c0_96] : memref<81x32xf32, #tpu.memory_space<vmem>>, vector<7x32xf32>
      %70 = arith.truncf %69 : vector<7x32xf32> to vector<7x32xbf16>
      %cst_97 = arith.constant dense<0.000000e+00> : vector<7x32xf32>
      %71 = tpu.matmul %70, %44, %cst_97 {dimension_numbers = #tpu.dot_dimension_numbers<[1], [0], [0], [1], [0, 0, 1, 1], [], []>} : vector<7x32xbf16>, vector<32x32xbf16>, vector<7x32xf32> -> vector<7x32xf32>
      %72 = arith.addf %65, %71 : vector<7x32xf32>
      %c0_i32_98 = arith.constant 0 : i32
      %73 = arith.addi %64, %c0_i32_98 : i32
      %c1_i32_99 = arith.constant 1 : i32
      %74 = arith.addi %73, %c1_i32_99 : i32
      %75 = arith.index_cast %74 : i32 to index
      %c0_100 = arith.constant 0 : index
      %76 = vector.load %arg10[%75, %c0_100] : memref<81x32xf32, #tpu.memory_space<vmem>>, vector<7x32xf32>
      %77 = arith.truncf %76 : vector<7x32xf32> to vector<7x32xbf16>
      %cst_101 = arith.constant dense<0.000000e+00> : vector<7x32xf32>
      %78 = tpu.matmul %77, %46, %cst_101 {dimension_numbers = #tpu.dot_dimension_numbers<[1], [0], [0], [1], [0, 0, 1, 1], [], []>} : vector<7x32xbf16>, vector<32x32xbf16>, vector<7x32xf32> -> vector<7x32xf32>
      %79 = arith.addf %72, %78 : vector<7x32xf32>
      %c0_i32_102 = arith.constant 0 : i32
      %80 = arith.addi %64, %c0_i32_102 : i32
      %c2_i32 = arith.constant 2 : i32
      %81 = arith.addi %80, %c2_i32 : i32
      %82 = arith.index_cast %81 : i32 to index
      %c0_103 = arith.constant 0 : index
      %83 = vector.load %arg10[%82, %c0_103] : memref<81x32xf32, #tpu.memory_space<vmem>>, vector<7x32xf32>
      %84 = arith.truncf %83 : vector<7x32xf32> to vector<7x32xbf16>
      %cst_104 = arith.constant dense<0.000000e+00> : vector<7x32xf32>
      %85 = tpu.matmul %84, %48, %cst_104 {dimension_numbers = #tpu.dot_dimension_numbers<[1], [0], [0], [1], [0, 0, 1, 1], [], []>} : vector<7x32xbf16>, vector<32x32xbf16>, vector<7x32xf32> -> vector<7x32xf32>
      %86 = arith.addf %79, %85 : vector<7x32xf32>
      %c9_i32_105 = arith.constant 9 : i32
      %87 = arith.addi %64, %c9_i32_105 : i32
      %c0_i32_106 = arith.constant 0 : i32
      %88 = arith.addi %87, %c0_i32_106 : i32
      %89 = arith.index_cast %88 : i32 to index
      %c0_107 = arith.constant 0 : index
      %90 = vector.load %arg10[%89, %c0_107] : memref<81x32xf32, #tpu.memory_space<vmem>>, vector<7x32xf32>
      %91 = arith.truncf %90 : vector<7x32xf32> to vector<7x32xbf16>
      %cst_108 = arith.constant dense<0.000000e+00> : vector<7x32xf32>
      %92 = tpu.matmul %91, %50, %cst_108 {dimension_numbers = #tpu.dot_dimension_numbers<[1], [0], [0], [1], [0, 0, 1, 1], [], []>} : vector<7x32xbf16>, vector<32x32xbf16>, vector<7x32xf32> -> vector<7x32xf32>
      %93 = arith.addf %86, %92 : vector<7x32xf32>
      %c9_i32_109 = arith.constant 9 : i32
      %94 = arith.addi %64, %c9_i32_109 : i32
      %c1_i32_110 = arith.constant 1 : i32
      %95 = arith.addi %94, %c1_i32_110 : i32
      %96 = arith.index_cast %95 : i32 to index
      %c0_111 = arith.constant 0 : index
      %97 = vector.load %arg10[%96, %c0_111] : memref<81x32xf32, #tpu.memory_space<vmem>>, vector<7x32xf32>
      %98 = arith.truncf %97 : vector<7x32xf32> to vector<7x32xbf16>
      %cst_112 = arith.constant dense<0.000000e+00> : vector<7x32xf32>
      %99 = tpu.matmul %98, %52, %cst_112 {dimension_numbers = #tpu.dot_dimension_numbers<[1], [0], [0], [1], [0, 0, 1, 1], [], []>} : vector<7x32xbf16>, vector<32x32xbf16>, vector<7x32xf32> -> vector<7x32xf32>
      %100 = arith.addf %93, %99 : vector<7x32xf32>
      %c9_i32_113 = arith.constant 9 : i32
      %101 = arith.addi %64, %c9_i32_113 : i32
      %c2_i32_114 = arith.constant 2 : i32
      %102 = arith.addi %101, %c2_i32_114 : i32
      %103 = arith.index_cast %102 : i32 to index
      %c0_115 = arith.constant 0 : index
      %104 = vector.load %arg10[%103, %c0_115] : memref<81x32xf32, #tpu.memory_space<vmem>>, vector<7x32xf32>
      %105 = arith.truncf %104 : vector<7x32xf32> to vector<7x32xbf16>
      %cst_116 = arith.constant dense<0.000000e+00> : vector<7x32xf32>
      %106 = tpu.matmul %105, %54, %cst_116 {dimension_numbers = #tpu.dot_dimension_numbers<[1], [0], [0], [1], [0, 0, 1, 1], [], []>} : vector<7x32xbf16>, vector<32x32xbf16>, vector<7x32xf32> -> vector<7x32xf32>
      %107 = arith.addf %100, %106 : vector<7x32xf32>
      %c18_i32 = arith.constant 18 : i32
      %108 = arith.addi %64, %c18_i32 : i32
      %c0_i32_117 = arith.constant 0 : i32
      %109 = arith.addi %108, %c0_i32_117 : i32
      %110 = arith.index_cast %109 : i32 to index
      %c0_118 = arith.constant 0 : index
      %111 = vector.load %arg10[%110, %c0_118] : memref<81x32xf32, #tpu.memory_space<vmem>>, vector<7x32xf32>
      %112 = arith.truncf %111 : vector<7x32xf32> to vector<7x32xbf16>
      %cst_119 = arith.constant dense<0.000000e+00> : vector<7x32xf32>
      %113 = tpu.matmul %112, %56, %cst_119 {dimension_numbers = #tpu.dot_dimension_numbers<[1], [0], [0], [1], [0, 0, 1, 1], [], []>} : vector<7x32xbf16>, vector<32x32xbf16>, vector<7x32xf32> -> vector<7x32xf32>
      %114 = arith.addf %107, %113 : vector<7x32xf32>
      %c18_i32_120 = arith.constant 18 : i32
      %115 = arith.addi %64, %c18_i32_120 : i32
      %c1_i32_121 = arith.constant 1 : i32
      %116 = arith.addi %115, %c1_i32_121 : i32
      %117 = arith.index_cast %116 : i32 to index
      %c0_122 = arith.constant 0 : index
      %118 = vector.load %arg10[%117, %c0_122] : memref<81x32xf32, #tpu.memory_space<vmem>>, vector<7x32xf32>
      %119 = arith.truncf %118 : vector<7x32xf32> to vector<7x32xbf16>
      %cst_123 = arith.constant dense<0.000000e+00> : vector<7x32xf32>
      %120 = tpu.matmul %119, %58, %cst_123 {dimension_numbers = #tpu.dot_dimension_numbers<[1], [0], [0], [1], [0, 0, 1, 1], [], []>} : vector<7x32xbf16>, vector<32x32xbf16>, vector<7x32xf32> -> vector<7x32xf32>
      %121 = arith.addf %114, %120 : vector<7x32xf32>
      %c18_i32_124 = arith.constant 18 : i32
      %122 = arith.addi %64, %c18_i32_124 : i32
      %c2_i32_125 = arith.constant 2 : i32
      %123 = arith.addi %122, %c2_i32_125 : i32
      %124 = arith.index_cast %123 : i32 to index
      %c0_126 = arith.constant 0 : index
      %125 = vector.load %arg10[%124, %c0_126] : memref<81x32xf32, #tpu.memory_space<vmem>>, vector<7x32xf32>
      %126 = arith.truncf %125 : vector<7x32xf32> to vector<7x32xbf16>
      %cst_127 = arith.constant dense<0.000000e+00> : vector<7x32xf32>
      %127 = tpu.matmul %126, %60, %cst_127 {dimension_numbers = #tpu.dot_dimension_numbers<[1], [0], [0], [1], [0, 0, 1, 1], [], []>} : vector<7x32xbf16>, vector<32x32xbf16>, vector<7x32xf32> -> vector<7x32xf32>
      %128 = arith.addf %121, %127 : vector<7x32xf32>
      %129 = vector.broadcast %61 : vector<1x32xf32> to vector<7x32xf32>
      %130 = arith.addf %128, %129 : vector<7x32xf32>
      %cst_128 = arith.constant 0.000000e+00 : f32
      %131 = vector.broadcast %cst_128 : f32 to vector<7x32xf32>
      %132 = arith.cmpf ogt, %130, %131 : vector<7x32xf32>
      %cst_129 = arith.constant 0.000000e+00 : f32
      %133 = vector.broadcast %cst_129 : f32 to vector<7x32xf32>
      %134 = arith.minimumf %130, %133 : vector<7x32xf32>
      %135 = math.exp %134 : vector<7x32xf32>
      %cst_130 = arith.constant 1.000000e+00 : f32
      %136 = vector.broadcast %cst_130 : f32 to vector<7x32xf32>
      %137 = arith.subf %135, %136 : vector<7x32xf32>
      %138 = arith.select %132, %130, %137 : vector<7x32xi1>, vector<7x32xf32>
      %c7_i32_131 = arith.constant 7 : i32
      %139 = arith.muli %arg11, %c7_i32_131 : i32
      %c0_132 = arith.constant 0 : index
      %140 = arith.index_cast %139 : i32 to index
      %c0_133 = arith.constant 0 : index
      %141 = vector.load %arg7[%c0_132, %140, %c0_133] : memref<1x49x32xf32, #tpu.memory_space<vmem>>, vector<1x7x32xf32>
      %142 = vector.shape_cast %141 : vector<1x7x32xf32> to vector<7x32xf32>
      %143 = vector.shape_cast %138 : vector<7x32xf32> to vector<1x7x32xf32>
      tpu.vector_store %arg7[%c0_132, %140, %c0_133], %143 {strides = array<i32>} : memref<1x49x32xf32, #tpu.memory_space<vmem>>, vector<1x7x32xf32>,
    }
    %c7_i32_91 = arith.constant 7 : i32
    return
  }
  func.func @transform_0(%arg0: i32) -> (i32, i32, i32) {
    %c0_i32 = arith.constant 0 : i32
    %c0_i32_0 = arith.constant 0 : i32
    %c0_i32_1 = arith.constant 0 : i32
    return %arg0, %c0_i32, %c0_i32_0 : i32, i32, i32
  }
  func.func @transform_1(%arg0: i32) -> (i32, i32) {
    %c0_i32 = arith.constant 0 : i32
    %c0_i32_0 = arith.constant 0 : i32
    %c0_i32_1 = arith.constant 0 : i32
    return %c0_i32, %c0_i32_0 : i32, i32
  }
  func.func @transform_2(%arg0: i32) -> (i32, i32, i32) {
    %c0_i32 = arith.constant 0 : i32
    %c0_i32_0 = arith.constant 0 : i32
    %c0_i32_1 = arith.constant 0 : i32
    %c0_i32_2 = arith.constant 0 : i32
    return %c0_i32, %c0_i32_0, %c0_i32_1 : i32, i32, i32
  }
  func.func @transform_3(%arg0: i32) -> (i32, i32, i32) {
    %c0_i32 = arith.constant 0 : i32
    %c0_i32_0 = arith.constant 0 : i32
    %c0_i32_1 = arith.constant 0 : i32
    %c0_i32_2 = arith.constant 0 : i32
    return %c0_i32, %c0_i32_0, %c0_i32_1 : i32, i32, i32
  }
  func.func @transform_4(%arg0: i32) -> (i32, i32, i32) {
    %c0_i32 = arith.constant 0 : i32
    %c0_i32_0 = arith.constant 0 : i32
    %c0_i32_1 = arith.constant 0 : i32
    %c0_i32_2 = arith.constant 0 : i32
    return %c0_i32, %c0_i32_0, %c0_i32_1 : i32, i32, i32
  }
  func.func @transform_5(%arg0: i32) -> (i32, i32) {
    %c0_i32 = arith.constant 0 : i32
    %c0_i32_0 = arith.constant 0 : i32
    %c0_i32_1 = arith.constant 0 : i32
    return %c0_i32, %c0_i32_0 : i32, i32
  }
  func.func @transform_6(%arg0: i32) -> (i32, i32, i32) {
    %c0_i32 = arith.constant 0 : i32
    %c0_i32_0 = arith.constant 0 : i32
    %c0_i32_1 = arith.constant 0 : i32
    return %arg0, %c0_i32, %c0_i32_0 : i32, i32, i32
  }
}

module attributes {stable_mosaic.version = 11 : i64} {
  func.func @kernel(%arg0: i32, %arg1: memref<8x1568xf32, #tpu.memory_space<vmem>>, %arg2: memref<1568x512xbf16, #tpu.memory_space<vmem>>, %arg3: memref<1x512xf32, #tpu.memory_space<vmem>>, %arg4: memref<8x512xf32, #tpu.memory_space<vmem>>) attributes {dimension_semantics = [#tpu.dimension_semantics<arbitrary>], iteration_bounds = array<i64: 1>, scalar_prefetch = 0 : i64, scratch_operands = 0 : i64, tpu.core_type = #tpu.core_type<tc>, window_params = [{pipeline_mode = #tpu.pipeline_mode<synchronous>, transform_indices = @transform_0, window_bounds = array<i64: 8, 1568>}, {pipeline_mode = #tpu.pipeline_mode<synchronous>, transform_indices = @transform_1, window_bounds = array<i64: 1568, 512>}, {pipeline_mode = #tpu.pipeline_mode<synchronous>, transform_indices = @transform_2, window_bounds = array<i64: 1, 512>}, {pipeline_mode = #tpu.pipeline_mode<synchronous>, transform_indices = @transform_3, window_bounds = array<i64: 8, 512>}]} {
    %c0 = arith.constant 0 : index
    %c0_0 = arith.constant 0 : index
    %0 = vector.load %arg1[%c0, %c0_0] : memref<8x1568xf32, #tpu.memory_space<vmem>>, vector<8x1568xf32>
    %1 = arith.truncf %0 : vector<8x1568xf32> to vector<8x1568xbf16>
    %c0_1 = arith.constant 0 : index
    %c0_2 = arith.constant 0 : index
    %2 = vector.load %arg2[%c0_1, %c0_2] : memref<1568x512xbf16, #tpu.memory_space<vmem>>, vector<1568x512xbf16>
    %cst = arith.constant dense<0.000000e+00> : vector<8x512xf32>
    %3 = tpu.matmul %1, %2, %cst {dimension_numbers = #tpu.dot_dimension_numbers<[1], [0], [0], [1], [0, 0, 1, 1], [], []>} : vector<8x1568xbf16>, vector<1568x512xbf16>, vector<8x512xf32> -> vector<8x512xf32>
    %c0_3 = arith.constant 0 : index
    %c0_4 = arith.constant 0 : index
    %4 = vector.load %arg3[%c0_3, %c0_4] : memref<1x512xf32, #tpu.memory_space<vmem>>, vector<1x512xf32>
    %5 = vector.broadcast %4 : vector<1x512xf32> to vector<8x512xf32>
    %6 = arith.addf %3, %5 : vector<8x512xf32>
    %cst_5 = arith.constant dense<0.000000e+00> : vector<8xf32>
    %7 = vector.multi_reduction <add>, %6, %cst_5 [1] : vector<8x512xf32> to vector<8xf32>
    %8 = vector.shape_cast %7 : vector<8xf32> to vector<8x1xf32>
    %cst_6 = arith.constant 5.120000e+02 : f32
    %9 = vector.broadcast %cst_6 : f32 to vector<8x1xf32>
    %10 = arith.divf %8, %9 : vector<8x1xf32>
    %11 = vector.broadcast %10 : vector<8x1xf32> to vector<8x512xf32>
    %12 = arith.subf %6, %11 : vector<8x512xf32>
    %13 = arith.mulf %12, %12 : vector<8x512xf32>
    %cst_7 = arith.constant dense<0.000000e+00> : vector<8xf32>
    %14 = vector.multi_reduction <add>, %13, %cst_7 [1] : vector<8x512xf32> to vector<8xf32>
    %15 = vector.shape_cast %14 : vector<8xf32> to vector<8x1xf32>
    %cst_8 = arith.constant 5.120000e+02 : f32
    %16 = vector.broadcast %cst_8 : f32 to vector<8x1xf32>
    %17 = arith.divf %15, %16 : vector<8x1xf32>
    %18 = vector.broadcast %10 : vector<8x1xf32> to vector<8x512xf32>
    %19 = arith.subf %6, %18 : vector<8x512xf32>
    %cst_9 = arith.constant 9.99999974E-6 : f32
    %20 = vector.broadcast %cst_9 : f32 to vector<8x1xf32>
    %21 = arith.addf %17, %20 : vector<8x1xf32>
    %22 = math.rsqrt %21 : vector<8x1xf32>
    %23 = vector.broadcast %22 : vector<8x1xf32> to vector<8x512xf32>
    %24 = arith.mulf %19, %23 : vector<8x512xf32>
    %cst_10 = arith.constant 0.000000e+00 : f32
    %25 = vector.broadcast %cst_10 : f32 to vector<8x512xf32>
    %26 = arith.cmpf ogt, %24, %25 : vector<8x512xf32>
    %cst_11 = arith.constant 0.000000e+00 : f32
    %27 = vector.broadcast %cst_11 : f32 to vector<8x512xf32>
    %28 = arith.minimumf %24, %27 : vector<8x512xf32>
    %29 = math.exp %28 : vector<8x512xf32>
    %cst_12 = arith.constant 1.000000e+00 : f32
    %30 = vector.broadcast %cst_12 : f32 to vector<8x512xf32>
    %31 = arith.subf %29, %30 : vector<8x512xf32>
    %32 = arith.select %26, %24, %31 : vector<8x512xi1>, vector<8x512xf32>
    %c0_13 = arith.constant 0 : index
    %c0_14 = arith.constant 0 : index
    %33 = vector.load %arg4[%c0_13, %c0_14] : memref<8x512xf32, #tpu.memory_space<vmem>>, vector<8x512xf32>
    tpu.vector_store %arg4[%c0_13, %c0_14], %32 {strides = array<i32>} : memref<8x512xf32, #tpu.memory_space<vmem>>, vector<8x512xf32>,
    return
  }
  func.func @transform_0(%arg0: i32) -> (i32, i32) {
    %c0_i32 = arith.constant 0 : i32
    %c0_i32_0 = arith.constant 0 : i32
    %c0_i32_1 = arith.constant 0 : i32
    return %c0_i32, %c0_i32_0 : i32, i32
  }
  func.func @transform_1(%arg0: i32) -> (i32, i32) {
    %c0_i32 = arith.constant 0 : i32
    %c0_i32_0 = arith.constant 0 : i32
    %c0_i32_1 = arith.constant 0 : i32
    return %c0_i32, %c0_i32_0 : i32, i32
  }
  func.func @transform_2(%arg0: i32) -> (i32, i32) {
    %c0_i32 = arith.constant 0 : i32
    %c0_i32_0 = arith.constant 0 : i32
    %c0_i32_1 = arith.constant 0 : i32
    return %c0_i32, %c0_i32_0 : i32, i32
  }
  func.func @transform_3(%arg0: i32) -> (i32, i32) {
    %c0_i32 = arith.constant 0 : i32
    %c0_i32_0 = arith.constant 0 : i32
    %c0_i32_1 = arith.constant 0 : i32
    return %c0_i32, %c0_i32_0 : i32, i32
  }
}

</mosaic_0001>

<llo_original>
// kernel: cnn_forward.2
$region0: #{cnn_forward.2}
  #allocation0 [shape = 'u32[]', space=smem, size = 0x4, offset = 0x4, fixed_abs, tag = 'smem constant byte address 0x4 - core index']
  #allocation1 [shape = 'u32[144,128]{1,0:T(1,128)}', space=vmem, size = 0x12000, scoped, tag = 'internal scratch']
  #allocation2 [shape = 'f32[1681,32]{1,0:T(8,128)}', space=vmem, size = 0xd3000, scoped, tag = 'scratch operand']
  #allocation3 [shape = 'f32[400,32]{1,0:T(8,128)}', space=vmem, size = 0x32000, scoped, tag = 'scratch operand']
  #allocation4 [shape = 'f32[81,32]{1,0:T(8,128)}', space=vmem, size = 0xb000, scoped, tag = 'scratch operand']
  %s0 = inlined_call_operand.vmem [shape: f32[2,1681,36], index: 0, kind: input, shape index: {}]
  %s1 = inlined_call_operand.vmem [shape: bf16[36,32], index: 1, kind: input, shape index: {}]
  %s2 = inlined_call_operand.vmem [shape: bf16[9,32,32], index: 2, kind: input, shape index: {}]
  %s3 = inlined_call_operand.vmem [shape: bf16[9,32,32], index: 3, kind: input, shape index: {}]
  %s4 = inlined_call_operand.vmem [shape: bf16[9,32,32], index: 4, kind: input, shape index: {}]
  %s5 = inlined_call_operand.vmem [shape: f32[4,32], index: 5, kind: input, shape index: {}]
  %s6 = inlined_call_operand.vmem [shape: f32[2,49,32], index: 6, kind: output, shape index: {}]
  %s7 = sld [smem:[#allocation0]]
  $region85: #{cnn_forward.2} parent=0
    _
  %s9 = ssub.s32 1, %s7
  %s10 = scalar_select 0, %s9, %s7
  loop: start=0, step=1, limit=4
  $region2: #{cnn_forward.2} parent=0 // loop_pre_header
    _
  $region3: #{cnn_forward.2} parent=0 // loop_header
    %s12 = sphi 0, %s16
    %p13 = scmp.ge.s32.totalorder %s12, 4
    %s22 = sphi 0, %s24
    %s25 = sphi 0, %s22
    %s26 = sphi 0, %s25
    %s42 = sphi 0, %s26
    %s46 = sphi 0, %s46
    %s48 = sphi 0, %s46
    %s49 = sphi 0, %s48
    %s63 = sphi 0, %s49
    %s67 = sphi 0, %s67
    %s69 = sphi 0, %s67
    %s70 = sphi 0, %s69
    %s84 = sphi 0, %s70
    %s88 = sphi 0, %s88
    %s90 = sphi 0, %s88
    %s91 = sphi 0, %s90
    %s105 = sphi 0, %s91
    %s109 = sphi 0, %s109
    %s111 = sphi 0, %s109
    %s112 = sphi 0, %s111
    %s126 = sphi 0, %s112
    %s130 = sphi 0, %s130
    %s132 = sphi 0, %s130
    %s133 = sphi 0, %s132
    %s147 = sphi 0, %s133
    %s153 = sphi 0, %s155
    %s156 = sphi 0, %s153
    %s157 = sphi 0, %s156
    %s173 = sphi 0, %s157
  $region4: #{cnn_forward.2} parent=0 // loop_header_branch
    %15 = sbr.rel (%p13) target = $region8
  $region5: #{cnn_forward.2} parent=0 // loop_body
    %s17 = ssub.s32 %s12, 1
    %s18 = ssub.s32 %s12, 2
    %s19 = sadd.s32 %s12, 1
    %s20 = ssub.s32 %s12, %s19
    %p21 = scmp.eq.s32.totalorder %s20, 0
    %s23 = sadd.s32 %s22, 1
    %s24 = scalar_select %p21, %s22, %s23
    %p27 = pneg %p21
    %p28 = scmp.eq.s32.totalorder %s12, 1
    %p29 = por %p27, %p28
    %p30 = scmp.ne.s32.totalorder %s22, %s25
    %p31 = scmp.eq.s32.totalorder %s12, 0
    %p32 = por %p30, %p31
    %p33 = scmp.ne.s32.totalorder %s22, %s25
    %p34 = scmp.eq.s32.totalorder %s17, 1
    %p35 = por %p33, %p34
    %p36 = scmp.ne.s32.totalorder %s25, %s26
    %p37 = scmp.eq.s32.totalorder %s17, 0
    %p38 = por %p36, %p37
    %p39 = scmp.ne.s32.totalorder %s25, %s26
    %p40 = scmp.eq.s32.totalorder %s18, 1
    %p41 = por %p39, %p40
    %p43 = scmp.ne.s32.totalorder %s26, %s42
    %p44 = scmp.eq.s32.totalorder %s18, 0
    %p45 = por %p43, %p44
    %s47 = sadd.s32 %s46, 1
    %p50 = scmp.eq.s32.totalorder %s12, 1
    %p51 = scmp.ne.s32.totalorder %s46, %s48
    %p52 = scmp.eq.s32.totalorder %s12, 0
    %p53 = por %p51, %p52
    %p54 = scmp.ne.s32.totalorder %s46, %s48
    %p55 = scmp.eq.s32.totalorder %s17, 1
    %p56 = por %p54, %p55
    %p57 = scmp.ne.s32.totalorder %s48, %s49
    %p58 = scmp.eq.s32.totalorder %s17, 0
    %p59 = por %p57, %p58
    %p60 = scmp.ne.s32.totalorder %s48, %s49
    %p61 = scmp.eq.s32.totalorder %s18, 1
    %p62 = por %p60, %p61
    %p64 = scmp.ne.s32.totalorder %s49, %s63
    %p65 = scmp.eq.s32.totalorder %s18, 0
    %p66 = por %p64, %p65
    %s68 = sadd.s32 %s67, 1
    %p71 = scmp.eq.s32.totalorder %s12, 1
    %p72 = scmp.ne.s32.totalorder %s67, %s69
    %p73 = scmp.eq.s32.totalorder %s12, 0
    %p74 = por %p72, %p73
    %p75 = scmp.ne.s32.totalorder %s67, %s69
    %p76 = scmp.eq.s32.totalorder %s17, 1
    %p77 = por %p75, %p76
    %p78 = scmp.ne.s32.totalorder %s69, %s70
    %p79 = scmp.eq.s32.totalorder %s17, 0
    %p80 = por %p78, %p79
    %p81 = scmp.ne.s32.totalorder %s69, %s70
    %p82 = scmp.eq.s32.totalorder %s18, 1
    %p83 = por %p81, %p82
    %p85 = scmp.ne.s32.totalorder %s70, %s84
    %p86 = scmp.eq.s32.totalorder %s18, 0
    %p87 = por %p85, %p86
    %s89 = sadd.s32 %s88, 1
    %p92 = scmp.eq.s32.totalorder %s12, 1
    %p93 = scmp.ne.s32.totalorder %s88, %s90
    %p94 = scmp.eq.s32.totalorder %s12, 0
    %p95 = por %p93, %p94
    %p96 = scmp.ne.s32.totalorder %s88, %s90
    %p97 = scmp.eq.s32.totalorder %s17, 1
    %p98 = por %p96, %p97
    %p99 = scmp.ne.s32.totalorder %s90, %s91
    %p100 = scmp.eq.s32.totalorder %s17, 0
    %p101 = por %p99, %p100
    %p102 = scmp.ne.s32.totalorder %s90, %s91
    %p103 = scmp.eq.s32.totalorder %s18, 1
    %p104 = por %p102, %p103
    %p106 = scmp.ne.s32.totalorder %s91, %s105
    %p107 = scmp.eq.s32.totalorder %s18, 0
    %p108 = por %p106, %p107
    %s110 = sadd.s32 %s109, 1
    %p113 = scmp.eq.s32.totalorder %s12, 1
    %p114 = scmp.ne.s32.totalorder %s109, %s111
    %p115 = scmp.eq.s32.totalorder %s12, 0
    %p116 = por %p114, %p115
    %p117 = scmp.ne.s32.totalorder %s109, %s111
    %p118 = scmp.eq.s32.totalorder %s17, 1
    %p119 = por %p117, %p118
    %p120 = scmp.ne.s32.totalorder %s111, %s112
    %p121 = scmp.eq.s32.totalorder %s17, 0
    %p122 = por %p120, %p121
    %p123 = scmp.ne.s32.totalorder %s111, %s112
    %p124 = scmp.eq.s32.totalorder %s18, 1
    %p125 = por %p123, %p124
    %p127 = scmp.ne.s32.totalorder %s112, %s126
    %p128 = scmp.eq.s32.totalorder %s18, 0
    %p129 = por %p127, %p128
    %s131 = sadd.s32 %s130, 1
    %p134 = scmp.eq.s32.totalorder %s12, 1
    %p135 = scmp.ne.s32.totalorder %s130, %s132
    %p136 = scmp.eq.s32.totalorder %s12, 0
    %p137 = por %p135, %p136
    %p138 = scmp.ne.s32.totalorder %s130, %s132
    %p139 = scmp.eq.s32.totalorder %s17, 1
    %p140 = por %p138, %p139
    %p141 = scmp.ne.s32.totalorder %s132, %s133
    %p142 = scmp.eq.s32.totalorder %s17, 0
    %p143 = por %p141, %p142
    %p144 = scmp.ne.s32.totalorder %s132, %s133
    %p145 = scmp.eq.s32.totalorder %s18, 1
    %p146 = por %p144, %p145
    %p148 = scmp.ne.s32.totalorder %s133, %s147
    %p149 = scmp.eq.s32.totalorder %s18, 0
    %p150 = por %p148, %p149
    %s151 = ssub.s32 %s12, %s19
    %p152 = scmp.eq.s32.totalorder %s151, 0
    %s154 = sadd.s32 %s153, 1
    %s155 = scalar_select %p152, %s153, %s154
    %p158 = pneg %p152
    %p159 = scmp.eq.s32.totalorder %s12, 1
    %p160 = por %p158, %p159
    %p161 = scmp.ne.s32.totalorder %s153, %s156
    %p162 = scmp.eq.s32.totalorder %s12, 0
    %p163 = por %p161, %p162
    %p164 = scmp.ne.s32.totalorder %s153, %s156
    %p165 = scmp.eq.s32.totalorder %s17, 1
    %p166 = por %p164, %p165
    %p167 = scmp.ne.s32.totalorder %s156, %s157
    %p168 = scmp.eq.s32.totalorder %s17, 0
    %p169 = por %p167, %p168
    %p170 = scmp.ne.s32.totalorder %s156, %s157
    %p171 = scmp.eq.s32.totalorder %s18, 1
    %p172 = por %p170, %p171
    %p174 = scmp.ne.s32.totalorder %s157, %s173
    %p175 = scmp.eq.s32.totalorder %s18, 0
    %p176 = por %p174, %p175
    %p177 = scmp.le.s32.totalorder 1, %s12
    %p178 = scmp.lt.s32.totalorder %s12, 3
    %p179 = pnand %p177, %p178
    %p180 = pneg %p179
    // Predicated region
    $region9: #{cnn_forward.2} parent=5 // pred_check
      _
    $region10: #{cnn_forward.2} parent=5 // pred_check_branch
      %182 = sbr.rel (%p179) target = $region12
    $region11: #{cnn_forward.2} parent=5 // pred_region
      %s183 = ssub.s32 %s12, 1
      // Predicated region
      $region13: #{cnn_forward.2} parent=11 // pred_check
        %p184 = pneg %p59
      $region14: #{cnn_forward.2} parent=11 // pred_check_branch
        %186 = sbr.rel (%p184) target = $region16
      $region15: #{cnn_forward.2} parent=11 // pred_region
        _
      $region16: #{cnn_forward.2} parent=11 // pred_fallthru
        _
      // Predicated region
      $region17: #{cnn_forward.2} parent=11 // pred_check
        %p187 = pneg %p80
      $region18: #{cnn_forward.2} parent=11 // pred_check_branch
        %189 = sbr.rel (%p187) target = $region20
      $region19: #{cnn_forward.2} parent=11 // pred_region
        _
      $region20: #{cnn_forward.2} parent=11 // pred_fallthru
        _
      // Predicated region
      $region21: #{cnn_forward.2} parent=11 // pred_check
        %p190 = pneg %p101
      $region22: #{cnn_forward.2} parent=11 // pred_check_branch
        %192 = sbr.rel (%p190) target = $region24
      $region23: #{cnn_forward.2} parent=11 // pred_region
        _
      $region24: #{cnn_forward.2} parent=11 // pred_fallthru
        _
      // Predicated region
      $region25: #{cnn_forward.2} parent=11 // pred_check
        %p193 = pneg %p122
      $region26: #{cnn_forward.2} parent=11 // pred_check_branch
        %195 = sbr.rel (%p193) target = $region28
      $region27: #{cnn_forward.2} parent=11 // pred_region
        _
      $region28: #{cnn_forward.2} parent=11 // pred_fallthru
        _
      // Predicated region
      $region29: #{cnn_forward.2} parent=11 // pred_check
        %p196 = pneg %p143
      $region30: #{cnn_forward.2} parent=11 // pred_check_branch
        %198 = sbr.rel (%p196) target = $region32
      $region31: #{cnn_forward.2} parent=11 // pred_region
        _
      $region32: #{cnn_forward.2} parent=11 // pred_fallthru
        _
    $region12: #{cnn_forward.2} parent=5 // pred_fallthru
      _
    %p199 = scmp.lt.s32.totalorder %s12, 2
    // Predicated region
    $region33: #{cnn_forward.2} parent=5 // pred_check
      %p200 = pneg %p199
    $region34: #{cnn_forward.2} parent=5 // pred_check_branch
      %202 = sbr.rel (%p200) target = $region36
    $region35: #{cnn_forward.2} parent=5 // pred_region
      // Predicated region
      $region37: #{cnn_forward.2} parent=35 // pred_check
        %p203 = pneg %p32
      $region38: #{cnn_forward.2} parent=35 // pred_check_branch
        %205 = sbr.rel (%p203) target = $region40
      $region39: #{cnn_forward.2} parent=35 // pred_region
        %p206 = scmp.lt.s32.totalorder %s12, 1
        %s207 = scalar_select %p206, %s12, 1
        %s208 = smul.addr %s207, 211
        %s209 = smul.addr %s208, 8
        %s210 = scalar_lea.vmem %s0, %s209
      $region40: #{cnn_forward.2} parent=35 // pred_fallthru
        _
    $region36: #{cnn_forward.2} parent=5 // pred_fallthru
      _
    %p211 = scmp.le.s32.totalorder 1, %s12
    %p212 = scmp.lt.s32.totalorder %s12, 3
    %p213 = pnand %p211, %p212
    %p214 = pneg %p213
    // Predicated region
    $region41: #{cnn_forward.2} parent=5 // pred_check
      _
    $region42: #{cnn_forward.2} parent=5 // pred_check_branch
      %216 = sbr.rel (%p213) target = $region44
    $region43: #{cnn_forward.2} parent=5 // pred_region
      %s217 = ssub.s32 %s12, 1
      %p218 = scmp.lt.s32.totalorder %s17, 1
      %s219 = scalar_select %p218, %s17, 1
      %s220 = smul.addr %s219, 211
      %s221 = smul.addr %s220, 8
      %s222 = scalar_lea.vmem %s0, %s221
      %p223 = pneg %p38
      %p224 = pneg %p35
      %p225 = pneg %p59
      %p226 = pneg %p56
      %p227 = pneg %p80
      %p228 = pneg %p77
      %p229 = pneg %p101
      %p230 = pneg %p98
      %p231 = pneg %p122
      %p232 = pneg %p119
      %p233 = pneg %p143
      %p234 = pneg %p140
      %p235 = pneg %p169
      %p236 = pneg %p166
      %p237 = scmp.lt.s32.totalorder %s17, 1
      %s238 = scalar_select %p237, %s17, 1
      %s239 = smul.addr %s238, 7
      %s240 = smul.addr %s239, 8
      %s241 = scalar_lea.vmem %s6, %s240
      %p242 = scmp.lt.s32.totalorder %s17, 1
      %s243 = scalar_select %p242, %s17, 1
      %s244 = smul.addr %s243, 211
      %s245 = smul.addr %s244, 8
      %s246 = scalar_lea.vmem %s0, %s245
      %p247 = scmp.lt.s32.totalorder %s17, 1
      %s248 = scalar_select %p247, %s17, 1
      %s249 = smul.addr %s248, 7
      %s250 = smul.addr %s249, 8
      %s251 = scalar_lea.vmem %s6, %s250
      %v253 = vld [vmem:[%s1] sm:$0xf]
      %v254 = vld [vmem:[%s1 + $0x4] sm:$0xf]
      %v255 = vld [vmem:[%s1 + $0x8] sm:$0xf]
      %v256 = vld [vmem:[%s1 + $0xc] sm:$0xf]
      %v257 = vld [vmem:[%s1 + $0x10] sm:$0x3]
      %v258 = vld [vmem:[%s5] sm:$0x1]
      loop: start=0, step=1, limit=41
      $region45: #{cnn_forward.2} parent=43 // loop_pre_header
        _
      $region46: #{cnn_forward.2} parent=43 // loop_header
        %s260 = sphi 0, %s264
        %p261 = scmp.ge.s32.totalorder %s260, 41
      $region47: #{cnn_forward.2} parent=43 // loop_header_branch
        %263 = sbr.rel (%p261) target = $region51
      $region48: #{cnn_forward.2} parent=43 // loop_body
        %s265 = smul.u32 %s260, 41
        %s266 = scalar_lea.vmem %s246, %s265
        %v267 = vld [vmem:[%s266] sm:$0xff]
        %v268 = vld [vmem:[%s266 + $0x8] sm:$0xff]
        %v269 = vld [vmem:[%s266 + $0x10] sm:$0xff]
        %v270 = vld [vmem:[%s266 + $0x18] sm:$0xff]
        %v271 = vld [vmem:[%s266 + $0x20] sm:$0xff]
        %v272 = vld [vmem:[%s266 + $0x28] sm:$0x1]
        %v273 = vpack.c.bf16 %v268, %v267
        %v274 = vpack.c.bf16 %v270, %v269
        %v275 = vpack.c.bf16 %v272, %v271
        %v276 = vlaneseq
        %v277 = vshrl.u32 %v276, 7
        %v278 = vsub.s32 0, %v277
        %v279 = vrot.slane %v258, %v278
        %v285 = vunpack.c.l.b16 %v253
        %v286 = vunpack.c.l.b16 %v254
        %v287 = vunpack.c.l.b16 %v255
        %v288 = vunpack.c.l.b16 %v256
        %v289 = vunpack.c.l.b16 %v257
        %v290 = vpack.c.b16 %v286, %v285
        %v291 = vpack.c.b16 %v288, %v287
        %v292 = vpack.c.b16 %v289, %v289
        %vm295 = vcmask 293888
        %v297 = vsel %vm295, %v273, 0
        %v300 = vsel %vm295, %v274, 0
        %v303 = vsel %vm295, %v275, 0
        %vm305 = vcmask 1041408
        %v307 = vsel %vm305, %v292, 0
        %309 = vmatprep.subr.bf16.mxu0 0
        %310 = vmatpush1.bf16.msra.mxu0 %v290
        %311 = vmatprep.subr.bf16.mxu0 0
        %312 = vmatpush1.bf16.msra.mxu0 %v291
        %313 = vmatprep.subr.bf16.mxu0 0
        %314 = vmatpush1.bf16.msra.mxu0 %v307
        %315 = vmatprep.subr.bf16.mxu0 0
        %316 = vmatpush1.bf16.msra.mxu0 0
        %317 = vmatprep.subr.bf16.mxu0 0
        %318 = vmatpush1.bf16.msra.mxu0 0
        %319 = vmatprep.subr.bf16.mxu0 0
        %320 = vmatpush1.bf16.msra.mxu0 0
        %321 = vmatprep.subr.bf16.mxu0 0
        %322 = vmatpush1.bf16.msra.mxu0 0
        %323 = vmatprep.subr.bf16.mxu0 0
        %324 = vmatpush1.bf16.msra.mxu0 0
        %325 = vmatprep.subr.bf16.mxu0 0
        %326 = vmatpush1.bf16.msra.mxu0 0
        %327 = vmatprep.subr.bf16.mxu0 0
        %328 = vmatpush1.bf16.msra.mxu0 0
        %329 = vmatprep.subr.bf16.mxu0 0
        %330 = vmatpush1.bf16.msra.mxu0 0
        %331 = vmatprep.subr.bf16.mxu0 0
        %332 = vmatpush1.bf16.msra.mxu0 0
        %333 = vmatprep.subr.bf16.mxu0 0
        %334 = vmatpush1.bf16.msra.mxu0 0
        %335 = vmatprep.subr.bf16.mxu0 0
        %336 = vmatpush1.bf16.msra.mxu0 0
        %337 = vmatprep.subr.bf16.mxu0 0
        %338 = vmatpush1.bf16.msra.mxu0 0
        %339 = vmatprep.subr.bf16.mxu0 0
        %340 = vmatpush1.bf16.msra.mxu0 0
        %341 = vmatprep.mubr.bf16.mxu0 0
        %342 = vmatmul.mubr.bf16.gmra.mrb[0].mxu0 %v297
        %v343 = vpop.f32.mrb[0].mxu0
        %v344 = vadd.f32 %v279, %v343
        %v345 = vpop.f32.mrb[0].mxu0
        %v346 = vpop.f32.mrb[0].mxu0
        %v347 = vadd.f32 %v279, %v346
        %v348 = vpop.f32.mrb[0].mxu0
        %349 = vmatprep.mubr.bf16.mxu0 0
        %350 = vmatmul.mubr.bf16.gmra.mrb[0].mxu0 %v300
        %v351 = vpop.f32.mrb[0].mxu0
        %v352 = vadd.f32 %v279, %v351
        %v353 = vpop.f32.mrb[0].mxu0
        %v354 = vpop.f32.mrb[0].mxu0
        %v355 = vadd.f32 %v279, %v354
        %v356 = vpop.f32.mrb[0].mxu0
        %357 = vmatprep.mubr.bf16.mxu0 0
        %358 = vmatmul.mubr.bf16.gmra.mrb[0].mxu0 %v303
        %v359 = vpop.f32.mrb[0].mxu0
        %v360 = vadd.f32 %v279, %v359
        %v361 = vpop.f32.mrb[0].mxu0
        %v362 = vpop.f32.mrb[0].mxu0
        %v363 = vadd.f32 %v279, %v362
        %v364 = vpop.f32.mrb[0].mxu0
        %365 = vdwg.mxu0
        %vm366 = vcmp.gt.f32.partialorder %v344, 0.0
        %vm367 = vcmp.gt.f32.partialorder %v347, 0.0
        %vm368 = vcmp.gt.f32.partialorder %v352, 0.0
        %vm369 = vcmp.gt.f32.partialorder %v355, 0.0
        %vm370 = vcmp.gt.f32.partialorder %v360, 0.0
        %vm371 = vcmp.gt.f32.partialorder %v363, 0.0
        %v372 = vmin.f32 %v344, 0.0
        %v373 = vmin.f32 %v347, 0.0
        %v374 = vmin.f32 %v352, 0.0
        %v375 = vmin.f32 %v355, 0.0
        %v376 = vmin.f32 %v360, 0.0
        %v377 = vmin.f32 %v363, 0.0
        %v378 = vmul.f32 %v372, 1.442695
        %v379 = vpow.pop %v378
        %v380 = vmul.f32 %v373, 1.442695
        %v381 = vpow.pop %v380
        %v382 = vmul.f32 %v374, 1.442695
        %v383 = vpow.pop %v382
        %v384 = vmul.f32 %v375, 1.442695
        %v385 = vpow.pop %v384
        %v386 = vmul.f32 %v376, 1.442695
        %v387 = vpow.pop %v386
        %v388 = vmul.f32 %v377, 1.442695
        %v389 = vpow.pop %v388
        %v390 = vsub.f32 %v379, 1.0
        %v391 = vsub.f32 %v381, 1.0
        %v392 = vsub.f32 %v383, 1.0
        %v393 = vsub.f32 %v385, 1.0
        %v394 = vsub.f32 %v387, 1.0
        %v395 = vsub.f32 %v389, 1.0
        %v396 = vsel %vm366, %v344, %v390
        %v397 = vsel %vm367, %v347, %v391
        %v398 = vsel %vm368, %v352, %v392
        %v399 = vsel %vm369, %v355, %v393
        %v400 = vsel %vm370, %v360, %v394
        %v401 = vsel %vm371, %v363, %v395
        %s402 = scalar_lea.vmem [#allocation2], %s265
        %vm403 = vcmask 261120
        %404 = vst.msk [vmem:[%s402] sm:$0xff] %vm403, %v396
        %405 = vst.msk [vmem:[%s402 + $0x8] sm:$0xff] %vm403, %v397
        %406 = vst.msk [vmem:[%s402 + $0x10] sm:$0xff] %vm403, %v398
        %407 = vst.msk [vmem:[%s402 + $0x18] sm:$0xff] %vm403, %v399
        %408 = vst.msk [vmem:[%s402 + $0x20] sm:$0xff] %vm403, %v400
        %vm409 = vcmask 253952
        %410 = vst.msk [vmem:[%s402 + $0x28] sm:$0x1] %vm409, %v401
      $region49: #{cnn_forward.2} parent=43 // loop_footer
        %s264 = sadd.s32 1, %s260
      $region50: #{cnn_forward.2} parent=43 // loop_footer_branch
        %259 = sbr.rel target = $region46
      $region51: #{cnn_forward.2} parent=43 // loop_exit
        _
      %v411 = vld [vmem:[%s2] sm:$0xf]
      %v412 = vld [vmem:[%s2 + $0x4] sm:$0xf]
      %v413 = vld [vmem:[%s2 + $0x8] sm:$0xf]
      %v414 = vld [vmem:[%s2 + $0xc] sm:$0xf]
      %s415 = scalar_lea.vmem %s2, 16
      %v416 = vld [vmem:[%s415] sm:$0xf]
      %v417 = vld [vmem:[%s415 + $0x4] sm:$0xf]
      %v418 = vld [vmem:[%s415 + $0x8] sm:$0xf]
      %v419 = vld [vmem:[%s415 + $0xc] sm:$0xf]
      %s420 = scalar_lea.vmem %s2, 32
      %v421 = vld [vmem:[%s420] sm:$0xf]
      %v422 = vld [vmem:[%s420 + $0x4] sm:$0xf]
      %v423 = vld [vmem:[%s420 + $0x8] sm:$0xf]
      %v424 = vld [vmem:[%s420 + $0xc] sm:$0xf]
      %s425 = scalar_lea.vmem %s2, 48
      %v426 = vld [vmem:[%s425] sm:$0xf]
      %v427 = vld [vmem:[%s425 + $0x4] sm:$0xf]
      %v428 = vld [vmem:[%s425 + $0x8] sm:$0xf]
      %v429 = vld [vmem:[%s425 + $0xc] sm:$0xf]
      %s430 = scalar_lea.vmem %s2, 64
      %v431 = vld [vmem:[%s430] sm:$0xf]
      %v432 = vld [vmem:[%s430 + $0x4] sm:$0xf]
      %v433 = vld [vmem:[%s430 + $0x8] sm:$0xf]
      %v434 = vld [vmem:[%s430 + $0xc] sm:$0xf]
      %s435 = scalar_lea.vmem %s2, 80
      %v436 = vld [vmem:[%s435] sm:$0xf]
      %v437 = vld [vmem:[%s435 + $0x4] sm:$0xf]
      %v438 = vld [vmem:[%s435 + $0x8] sm:$0xf]
      %v439 = vld [vmem:[%s435 + $0xc] sm:$0xf]
      %s440 = scalar_lea.vmem %s2, 96
      %v441 = vld [vmem:[%s440] sm:$0xf]
      %v442 = vld [vmem:[%s440 + $0x4] sm:$0xf]
      %v443 = vld [vmem:[%s440 + $0x8] sm:$0xf]
      %v444 = vld [vmem:[%s440 + $0xc] sm:$0xf]
      %s445 = scalar_lea.vmem %s2, 112
      %v446 = vld [vmem:[%s445] sm:$0xf]
      %v447 = vld [vmem:[%s445 + $0x4] sm:$0xf]
      %v448 = vld [vmem:[%s445 + $0x8] sm:$0xf]
      %v449 = vld [vmem:[%s445 + $0xc] sm:$0xf]
      %s450 = scalar_lea.vmem %s2, 128
      %v451 = vld [vmem:[%s450] sm:$0xf]
      %v452 = vld [vmem:[%s450 + $0x4] sm:$0xf]
      %v453 = vld [vmem:[%s450 + $0x8] sm:$0xf]
      %v454 = vld [vmem:[%s450 + $0xc] sm:$0xf]
      %v455 = vld [vmem:[%s5 + $0x1] sm:$0x1]
      loop: start=0, step=1, limit=20
      $region52: #{cnn_forward.2} parent=43 // loop_pre_header
        _
      $region53: #{cnn_forward.2} parent=43 // loop_header
        %s457 = sphi 0, %s461
        %p458 = scmp.ge.s32.totalorder %s457, 20
      $region54: #{cnn_forward.2} parent=43 // loop_header_branch
        %460 = sbr.rel (%p458) target = $region58
      $region55: #{cnn_forward.2} parent=43 // loop_body
        %s462 = smul.u32 %s457, 82
        %s463 = scalar_lea.vmem [#allocation2], %s462
        %v464 = vld [vmem:[%s463] ss:$2 sm:$0xff]
        %s465 = scalar_lea.vmem %s463, 16 [#allocation2]
        %v466 = vld [vmem:[%s465] ss:$2 sm:$0xff]
        %s467 = scalar_lea.vmem %s463, 32 [#allocation2]
        %v468 = vld [vmem:[%s467] ss:$2 sm:$0xf]
        %v469 = vpack.c.bf16 %v466, %v464
        %v470 = vpack.c.bf16 %v468, %v468
        %s471 = sadd.s32 %s462, 1
        %s472 = scalar_lea.vmem [#allocation2], %s471
        %v473 = vld [vmem:[%s472] ss:$2 sm:$0xff]
        %s474 = scalar_lea.vmem %s472, 16 [#allocation2]
        %v475 = vld [vmem:[%s474] ss:$2 sm:$0xff]
        %s476 = scalar_lea.vmem %s472, 32 [#allocation2]
        %v477 = vld [vmem:[%s476] ss:$2 sm:$0xf]
        %v478 = vpack.c.bf16 %v475, %v473
        %v479 = vpack.c.bf16 %v477, %v477
        %v484 = vunpack.c.l.b16 %v416
        %v485 = vunpack.c.l.b16 %v417
        %v486 = vunpack.c.l.b16 %v418
        %v487 = vunpack.c.l.b16 %v419
        %v488 = vpack.c.b16 %v485, %v484
        %v489 = vpack.c.b16 %v487, %v486
        %vm492 = vcmask 261120
        %v494 = vsel %vm492, %v478, 0
        %v497 = vsel %vm492, %v479, 0
        %499 = vmatprep.subr.bf16.mxu0 0
        %500 = vmatpush1.bf16.msra.mxu0 %v488
        %501 = vmatprep.subr.bf16.mxu0 0
        %502 = vmatpush1.bf16.msra.mxu0 %v489
        %503 = vmatprep.subr.bf16.mxu0 0
        %504 = vmatpush1.bf16.msra.mxu0 0
        %505 = vmatprep.subr.bf16.mxu0 0
        %506 = vmatpush1.bf16.msra.mxu0 0
        %507 = vmatprep.subr.bf16.mxu0 0
        %508 = vmatpush1.bf16.msra.mxu0 0
        %509 = vmatprep.subr.bf16.mxu0 0
        %510 = vmatpush1.bf16.msra.mxu0 0
        %511 = vmatprep.subr.bf16.mxu0 0
        %512 = vmatpush1.bf16.msra.mxu0 0
        %513 = vmatprep.subr.bf16.mxu0 0
        %514 = vmatpush1.bf16.msra.mxu0 0
        %515 = vmatprep.subr.bf16.mxu0 0
        %516 = vmatpush1.bf16.msra.mxu0 0
        %517 = vmatprep.subr.bf16.mxu0 0
        %518 = vmatpush1.bf16.msra.mxu0 0
        %519 = vmatprep.subr.bf16.mxu0 0
        %520 = vmatpush1.bf16.msra.mxu0 0
        %521 = vmatprep.subr.bf16.mxu0 0
        %522 = vmatpush1.bf16.msra.mxu0 0
        %523 = vmatprep.subr.bf16.mxu0 0
        %524 = vmatpush1.bf16.msra.mxu0 0
        %525 = vmatprep.subr.bf16.mxu0 0
        %526 = vmatpush1.bf16.msra.mxu0 0
        %527 = vmatprep.subr.bf16.mxu0 0
        %528 = vmatpush1.bf16.msra.mxu0 0
        %529 = vmatprep.subr.bf16.mxu0 0
        %530 = vmatpush1.bf16.msra.mxu0 0
        %531 = vmatprep.mubr.bf16.mxu0 0
        %532 = vmatmul.mubr.bf16.gmra.mrb[0].mxu0 %v494
        %v533 = vpop.f32.mrb[0].mxu0
        %v534 = vadd.f32 0.0, %v533
        %v535 = vpop.f32.mrb[0].mxu0
        %v536 = vpop.f32.mrb[0].mxu0
        %v537 = vadd.f32 0.0, %v536
        %v538 = vpop.f32.mrb[0].mxu0
        %539 = vmatprep.mubr.bf16.mxu0 0
        %540 = vmatmul.mubr.bf16.gmra.mrb[0].mxu0 %v497
        %v541 = vpop.f32.mrb[0].mxu0
        %v542 = vadd.f32 0.0, %v541
        %v543 = vpop.f32.mrb[0].mxu0
        %v544 = vpop.f32.mrb[0].mxu0
        %v545 = vpop.f32.mrb[0].mxu0
        %546 = vdwg.mxu0
        %v551 = vunpack.c.l.b16 %v411
        %v552 = vunpack.c.l.b16 %v412
        %v553 = vunpack.c.l.b16 %v413
        %v554 = vunpack.c.l.b16 %v414
        %v555 = vpack.c.b16 %v552, %v551
        %v556 = vpack.c.b16 %v554, %v553
        %v560 = vsel %vm492, %v469, 0
        %v563 = vsel %vm492, %v470, 0
        %565 = vmatprep.subr.bf16.mxu0 0
        %566 = vmatpush1.bf16.msra.mxu0 %v555
        %567 = vmatprep.subr.bf16.mxu0 0
        %568 = vmatpush1.bf16.msra.mxu0 %v556
        %569 = vmatprep.subr.bf16.mxu0 0
        %570 = vmatpush1.bf16.msra.mxu0 0
        %571 = vmatprep.subr.bf16.mxu0 0
        %572 = vmatpush1.bf16.msra.mxu0 0
        %573 = vmatprep.subr.bf16.mxu0 0
        %574 = vmatpush1.bf16.msra.mxu0 0
        %575 = vmatprep.subr.bf16.mxu0 0
        %576 = vmatpush1.bf16.msra.mxu0 0
        %577 = vmatprep.subr.bf16.mxu0 0
        %578 = vmatpush1.bf16.msra.mxu0 0
        %579 = vmatprep.subr.bf16.mxu0 0
        %580 = vmatpush1.bf16.msra.mxu0 0
        %581 = vmatprep.subr.bf16.mxu0 0
        %582 = vmatpush1.bf16.msra.mxu0 0
        %583 = vmatprep.subr.bf16.mxu0 0
        %584 = vmatpush1.bf16.msra.mxu0 0
        %585 = vmatprep.subr.bf16.mxu0 0
        %586 = vmatpush1.bf16.msra.mxu0 0
        %587 = vmatprep.subr.bf16.mxu0 0
        %588 = vmatpush1.bf16.msra.mxu0 0
        %589 = vmatprep.subr.bf16.mxu0 0
        %590 = vmatpush1.bf16.msra.mxu0 0
        %591 = vmatprep.subr.bf16.mxu0 0
        %592 = vmatpush1.bf16.msra.mxu0 0
        %593 = vmatprep.subr.bf16.mxu0 0
        %594 = vmatpush1.bf16.msra.mxu0 0
        %595 = vmatprep.subr.bf16.mxu0 0
        %596 = vmatpush1.bf16.msra.mxu0 0
        %597 = vmatprep.mubr.bf16.mxu0 0
        %598 = vmatmul.mubr.bf16.gmra.mrb[0].mxu0 %v560
        %v599 = vpop.f32.mrb[0].mxu0
        %v600 = vadd.f32 %v534, %v599
        %v601 = vpop.f32.mrb[0].mxu0
        %v602 = vpop.f32.mrb[0].mxu0
        %v603 = vadd.f32 %v537, %v602
        %v604 = vpop.f32.mrb[0].mxu0
        %605 = vmatprep.mubr.bf16.mxu0 0
        %606 = vmatmul.mubr.bf16.gmra.mrb[0].mxu0 %v563
        %v607 = vpop.f32.mrb[0].mxu0
        %v608 = vadd.f32 %v542, %v607
        %v609 = vpop.f32.mrb[0].mxu0
        %v610 = vpop.f32.mrb[0].mxu0
        %v611 = vpop.f32.mrb[0].mxu0
        %612 = vdwg.mxu0
        %s613 = sadd.s32 %s462, 2
        %s614 = scalar_lea.vmem [#allocation2], %s613
        %v615 = vld [vmem:[%s614] ss:$2 sm:$0xff]
        %s616 = scalar_lea.vmem %s614, 16 [#allocation2]
        %v617 = vld [vmem:[%s616] ss:$2 sm:$0xff]
        %s618 = scalar_lea.vmem %s614, 32 [#allocation2]
        %v619 = vld [vmem:[%s618] ss:$2 sm:$0xf]
        %v620 = vpack.c.bf16 %v617, %v615
        %v621 = vpack.c.bf16 %v619, %v619
        %v626 = vunpack.c.l.b16 %v421
        %v627 = vunpack.c.l.b16 %v422
        %v628 = vunpack.c.l.b16 %v423
        %v629 = vunpack.c.l.b16 %v424
        %v630 = vpack.c.b16 %v627, %v626
        %v631 = vpack.c.b16 %v629, %v628
        %v635 = vsel %vm492, %v620, 0
        %v638 = vsel %vm492, %v621, 0
        %640 = vmatprep.subr.bf16.mxu0 0
        %641 = vmatpush1.bf16.msra.mxu0 %v630
        %642 = vmatprep.subr.bf16.mxu0 0
        %643 = vmatpush1.bf16.msra.mxu0 %v631
        %644 = vmatprep.subr.bf16.mxu0 0
        %645 = vmatpush1.bf16.msra.mxu0 0
        %646 = vmatprep.subr.bf16.mxu0 0
        %647 = vmatpush1.bf16.msra.mxu0 0
        %648 = vmatprep.subr.bf16.mxu0 0
        %649 = vmatpush1.bf16.msra.mxu0 0
        %650 = vmatprep.subr.bf16.mxu0 0
        %651 = vmatpush1.bf16.msra.mxu0 0
        %652 = vmatprep.subr.bf16.mxu0 0
        %653 = vmatpush1.bf16.msra.mxu0 0
        %654 = vmatprep.subr.bf16.mxu0 0
        %655 = vmatpush1.bf16.msra.mxu0 0
        %656 = vmatprep.subr.bf16.mxu0 0
        %657 = vmatpush1.bf16.msra.mxu0 0
        %658 = vmatprep.subr.bf16.mxu0 0
        %659 = vmatpush1.bf16.msra.mxu0 0
        %660 = vmatprep.subr.bf16.mxu0 0
        %661 = vmatpush1.bf16.msra.mxu0 0
        %662 = vmatprep.subr.bf16.mxu0 0
        %663 = vmatpush1.bf16.msra.mxu0 0
        %664 = vmatprep.subr.bf16.mxu0 0
        %665 = vmatpush1.bf16.msra.mxu0 0
        %666 = vmatprep.subr.bf16.mxu0 0
        %667 = vmatpush1.bf16.msra.mxu0 0
        %668 = vmatprep.subr.bf16.mxu0 0
        %669 = vmatpush1.bf16.msra.mxu0 0
        %670 = vmatprep.subr.bf16.mxu0 0
        %671 = vmatpush1.bf16.msra.mxu0 0
        %672 = vmatprep.mubr.bf16.mxu0 0
        %673 = vmatmul.mubr.bf16.gmra.mrb[0].mxu0 %v635
        %v674 = vpop.f32.mrb[0].mxu0
        %v675 = vadd.f32 0.0, %v674
        %v676 = vpop.f32.mrb[0].mxu0
        %v677 = vpop.f32.mrb[0].mxu0
        %v678 = vadd.f32 0.0, %v677
        %v679 = vpop.f32.mrb[0].mxu0
        %680 = vmatprep.mubr.bf16.mxu0 0
        %681 = vmatmul.mubr.bf16.gmra.mrb[0].mxu0 %v638
        %v682 = vpop.f32.mrb[0].mxu0
        %v683 = vadd.f32 0.0, %v682
        %v684 = vpop.f32.mrb[0].mxu0
        %v685 = vpop.f32.mrb[0].mxu0
        %v686 = vpop.f32.mrb[0].mxu0
        %687 = vdwg.mxu0
        %v688 = vadd.f32 %v600, %v675
        %v689 = vadd.f32 %v603, %v678
        %v690 = vadd.f32 %v608, %v683
        %s691 = sadd.s32 %s462, 41
        %s692 = scalar_lea.vmem [#allocation2], %s691
        %v693 = vld [vmem:[%s692] ss:$2 sm:$0xff]
        %s694 = scalar_lea.vmem %s692, 16 [#allocation2]
        %v695 = vld [vmem:[%s694] ss:$2 sm:$0xff]
        %s696 = scalar_lea.vmem %s692, 32 [#allocation2]
        %v697 = vld [vmem:[%s696] ss:$2 sm:$0xf]
        %v698 = vpack.c.bf16 %v695, %v693
        %v699 = vpack.c.bf16 %v697, %v697
        %v704 = vunpack.c.l.b16 %v426
        %v705 = vunpack.c.l.b16 %v427
        %v706 = vunpack.c.l.b16 %v428
        %v707 = vunpack.c.l.b16 %v429
        %v708 = vpack.c.b16 %v705, %v704
        %v709 = vpack.c.b16 %v707, %v706
        %v713 = vsel %vm492, %v698, 0
        %v716 = vsel %vm492, %v699, 0
        %718 = vmatprep.subr.bf16.mxu0 0
        %719 = vmatpush1.bf16.msra.mxu0 %v708
        %720 = vmatprep.subr.bf16.mxu0 0
        %721 = vmatpush1.bf16.msra.mxu0 %v709
        %722 = vmatprep.subr.bf16.mxu0 0
        %723 = vmatpush1.bf16.msra.mxu0 0
        %724 = vmatprep.subr.bf16.mxu0 0
        %725 = vmatpush1.bf16.msra.mxu0 0
        %726 = vmatprep.subr.bf16.mxu0 0
        %727 = vmatpush1.bf16.msra.mxu0 0
        %728 = vmatprep.subr.bf16.mxu0 0
        %729 = vmatpush1.bf16.msra.mxu0 0
        %730 = vmatprep.subr.bf16.mxu0 0
        %731 = vmatpush1.bf16.msra.mxu0 0
        %732 = vmatprep.subr.bf16.mxu0 0
        %733 = vmatpush1.bf16.msra.mxu0 0
        %734 = vmatprep.subr.bf16.mxu0 0
        %735 = vmatpush1.bf16.msra.mxu0 0
        %736 = vmatprep.subr.bf16.mxu0 0
        %737 = vmatpush1.bf16.msra.mxu0 0
        %738 = vmatprep.subr.bf16.mxu0 0
        %739 = vmatpush1.bf16.msra.mxu0 0
        %740 = vmatprep.subr.bf16.mxu0 0
        %741 = vmatpush1.bf16.msra.mxu0 0
        %742 = vmatprep.subr.bf16.mxu0 0
        %743 = vmatpush1.bf16.msra.mxu0 0
        %744 = vmatprep.subr.bf16.mxu0 0
        %745 = vmatpush1.bf16.msra.mxu0 0
        %746 = vmatprep.subr.bf16.mxu0 0
        %747 = vmatpush1.bf16.msra.mxu0 0
        %748 = vmatprep.subr.bf16.mxu0 0
        %749 = vmatpush1.bf16.msra.mxu0 0
        %750 = vmatprep.mubr.bf16.mxu0 0
        %751 = vmatmul.mubr.bf16.gmra.mrb[0].mxu0 %v713
        %v752 = vpop.f32.mrb[0].mxu0
        %v753 = vadd.f32 0.0, %v752
        %v754 = vpop.f32.mrb[0].mxu0
        %v755 = vpop.f32.mrb[0].mxu0
        %v756 = vadd.f32 0.0, %v755
        %v757 = vpop.f32.mrb[0].mxu0
        %758 = vmatprep.mubr.bf16.mxu0 0
        %759 = vmatmul.mubr.bf16.gmra.mrb[0].mxu0 %v716
        %v760 = vpop.f32.mrb[0].mxu0
        %v761 = vadd.f32 0.0, %v760
        %v762 = vpop.f32.mrb[0].mxu0
        %v763 = vpop.f32.mrb[0].mxu0
        %v764 = vpop.f32.mrb[0].mxu0
        %765 = vdwg.mxu0
        %v766 = vadd.f32 %v688, %v753
        %v767 = vadd.f32 %v689, %v756
        %v768 = vadd.f32 %v690, %v761
        %s769 = sadd.s32 %s462, 42
        %s770 = scalar_lea.vmem [#allocation2], %s769
        %v771 = vld [vmem:[%s770] ss:$2 sm:$0xff]
        %s772 = scalar_lea.vmem %s770, 16 [#allocation2]
        %v773 = vld [vmem:[%s772] ss:$2 sm:$0xff]
        %s774 = scalar_lea.vmem %s770, 32 [#allocation2]
        %v775 = vld [vmem:[%s774] ss:$2 sm:$0xf]
        %v776 = vpack.c.bf16 %v773, %v771
        %v777 = vpack.c.bf16 %v775, %v775
        %v782 = vunpack.c.l.b16 %v431
        %v783 = vunpack.c.l.b16 %v432
        %v784 = vunpack.c.l.b16 %v433
        %v785 = vunpack.c.l.b16 %v434
        %v786 = vpack.c.b16 %v783, %v782
        %v787 = vpack.c.b16 %v785, %v784
        %v791 = vsel %vm492, %v776, 0
        %v794 = vsel %vm492, %v777, 0
        %796 = vmatprep.subr.bf16.mxu0 0
        %797 = vmatpush1.bf16.msra.mxu0 %v786
        %798 = vmatprep.subr.bf16.mxu0 0
        %799 = vmatpush1.bf16.msra.mxu0 %v787
        %800 = vmatprep.subr.bf16.mxu0 0
        %801 = vmatpush1.bf16.msra.mxu0 0
        %802 = vmatprep.subr.bf16.mxu0 0
        %803 = vmatpush1.bf16.msra.mxu0 0
        %804 = vmatprep.subr.bf16.mxu0 0
        %805 = vmatpush1.bf16.msra.mxu0 0
        %806 = vmatprep.subr.bf16.mxu0 0
        %807 = vmatpush1.bf16.msra.mxu0 0
        %808 = vmatprep.subr.bf16.mxu0 0
        %809 = vmatpush1.bf16.msra.mxu0 0
        %810 = vmatprep.subr.bf16.mxu0 0
        %811 = vmatpush1.bf16.msra.mxu0 0
        %812 = vmatprep.subr.bf16.mxu0 0
        %813 = vmatpush1.bf16.msra.mxu0 0
        %814 = vmatprep.subr.bf16.mxu0 0
        %815 = vmatpush1.bf16.msra.mxu0 0
        %816 = vmatprep.subr.bf16.mxu0 0
        %817 = vmatpush1.bf16.msra.mxu0 0
        %818 = vmatprep.subr.bf16.mxu0 0
        %819 = vmatpush1.bf16.msra.mxu0 0
        %820 = vmatprep.subr.bf16.mxu0 0
        %821 = vmatpush1.bf16.msra.mxu0 0
        %822 = vmatprep.subr.bf16.mxu0 0
        %823 = vmatpush1.bf16.msra.mxu0 0
        %824 = vmatprep.subr.bf16.mxu0 0
        %825 = vmatpush1.bf16.msra.mxu0 0
        %826 = vmatprep.subr.bf16.mxu0 0
        %827 = vmatpush1.bf16.msra.mxu0 0
        %828 = vmatprep.mubr.bf16.mxu0 0
        %829 = vmatmul.mubr.bf16.gmra.mrb[0].mxu0 %v791
        %v830 = vpop.f32.mrb[0].mxu0
        %v831 = vadd.f32 0.0, %v830
        %v832 = vpop.f32.mrb[0].mxu0
        %v833 = vpop.f32.mrb[0].mxu0
        %v834 = vadd.f32 0.0, %v833
        %v835 = vpop.f32.mrb[0].mxu0
        %836 = vmatprep.mubr.bf16.mxu0 0
        %837 = vmatmul.mubr.bf16.gmra.mrb[0].mxu0 %v794
        %v838 = vpop.f32.mrb[0].mxu0
        %v839 = vadd.f32 0.0, %v838
        %v840 = vpop.f32.mrb[0].mxu0
        %v841 = vpop.f32.mrb[0].mxu0
        %v842 = vpop.f32.mrb[0].mxu0
        %843 = vdwg.mxu0
        %v844 = vadd.f32 %v766, %v831
        %v845 = vadd.f32 %v767, %v834
        %v846 = vadd.f32 %v768, %v839
        %s847 = sadd.s32 %s462, 43
        %s848 = scalar_lea.vmem [#allocation2], %s847
        %v849 = vld [vmem:[%s848] ss:$2 sm:$0xff]
        %s850 = scalar_lea.vmem %s848, 16 [#allocation2]
        %v851 = vld [vmem:[%s850] ss:$2 sm:$0xff]
        %s852 = scalar_lea.vmem %s848, 32 [#allocation2]
        %v853 = vld [vmem:[%s852] ss:$2 sm:$0xf]
        %v854 = vpack.c.bf16 %v851, %v849
        %v855 = vpack.c.bf16 %v853, %v853
        %v860 = vunpack.c.l.b16 %v436
        %v861 = vunpack.c.l.b16 %v437
        %v862 = vunpack.c.l.b16 %v438
        %v863 = vunpack.c.l.b16 %v439
        %v864 = vpack.c.b16 %v861, %v860
        %v865 = vpack.c.b16 %v863, %v862
        %v869 = vsel %vm492, %v854, 0
        %v872 = vsel %vm492, %v855, 0
        %874 = vmatprep.subr.bf16.mxu0 0
        %875 = vmatpush1.bf16.msra.mxu0 %v864
        %876 = vmatprep.subr.bf16.mxu0 0
        %877 = vmatpush1.bf16.msra.mxu0 %v865
        %878 = vmatprep.subr.bf16.mxu0 0
        %879 = vmatpush1.bf16.msra.mxu0 0
        %880 = vmatprep.subr.bf16.mxu0 0
        %881 = vmatpush1.bf16.msra.mxu0 0
        %882 = vmatprep.subr.bf16.mxu0 0
        %883 = vmatpush1.bf16.msra.mxu0 0
        %884 = vmatprep.subr.bf16.mxu0 0
        %885 = vmatpush1.bf16.msra.mxu0 0
        %886 = vmatprep.subr.bf16.mxu0 0
        %887 = vmatpush1.bf16.msra.mxu0 0
        %888 = vmatprep.subr.bf16.mxu0 0
        %889 = vmatpush1.bf16.msra.mxu0 0
        %890 = vmatprep.subr.bf16.mxu0 0
        %891 = vmatpush1.bf16.msra.mxu0 0
        %892 = vmatprep.subr.bf16.mxu0 0
        %893 = vmatpush1.bf16.msra.mxu0 0
        %894 = vmatprep.subr.bf16.mxu0 0
        %895 = vmatpush1.bf16.msra.mxu0 0
        %896 = vmatprep.subr.bf16.mxu0 0
        %897 = vmatpush1.bf16.msra.mxu0 0
        %898 = vmatprep.subr.bf16.mxu0 0
        %899 = vmatpush1.bf16.msra.mxu0 0
        %900 = vmatprep.subr.bf16.mxu0 0
        %901 = vmatpush1.bf16.msra.mxu0 0
        %902 = vmatprep.subr.bf16.mxu0 0
        %903 = vmatpush1.bf16.msra.mxu0 0
        %904 = vmatprep.subr.bf16.mxu0 0
        %905 = vmatpush1.bf16.msra.mxu0 0
        %906 = vmatprep.mubr.bf16.mxu0 0
        %907 = vmatmul.mubr.bf16.gmra.mrb[0].mxu0 %v869
        %v908 = vpop.f32.mrb[0].mxu0
        %v909 = vadd.f32 0.0, %v908
        %v910 = vpop.f32.mrb[0].mxu0
        %v911 = vpop.f32.mrb[0].mxu0
        %v912 = vadd.f32 0.0, %v911
        %v913 = vpop.f32.mrb[0].mxu0
        %914 = vmatprep.mubr.bf16.mxu0 0
        %915 = vmatmul.mubr.bf16.gmra.mrb[0].mxu0 %v872
        %v916 = vpop.f32.mrb[0].mxu0
        %v917 = vadd.f32 0.0, %v916
        %v918 = vpop.f32.mrb[0].mxu0
        %v919 = vpop.f32.mrb[0].mxu0
        %v920 = vpop.f32.mrb[0].mxu0
        %921 = vdwg.mxu0
        %v922 = vadd.f32 %v844, %v909
        %v923 = vadd.f32 %v845, %v912
        %v924 = vadd.f32 %v846, %v917
        %s925 = sadd.s32 %s462, 82
        %s926 = scalar_lea.vmem [#allocation2], %s925
        %v927 = vld [vmem:[%s926] ss:$2 sm:$0xff]
        %s928 = scalar_lea.vmem %s926, 16 [#allocation2]
        %v929 = vld [vmem:[%s928] ss:$2 sm:$0xff]
        %s930 = scalar_lea.vmem %s926, 32 [#allocation2]
        %v931 = vld [vmem:[%s930] ss:$2 sm:$0xf]
        %v932 = vpack.c.bf16 %v929, %v927
        %v933 = vpack.c.bf16 %v931, %v931
        %v938 = vunpack.c.l.b16 %v441
        %v939 = vunpack.c.l.b16 %v442
        %v940 = vunpack.c.l.b16 %v443
        %v941 = vunpack.c.l.b16 %v444
        %v942 = vpack.c.b16 %v939, %v938
        %v943 = vpack.c.b16 %v941, %v940
        %v947 = vsel %vm492, %v932, 0
        %v950 = vsel %vm492, %v933, 0
        %952 = vmatprep.subr.bf16.mxu0 0
        %953 = vmatpush1.bf16.msra.mxu0 %v942
        %954 = vmatprep.subr.bf16.mxu0 0
        %955 = vmatpush1.bf16.msra.mxu0 %v943
        %956 = vmatprep.subr.bf16.mxu0 0
        %957 = vmatpush1.bf16.msra.mxu0 0
        %958 = vmatprep.subr.bf16.mxu0 0
        %959 = vmatpush1.bf16.msra.mxu0 0
        %960 = vmatprep.subr.bf16.mxu0 0
        %961 = vmatpush1.bf16.msra.mxu0 0
        %962 = vmatprep.subr.bf16.mxu0 0
        %963 = vmatpush1.bf16.msra.mxu0 0
        %964 = vmatprep.subr.bf16.mxu0 0
        %965 = vmatpush1.bf16.msra.mxu0 0
        %966 = vmatprep.subr.bf16.mxu0 0
        %967 = vmatpush1.bf16.msra.mxu0 0
        %968 = vmatprep.subr.bf16.mxu0 0
        %969 = vmatpush1.bf16.msra.mxu0 0
        %970 = vmatprep.subr.bf16.mxu0 0
        %971 = vmatpush1.bf16.msra.mxu0 0
        %972 = vmatprep.subr.bf16.mxu0 0
        %973 = vmatpush1.bf16.msra.mxu0 0
        %974 = vmatprep.subr.bf16.mxu0 0
        %975 = vmatpush1.bf16.msra.mxu0 0
        %976 = vmatprep.subr.bf16.mxu0 0
        %977 = vmatpush1.bf16.msra.mxu0 0
        %978 = vmatprep.subr.bf16.mxu0 0
        %979 = vmatpush1.bf16.msra.mxu0 0
        %980 = vmatprep.subr.bf16.mxu0 0
        %981 = vmatpush1.bf16.msra.mxu0 0
        %982 = vmatprep.subr.bf16.mxu0 0
        %983 = vmatpush1.bf16.msra.mxu0 0
        %984 = vmatprep.mubr.bf16.mxu0 0
        %985 = vmatmul.mubr.bf16.gmra.mrb[0].mxu0 %v947
        %v986 = vpop.f32.mrb[0].mxu0
        %v987 = vadd.f32 0.0, %v986
        %v988 = vpop.f32.mrb[0].mxu0
        %v989 = vpop.f32.mrb[0].mxu0
        %v990 = vadd.f32 0.0, %v989
        %v991 = vpop.f32.mrb[0].mxu0
        %992 = vmatprep.mubr.bf16.mxu0 0
        %993 = vmatmul.mubr.bf16.gmra.mrb[0].mxu0 %v950
        %v994 = vpop.f32.mrb[0].mxu0
        %v995 = vadd.f32 0.0, %v994
        %v996 = vpop.f32.mrb[0].mxu0
        %v997 = vpop.f32.mrb[0].mxu0
        %v998 = vpop.f32.mrb[0].mxu0
        %999 = vdwg.mxu0
        %v1000 = vadd.f32 %v922, %v987
        %v1001 = vadd.f32 %v923, %v990
        %v1002 = vadd.f32 %v924, %v995
        %s1003 = sadd.s32 %s462, 83
        %s1004 = scalar_lea.vmem [#allocation2], %s1003
        %v1005 = vld [vmem:[%s1004] ss:$2 sm:$0xff]
        %s1006 = scalar_lea.vmem %s1004, 16 [#allocation2]
        %v1007 = vld [vmem:[%s1006] ss:$2 sm:$0xff]
        %s1008 = scalar_lea.vmem %s1004, 32 [#allocation2]
        %v1009 = vld [vmem:[%s1008] ss:$2 sm:$0xf]
        %v1010 = vpack.c.bf16 %v1007, %v1005
        %v1011 = vpack.c.bf16 %v1009, %v1009
        %v1016 = vunpack.c.l.b16 %v446
        %v1017 = vunpack.c.l.b16 %v447
        %v1018 = vunpack.c.l.b16 %v448
        %v1019 = vunpack.c.l.b16 %v449
        %v1020 = vpack.c.b16 %v1017, %v1016
        %v1021 = vpack.c.b16 %v1019, %v1018
        %v1025 = vsel %vm492, %v1010, 0
        %v1028 = vsel %vm492, %v1011, 0
        %1030 = vmatprep.subr.bf16.mxu0 0
        %1031 = vmatpush1.bf16.msra.mxu0 %v1020
        %1032 = vmatprep.subr.bf16.mxu0 0
        %1033 = vmatpush1.bf16.msra.mxu0 %v1021
        %1034 = vmatprep.subr.bf16.mxu0 0
        %1035 = vmatpush1.bf16.msra.mxu0 0
        %1036 = vmatprep.subr.bf16.mxu0 0
        %1037 = vmatpush1.bf16.msra.mxu0 0
        %1038 = vmatprep.subr.bf16.mxu0 0
        %1039 = vmatpush1.bf16.msra.mxu0 0
        %1040 = vmatprep.subr.bf16.mxu0 0
        %1041 = vmatpush1.bf16.msra.mxu0 0
        %1042 = vmatprep.subr.bf16.mxu0 0
        %1043 = vmatpush1.bf16.msra.mxu0 0
        %1044 = vmatprep.subr.bf16.mxu0 0
        %1045 = vmatpush1.bf16.msra.mxu0 0
        %1046 = vmatprep.subr.bf16.mxu0 0
        %1047 = vmatpush1.bf16.msra.mxu0 0
        %1048 = vmatprep.subr.bf16.mxu0 0
        %1049 = vmatpush1.bf16.msra.mxu0 0
        %1050 = vmatprep.subr.bf16.mxu0 0
        %1051 = vmatpush1.bf16.msra.mxu0 0
        %1052 = vmatprep.subr.bf16.mxu0 0
        %1053 = vmatpush1.bf16.msra.mxu0 0
        %1054 = vmatprep.subr.bf16.mxu0 0
        %1055 = vmatpush1.bf16.msra.mxu0 0
        %1056 = vmatprep.subr.bf16.mxu0 0
        %1057 = vmatpush1.bf16.msra.mxu0 0
        %1058 = vmatprep.subr.bf16.mxu0 0
        %1059 = vmatpush1.bf16.msra.mxu0 0
        %1060 = vmatprep.subr.bf16.mxu0 0
        %1061 = vmatpush1.bf16.msra.mxu0 0
        %1062 = vmatprep.mubr.bf16.mxu0 0
        %1063 = vmatmul.mubr.bf16.gmra.mrb[0].mxu0 %v1025
        %v1064 = vpop.f32.mrb[0].mxu0
        %v1065 = vadd.f32 0.0, %v1064
        %v1066 = vpop.f32.mrb[0].mxu0
        %v1067 = vpop.f32.mrb[0].mxu0
        %v1068 = vadd.f32 0.0, %v1067
        %v1069 = vpop.f32.mrb[0].mxu0
        %1070 = vmatprep.mubr.bf16.mxu0 0
        %1071 = vmatmul.mubr.bf16.gmra.mrb[0].mxu0 %v1028
        %v1072 = vpop.f32.mrb[0].mxu0
        %v1073 = vadd.f32 0.0, %v1072
        %v1074 = vpop.f32.mrb[0].mxu0
        %v1075 = vpop.f32.mrb[0].mxu0
        %v1076 = vpop.f32.mrb[0].mxu0
        %1077 = vdwg.mxu0
        %v1078 = vadd.f32 %v1000, %v1065
        %v1079 = vadd.f32 %v1001, %v1068
        %v1080 = vadd.f32 %v1002, %v1073
        %s1081 = sadd.s32 %s462, 84
        %s1082 = scalar_lea.vmem [#allocation2], %s1081
        %v1083 = vld [vmem:[%s1082] ss:$2 sm:$0xff]
        %s1084 = scalar_lea.vmem %s1082, 16 [#allocation2]
        %v1085 = vld [vmem:[%s1084] ss:$2 sm:$0xff]
        %s1086 = scalar_lea.vmem %s1082, 32 [#allocation2]
        %v1087 = vld [vmem:[%s1086] ss:$2 sm:$0xf]
        %v1088 = vpack.c.bf16 %v1085, %v1083
        %v1089 = vpack.c.bf16 %v1087, %v1087
        %v1094 = vunpack.c.l.b16 %v451
        %v1095 = vunpack.c.l.b16 %v452
        %v1096 = vunpack.c.l.b16 %v453
        %v1097 = vunpack.c.l.b16 %v454
        %v1098 = vpack.c.b16 %v1095, %v1094
        %v1099 = vpack.c.b16 %v1097, %v1096
        %v1103 = vsel %vm492, %v1088, 0
        %v1106 = vsel %vm492, %v1089, 0
        %1108 = vmatprep.subr.bf16.mxu0 0
        %1109 = vmatpush1.bf16.msra.mxu0 %v1098
        %1110 = vmatprep.subr.bf16.mxu0 0
        %1111 = vmatpush1.bf16.msra.mxu0 %v1099
        %1112 = vmatprep.subr.bf16.mxu0 0
        %1113 = vmatpush1.bf16.msra.mxu0 0
        %1114 = vmatprep.subr.bf16.mxu0 0
        %1115 = vmatpush1.bf16.msra.mxu0 0
        %1116 = vmatprep.subr.bf16.mxu0 0
        %1117 = vmatpush1.bf16.msra.mxu0 0
        %1118 = vmatprep.subr.bf16.mxu0 0
        %1119 = vmatpush1.bf16.msra.mxu0 0
        %1120 = vmatprep.subr.bf16.mxu0 0
        %1121 = vmatpush1.bf16.msra.mxu0 0
        %1122 = vmatprep.subr.bf16.mxu0 0
        %1123 = vmatpush1.bf16.msra.mxu0 0
        %1124 = vmatprep.subr.bf16.mxu0 0
        %1125 = vmatpush1.bf16.msra.mxu0 0
        %1126 = vmatprep.subr.bf16.mxu0 0
        %1127 = vmatpush1.bf16.msra.mxu0 0
        %1128 = vmatprep.subr.bf16.mxu0 0
        %1129 = vmatpush1.bf16.msra.mxu0 0
        %1130 = vmatprep.subr.bf16.mxu0 0
        %1131 = vmatpush1.bf16.msra.mxu0 0
        %1132 = vmatprep.subr.bf16.mxu0 0
        %1133 = vmatpush1.bf16.msra.mxu0 0
        %1134 = vmatprep.subr.bf16.mxu0 0
        %1135 = vmatpush1.bf16.msra.mxu0 0
        %1136 = vmatprep.subr.bf16.mxu0 0
        %1137 = vmatpush1.bf16.msra.mxu0 0
        %1138 = vmatprep.subr.bf16.mxu0 0
        %1139 = vmatpush1.bf16.msra.mxu0 0
        %1140 = vmatprep.mubr.bf16.mxu0 0
        %1141 = vmatmul.mubr.bf16.gmra.mrb[0].mxu0 %v1103
        %v1142 = vpop.f32.mrb[0].mxu0
        %v1143 = vadd.f32 0.0, %v1142
        %v1144 = vpop.f32.mrb[0].mxu0
        %v1145 = vpop.f32.mrb[0].mxu0
        %v1146 = vadd.f32 0.0, %v1145
        %v1147 = vpop.f32.mrb[0].mxu0
        %1148 = vmatprep.mubr.bf16.mxu0 0
        %1149 = vmatmul.mubr.bf16.gmra.mrb[0].mxu0 %v1106
        %v1150 = vpop.f32.mrb[0].mxu0
        %v1151 = vadd.f32 0.0, %v1150
        %v1152 = vpop.f32.mrb[0].mxu0
        %v1153 = vpop.f32.mrb[0].mxu0
        %v1154 = vpop.f32.mrb[0].mxu0
        %1155 = vdwg.mxu0
        %v1156 = vadd.f32 %v1078, %v1143
        %v1157 = vadd.f32 %v1079, %v1146
        %v1158 = vadd.f32 %v1080, %v1151
        %v1159 = vlaneseq
        %v1160 = vshrl.u32 %v1159, 7
        %v1161 = vsub.s32 0, %v1160
        %v1162 = vrot.slane %v455, %v1161
        %v1163 = vadd.f32 %v1156, %v1162
        %v1164 = vadd.f32 %v1157, %v1162
        %v1165 = vadd.f32 %v1158, %v1162
        %vm1166 = vcmp.gt.f32.partialorder %v1163, 0.0
        %vm1167 = vcmp.gt.f32.partialorder %v1164, 0.0
        %vm1168 = vcmp.gt.f32.partialorder %v1165, 0.0
        %v1169 = vmin.f32 %v1163, 0.0
        %v1170 = vmin.f32 %v1164, 0.0
        %v1171 = vmin.f32 %v1165, 0.0
        %v1172 = vmul.f32 %v1169, 1.442695
        %v1173 = vpow.pop %v1172
        %v1174 = vmul.f32 %v1170, 1.442695
        %v1175 = vpow.pop %v1174
        %v1176 = vmul.f32 %v1171, 1.442695
        %v1177 = vpow.pop %v1176
        %v1178 = vsub.f32 %v1173, 1.0
        %v1179 = vsub.f32 %v1175, 1.0
        %v1180 = vsub.f32 %v1177, 1.0
        %v1181 = vsel %vm1166, %v1163, %v1178
        %v1182 = vsel %vm1167, %v1164, %v1179
        %v1183 = vsel %vm1168, %v1165, %v1180
        %s1184 = smul.u32 %s457, 20
        %s1185 = scalar_lea.vmem [#allocation3], %s1184
        %1186 = vst.msk [vmem:[%s1185] sm:$0xff] %vm492, %v1181
        %1187 = vst.msk [vmem:[%s1185 + $0x8] sm:$0xff] %vm492, %v1182
        %vm1188 = vcmask 257024
        %1189 = vst.msk [vmem:[%s1185 + $0x10] sm:$0xf] %vm1188, %v1183
      $region56: #{cnn_forward.2} parent=43 // loop_footer
        %s461 = sadd.s32 1, %s457
      $region57: #{cnn_forward.2} parent=43 // loop_footer_branch
        %456 = sbr.rel target = $region53
      $region58: #{cnn_forward.2} parent=43 // loop_exit
        _
      %v1190 = vld [vmem:[%s3] sm:$0xf]
      %v1191 = vld [vmem:[%s3 + $0x4] sm:$0xf]
      %v1192 = vld [vmem:[%s3 + $0x8] sm:$0xf]
      %v1193 = vld [vmem:[%s3 + $0xc] sm:$0xf]
      %s1194 = scalar_lea.vmem %s3, 16
      %v1195 = vld [vmem:[%s1194] sm:$0xf]
      %v1196 = vld [vmem:[%s1194 + $0x4] sm:$0xf]
      %v1197 = vld [vmem:[%s1194 + $0x8] sm:$0xf]
      %v1198 = vld [vmem:[%s1194 + $0xc] sm:$0xf]
      %s1199 = scalar_lea.vmem %s3, 32
      %v1200 = vld [vmem:[%s1199] sm:$0xf]
      %v1201 = vld [vmem:[%s1199 + $0x4] sm:$0xf]
      %v1202 = vld [vmem:[%s1199 + $0x8] sm:$0xf]
      %v1203 = vld [vmem:[%s1199 + $0xc] sm:$0xf]
      %s1204 = scalar_lea.vmem %s3, 48
      %v1205 = vld [vmem:[%s1204] sm:$0xf]
      %v1206 = vld [vmem:[%s1204 + $0x4] sm:$0xf]
      %v1207 = vld [vmem:[%s1204 + $0x8] sm:$0xf]
      %v1208 = vld [vmem:[%s1204 + $0xc] sm:$0xf]
      %s1209 = scalar_lea.vmem %s3, 64
      %v1210 = vld [vmem:[%s1209] sm:$0xf]
      %v1211 = vld [vmem:[%s1209 + $0x4] sm:$0xf]
      %v1212 = vld [vmem:[%s1209 + $0x8] sm:$0xf]
      %v1213 = vld [vmem:[%s1209 + $0xc] sm:$0xf]
      %s1214 = scalar_lea.vmem %s3, 80
      %v1215 = vld [vmem:[%s1214] sm:$0xf]
      %v1216 = vld [vmem:[%s1214 + $0x4] sm:$0xf]
      %v1217 = vld [vmem:[%s1214 + $0x8] sm:$0xf]
      %v1218 = vld [vmem:[%s1214 + $0xc] sm:$0xf]
      %s1219 = scalar_lea.vmem %s3, 96
      %v1220 = vld [vmem:[%s1219] sm:$0xf]
      %v1221 = vld [vmem:[%s1219 + $0x4] sm:$0xf]
      %v1222 = vld [vmem:[%s1219 + $0x8] sm:$0xf]
      %v1223 = vld [vmem:[%s1219 + $0xc] sm:$0xf]
      %s1224 = scalar_lea.vmem %s3, 112
      %v1225 = vld [vmem:[%s1224] sm:$0xf]
      %v1226 = vld [vmem:[%s1224 + $0x4] sm:$0xf]
      %v1227 = vld [vmem:[%s1224 + $0x8] sm:$0xf]
      %v1228 = vld [vmem:[%s1224 + $0xc] sm:$0xf]
      %s1229 = scalar_lea.vmem %s3, 128
      %v1230 = vld [vmem:[%s1229] sm:$0xf]
      %v1231 = vld [vmem:[%s1229 + $0x4] sm:$0xf]
      %v1232 = vld [vmem:[%s1229 + $0x8] sm:$0xf]
      %v1233 = vld [vmem:[%s1229 + $0xc] sm:$0xf]
      %v1234 = vld [vmem:[%s5 + $0x2] sm:$0x1]
      loop: start=0, step=1, limit=9
      $region59: #{cnn_forward.2} parent=43 // loop_pre_header
        _
      $region60: #{cnn_forward.2} parent=43 // loop_header
        %s1236 = sphi 0, %s1240
        %p1237 = scmp.ge.s32.totalorder %s1236, 9
      $region61: #{cnn_forward.2} parent=43 // loop_header_branch
        %1239 = sbr.rel (%p1237) target = $region65
      $region62: #{cnn_forward.2} parent=43 // loop_body
        %s1241 = smul.u32 %s1236, 40
        %s1242 = scalar_lea.vmem [#allocation3], %s1241
        %v1243 = vld [vmem:[%s1242] ss:$2 sm:$0xff]
        %s1244 = scalar_lea.vmem %s1242, 16 [#allocation3]
        %v1245 = vld [vmem:[%s1244] ss:$2 sm:$0x1]
        %v1246 = vpack.c.bf16 %v1245, %v1243
        %s1247 = sadd.s32 %s1241, 1
        %s1248 = scalar_lea.vmem [#allocation3], %s1247
        %v1249 = vld [vmem:[%s1248] ss:$2 sm:$0xff]
        %s1250 = scalar_lea.vmem %s1248, 16 [#allocation3]
        %v1251 = vld [vmem:[%s1250] ss:$2 sm:$0x1]
        %v1252 = vpack.c.bf16 %v1251, %v1249
        %v1257 = vunpack.c.l.b16 %v1195
        %v1258 = vunpack.c.l.b16 %v1196
        %v1259 = vunpack.c.l.b16 %v1197
        %v1260 = vunpack.c.l.b16 %v1198
        %v1261 = vpack.c.b16 %v1258, %v1257
        %v1262 = vpack.c.b16 %v1260, %v1259
        %vm1265 = vcmask 261120
        %v1267 = vsel %vm1265, %v1252, 0
        %1269 = vmatprep.subr.bf16.mxu0 0
        %1270 = vmatpush1.bf16.msra.mxu0 %v1261
        %1271 = vmatprep.subr.bf16.mxu0 0
        %1272 = vmatpush1.bf16.msra.mxu0 %v1262
        %1273 = vmatprep.subr.bf16.mxu0 0
        %1274 = vmatpush1.bf16.msra.mxu0 0
        %1275 = vmatprep.subr.bf16.mxu0 0
        %1276 = vmatpush1.bf16.msra.mxu0 0
        %1277 = vmatprep.subr.bf16.mxu0 0
        %1278 = vmatpush1.bf16.msra.mxu0 0
        %1279 = vmatprep.subr.bf16.mxu0 0
        %1280 = vmatpush1.bf16.msra.mxu0 0
        %1281 = vmatprep.subr.bf16.mxu0 0
        %1282 = vmatpush1.bf16.msra.mxu0 0
        %1283 = vmatprep.subr.bf16.mxu0 0
        %1284 = vmatpush1.bf16.msra.mxu0 0
        %1285 = vmatprep.subr.bf16.mxu0 0
        %1286 = vmatpush1.bf16.msra.mxu0 0
        %1287 = vmatprep.subr.bf16.mxu0 0
        %1288 = vmatpush1.bf16.msra.mxu0 0
        %1289 = vmatprep.subr.bf16.mxu0 0
        %1290 = vmatpush1.bf16.msra.mxu0 0
        %1291 = vmatprep.subr.bf16.mxu0 0
        %1292 = vmatpush1.bf16.msra.mxu0 0
        %1293 = vmatprep.subr.bf16.mxu0 0
        %1294 = vmatpush1.bf16.msra.mxu0 0
        %1295 = vmatprep.subr.bf16.mxu0 0
        %1296 = vmatpush1.bf16.msra.mxu0 0
        %1297 = vmatprep.subr.bf16.mxu0 0
        %1298 = vmatpush1.bf16.msra.mxu0 0
        %1299 = vmatprep.subr.bf16.mxu0 0
        %1300 = vmatpush1.bf16.msra.mxu0 0
        %1301 = vmatprep.mubr.bf16.mxu0 0
        %1302 = vmatmul.mubr.bf16.gmra.mrb[0].mxu0 %v1267
        %v1303 = vpop.f32.mrb[0].mxu0
        %v1304 = vadd.f32 0.0, %v1303
        %v1305 = vpop.f32.mrb[0].mxu0
        %v1306 = vpop.f32.mrb[0].mxu0
        %v1307 = vadd.f32 0.0, %v1306
        %v1308 = vpop.f32.mrb[0].mxu0
        %1309 = vdwg.mxu0
        %v1314 = vunpack.c.l.b16 %v1190
        %v1315 = vunpack.c.l.b16 %v1191
        %v1316 = vunpack.c.l.b16 %v1192
        %v1317 = vunpack.c.l.b16 %v1193
        %v1318 = vpack.c.b16 %v1315, %v1314
        %v1319 = vpack.c.b16 %v1317, %v1316
        %v1323 = vsel %vm1265, %v1246, 0
        %1325 = vmatprep.subr.bf16.mxu0 0
        %1326 = vmatpush1.bf16.msra.mxu0 %v1318
        %1327 = vmatprep.subr.bf16.mxu0 0
        %1328 = vmatpush1.bf16.msra.mxu0 %v1319
        %1329 = vmatprep.subr.bf16.mxu0 0
        %1330 = vmatpush1.bf16.msra.mxu0 0
        %1331 = vmatprep.subr.bf16.mxu0 0
        %1332 = vmatpush1.bf16.msra.mxu0 0
        %1333 = vmatprep.subr.bf16.mxu0 0
        %1334 = vmatpush1.bf16.msra.mxu0 0
        %1335 = vmatprep.subr.bf16.mxu0 0
        %1336 = vmatpush1.bf16.msra.mxu0 0
        %1337 = vmatprep.subr.bf16.mxu0 0
        %1338 = vmatpush1.bf16.msra.mxu0 0
        %1339 = vmatprep.subr.bf16.mxu0 0
        %1340 = vmatpush1.bf16.msra.mxu0 0
        %1341 = vmatprep.subr.bf16.mxu0 0
        %1342 = vmatpush1.bf16.msra.mxu0 0
        %1343 = vmatprep.subr.bf16.mxu0 0
        %1344 = vmatpush1.bf16.msra.mxu0 0
        %1345 = vmatprep.subr.bf16.mxu0 0
        %1346 = vmatpush1.bf16.msra.mxu0 0
        %1347 = vmatprep.subr.bf16.mxu0 0
        %1348 = vmatpush1.bf16.msra.mxu0 0
        %1349 = vmatprep.subr.bf16.mxu0 0
        %1350 = vmatpush1.bf16.msra.mxu0 0
        %1351 = vmatprep.subr.bf16.mxu0 0
        %1352 = vmatpush1.bf16.msra.mxu0 0
        %1353 = vmatprep.subr.bf16.mxu0 0
        %1354 = vmatpush1.bf16.msra.mxu0 0
        %1355 = vmatprep.subr.bf16.mxu0 0
        %1356 = vmatpush1.bf16.msra.mxu0 0
        %1357 = vmatprep.mubr.bf16.mxu0 0
        %1358 = vmatmul.mubr.bf16.gmra.mrb[0].mxu0 %v1323
        %v1359 = vpop.f32.mrb[0].mxu0
        %v1360 = vadd.f32 %v1304, %v1359
        %v1361 = vpop.f32.mrb[0].mxu0
        %v1362 = vpop.f32.mrb[0].mxu0
        %v1363 = vadd.f32 %v1307, %v1362
        %v1364 = vpop.f32.mrb[0].mxu0
        %1365 = vdwg.mxu0
        %s1366 = sadd.s32 %s1241, 2
        %s1367 = scalar_lea.vmem [#allocation3], %s1366
        %v1368 = vld [vmem:[%s1367] ss:$2 sm:$0xff]
        %s1369 = scalar_lea.vmem %s1367, 16 [#allocation3]
        %v1370 = vld [vmem:[%s1369] ss:$2 sm:$0x1]
        %v1371 = vpack.c.bf16 %v1370, %v1368
        %v1376 = vunpack.c.l.b16 %v1200
        %v1377 = vunpack.c.l.b16 %v1201
        %v1378 = vunpack.c.l.b16 %v1202
        %v1379 = vunpack.c.l.b16 %v1203
        %v1380 = vpack.c.b16 %v1377, %v1376
        %v1381 = vpack.c.b16 %v1379, %v1378
        %v1385 = vsel %vm1265, %v1371, 0
        %1387 = vmatprep.subr.bf16.mxu0 0
        %1388 = vmatpush1.bf16.msra.mxu0 %v1380
        %1389 = vmatprep.subr.bf16.mxu0 0
        %1390 = vmatpush1.bf16.msra.mxu0 %v1381
        %1391 = vmatprep.subr.bf16.mxu0 0
        %1392 = vmatpush1.bf16.msra.mxu0 0
        %1393 = vmatprep.subr.bf16.mxu0 0
        %1394 = vmatpush1.bf16.msra.mxu0 0
        %1395 = vmatprep.subr.bf16.mxu0 0
        %1396 = vmatpush1.bf16.msra.mxu0 0
        %1397 = vmatprep.subr.bf16.mxu0 0
        %1398 = vmatpush1.bf16.msra.mxu0 0
        %1399 = vmatprep.subr.bf16.mxu0 0
        %1400 = vmatpush1.bf16.msra.mxu0 0
        %1401 = vmatprep.subr.bf16.mxu0 0
        %1402 = vmatpush1.bf16.msra.mxu0 0
        %1403 = vmatprep.subr.bf16.mxu0 0
        %1404 = vmatpush1.bf16.msra.mxu0 0
        %1405 = vmatprep.subr.bf16.mxu0 0
        %1406 = vmatpush1.bf16.msra.mxu0 0
        %1407 = vmatprep.subr.bf16.mxu0 0
        %1408 = vmatpush1.bf16.msra.mxu0 0
        %1409 = vmatprep.subr.bf16.mxu0 0
        %1410 = vmatpush1.bf16.msra.mxu0 0
        %1411 = vmatprep.subr.bf16.mxu0 0
        %1412 = vmatpush1.bf16.msra.mxu0 0
        %1413 = vmatprep.subr.bf16.mxu0 0
        %1414 = vmatpush1.bf16.msra.mxu0 0
        %1415 = vmatprep.subr.bf16.mxu0 0
        %1416 = vmatpush1.bf16.msra.mxu0 0
        %1417 = vmatprep.subr.bf16.mxu0 0
        %1418 = vmatpush1.bf16.msra.mxu0 0
        %1419 = vmatprep.mubr.bf16.mxu0 0
        %1420 = vmatmul.mubr.bf16.gmra.mrb[0].mxu0 %v1385
        %v1421 = vpop.f32.mrb[0].mxu0
        %v1422 = vadd.f32 0.0, %v1421
        %v1423 = vpop.f32.mrb[0].mxu0
        %v1424 = vpop.f32.mrb[0].mxu0
        %v1425 = vadd.f32 0.0, %v1424
        %v1426 = vpop.f32.mrb[0].mxu0
        %1427 = vdwg.mxu0
        %v1428 = vadd.f32 %v1360, %v1422
        %v1429 = vadd.f32 %v1363, %v1425
        %s1430 = sadd.s32 %s1241, 20
        %s1431 = scalar_lea.vmem [#allocation3], %s1430
        %v1432 = vld [vmem:[%s1431] ss:$2 sm:$0xff]
        %s1433 = scalar_lea.vmem %s1431, 16 [#allocation3]
        %v1434 = vld [vmem:[%s1433] ss:$2 sm:$0x1]
        %v1435 = vpack.c.bf16 %v1434, %v1432
        %v1440 = vunpack.c.l.b16 %v1205
        %v1441 = vunpack.c.l.b16 %v1206
        %v1442 = vunpack.c.l.b16 %v1207
        %v1443 = vunpack.c.l.b16 %v1208
        %v1444 = vpack.c.b16 %v1441, %v1440
        %v1445 = vpack.c.b16 %v1443, %v1442
        %v1449 = vsel %vm1265, %v1435, 0
        %1451 = vmatprep.subr.bf16.mxu0 0
        %1452 = vmatpush1.bf16.msra.mxu0 %v1444
        %1453 = vmatprep.subr.bf16.mxu0 0
        %1454 = vmatpush1.bf16.msra.mxu0 %v1445
        %1455 = vmatprep.subr.bf16.mxu0 0
        %1456 = vmatpush1.bf16.msra.mxu0 0
        %1457 = vmatprep.subr.bf16.mxu0 0
        %1458 = vmatpush1.bf16.msra.mxu0 0
        %1459 = vmatprep.subr.bf16.mxu0 0
        %1460 = vmatpush1.bf16.msra.mxu0 0
        %1461 = vmatprep.subr.bf16.mxu0 0
        %1462 = vmatpush1.bf16.msra.mxu0 0
        %1463 = vmatprep.subr.bf16.mxu0 0
        %1464 = vmatpush1.bf16.msra.mxu0 0
        %1465 = vmatprep.subr.bf16.mxu0 0
        %1466 = vmatpush1.bf16.msra.mxu0 0
        %1467 = vmatprep.subr.bf16.mxu0 0
        %1468 = vmatpush1.bf16.msra.mxu0 0
        %1469 = vmatprep.subr.bf16.mxu0 0
        %1470 = vmatpush1.bf16.msra.mxu0 0
        %1471 = vmatprep.subr.bf16.mxu0 0
        %1472 = vmatpush1.bf16.msra.mxu0 0
        %1473 = vmatprep.subr.bf16.mxu0 0
        %1474 = vmatpush1.bf16.msra.mxu0 0
        %1475 = vmatprep.subr.bf16.mxu0 0
        %1476 = vmatpush1.bf16.msra.mxu0 0
        %1477 = vmatprep.subr.bf16.mxu0 0
        %1478 = vmatpush1.bf16.msra.mxu0 0
        %1479 = vmatprep.subr.bf16.mxu0 0
        %1480 = vmatpush1.bf16.msra.mxu0 0
        %1481 = vmatprep.subr.bf16.mxu0 0
        %1482 = vmatpush1.bf16.msra.mxu0 0
        %1483 = vmatprep.mubr.bf16.mxu0 0
        %1484 = vmatmul.mubr.bf16.gmra.mrb[0].mxu0 %v1449
        %v1485 = vpop.f32.mrb[0].mxu0
        %v1486 = vadd.f32 0.0, %v1485
        %v1487 = vpop.f32.mrb[0].mxu0
        %v1488 = vpop.f32.mrb[0].mxu0
        %v1489 = vadd.f32 0.0, %v1488
        %v1490 = vpop.f32.mrb[0].mxu0
        %1491 = vdwg.mxu0
        %v1492 = vadd.f32 %v1428, %v1486
        %v1493 = vadd.f32 %v1429, %v1489
        %s1494 = sadd.s32 %s1241, 21
        %s1495 = scalar_lea.vmem [#allocation3], %s1494
        %v1496 = vld [vmem:[%s1495] ss:$2 sm:$0xff]
        %s1497 = scalar_lea.vmem %s1495, 16 [#allocation3]
        %v1498 = vld [vmem:[%s1497] ss:$2 sm:$0x1]
        %v1499 = vpack.c.bf16 %v1498, %v1496
        %v1504 = vunpack.c.l.b16 %v1210
        %v1505 = vunpack.c.l.b16 %v1211
        %v1506 = vunpack.c.l.b16 %v1212
        %v1507 = vunpack.c.l.b16 %v1213
        %v1508 = vpack.c.b16 %v1505, %v1504
        %v1509 = vpack.c.b16 %v1507, %v1506
        %v1513 = vsel %vm1265, %v1499, 0
        %1515 = vmatprep.subr.bf16.mxu0 0
        %1516 = vmatpush1.bf16.msra.mxu0 %v1508
        %1517 = vmatprep.subr.bf16.mxu0 0
        %1518 = vmatpush1.bf16.msra.mxu0 %v1509
        %1519 = vmatprep.subr.bf16.mxu0 0
        %1520 = vmatpush1.bf16.msra.mxu0 0
        %1521 = vmatprep.subr.bf16.mxu0 0
        %1522 = vmatpush1.bf16.msra.mxu0 0
        %1523 = vmatprep.subr.bf16.mxu0 0
        %1524 = vmatpush1.bf16.msra.mxu0 0
        %1525 = vmatprep.subr.bf16.mxu0 0
        %1526 = vmatpush1.bf16.msra.mxu0 0
        %1527 = vmatprep.subr.bf16.mxu0 0
        %1528 = vmatpush1.bf16.msra.mxu0 0
        %1529 = vmatprep.subr.bf16.mxu0 0
        %1530 = vmatpush1.bf16.msra.mxu0 0
        %1531 = vmatprep.subr.bf16.mxu0 0
        %1532 = vmatpush1.bf16.msra.mxu0 0
        %1533 = vmatprep.subr.bf16.mxu0 0
        %1534 = vmatpush1.bf16.msra.mxu0 0
        %1535 = vmatprep.subr.bf16.mxu0 0
        %1536 = vmatpush1.bf16.msra.mxu0 0
        %1537 = vmatprep.subr.bf16.mxu0 0
        %1538 = vmatpush1.bf16.msra.mxu0 0
        %1539 = vmatprep.subr.bf16.mxu0 0
        %1540 = vmatpush1.bf16.msra.mxu0 0
        %1541 = vmatprep.subr.bf16.mxu0 0
        %1542 = vmatpush1.bf16.msra.mxu0 0
        %1543 = vmatprep.subr.bf16.mxu0 0
        %1544 = vmatpush1.bf16.msra.mxu0 0
        %1545 = vmatprep.subr.bf16.mxu0 0
        %1546 = vmatpush1.bf16.msra.mxu0 0
        %1547 = vmatprep.mubr.bf16.mxu0 0
        %1548 = vmatmul.mubr.bf16.gmra.mrb[0].mxu0 %v1513
        %v1549 = vpop.f32.mrb[0].mxu0
        %v1550 = vadd.f32 0.0, %v1549
        %v1551 = vpop.f32.mrb[0].mxu0
        %v1552 = vpop.f32.mrb[0].mxu0
        %v1553 = vadd.f32 0.0, %v1552
        %v1554 = vpop.f32.mrb[0].mxu0
        %1555 = vdwg.mxu0
        %v1556 = vadd.f32 %v1492, %v1550
        %v1557 = vadd.f32 %v1493, %v1553
        %s1558 = sadd.s32 %s1241, 22
        %s1559 = scalar_lea.vmem [#allocation3], %s1558
        %v1560 = vld [vmem:[%s1559] ss:$2 sm:$0xff]
        %s1561 = scalar_lea.vmem %s1559, 16 [#allocation3]
        %v1562 = vld [vmem:[%s1561] ss:$2 sm:$0x1]
        %v1563 = vpack.c.bf16 %v1562, %v1560
        %v1568 = vunpack.c.l.b16 %v1215
        %v1569 = vunpack.c.l.b16 %v1216
        %v1570 = vunpack.c.l.b16 %v1217
        %v1571 = vunpack.c.l.b16 %v1218
        %v1572 = vpack.c.b16 %v1569, %v1568
        %v1573 = vpack.c.b16 %v1571, %v1570
        %v1577 = vsel %vm1265, %v1563, 0
        %1579 = vmatprep.subr.bf16.mxu0 0
        %1580 = vmatpush1.bf16.msra.mxu0 %v1572
        %1581 = vmatprep.subr.bf16.mxu0 0
        %1582 = vmatpush1.bf16.msra.mxu0 %v1573
        %1583 = vmatprep.subr.bf16.mxu0 0
        %1584 = vmatpush1.bf16.msra.mxu0 0
        %1585 = vmatprep.subr.bf16.mxu0 0
        %1586 = vmatpush1.bf16.msra.mxu0 0
        %1587 = vmatprep.subr.bf16.mxu0 0
        %1588 = vmatpush1.bf16.msra.mxu0 0
        %1589 = vmatprep.subr.bf16.mxu0 0
        %1590 = vmatpush1.bf16.msra.mxu0 0
        %1591 = vmatprep.subr.bf16.mxu0 0
        %1592 = vmatpush1.bf16.msra.mxu0 0
        %1593 = vmatprep.subr.bf16.mxu0 0
        %1594 = vmatpush1.bf16.msra.mxu0 0
        %1595 = vmatprep.subr.bf16.mxu0 0
        %1596 = vmatpush1.bf16.msra.mxu0 0
        %1597 = vmatprep.subr.bf16.mxu0 0
        %1598 = vmatpush1.bf16.msra.mxu0 0
        %1599 = vmatprep.subr.bf16.mxu0 0
        %1600 = vmatpush1.bf16.msra.mxu0 0
        %1601 = vmatprep.subr.bf16.mxu0 0
        %1602 = vmatpush1.bf16.msra.mxu0 0
        %1603 = vmatprep.subr.bf16.mxu0 0
        %1604 = vmatpush1.bf16.msra.mxu0 0
        %1605 = vmatprep.subr.bf16.mxu0 0
        %1606 = vmatpush1.bf16.msra.mxu0 0
        %1607 = vmatprep.subr.bf16.mxu0 0
        %1608 = vmatpush1.bf16.msra.mxu0 0
        %1609 = vmatprep.subr.bf16.mxu0 0
        %1610 = vmatpush1.bf16.msra.mxu0 0
        %1611 = vmatprep.mubr.bf16.mxu0 0
        %1612 = vmatmul.mubr.bf16.gmra.mrb[0].mxu0 %v1577
        %v1613 = vpop.f32.mrb[0].mxu0
        %v1614 = vadd.f32 0.0, %v1613
        %v1615 = vpop.f32.mrb[0].mxu0
        %v1616 = vpop.f32.mrb[0].mxu0
        %v1617 = vadd.f32 0.0, %v1616
        %v1618 = vpop.f32.mrb[0].mxu0
        %1619 = vdwg.mxu0
        %v1620 = vadd.f32 %v1556, %v1614
        %v1621 = vadd.f32 %v1557, %v1617
        %s1622 = sadd.s32 %s1241, 40
        %s1623 = scalar_lea.vmem [#allocation3], %s1622
        %v1624 = vld [vmem:[%s1623] ss:$2 sm:$0xff]
        %s1625 = scalar_lea.vmem %s1623, 16 [#allocation3]
        %v1626 = vld [vmem:[%s1625] ss:$2 sm:$0x1]
        %v1627 = vpack.c.bf16 %v1626, %v1624
        %v1632 = vunpack.c.l.b16 %v1220
        %v1633 = vunpack.c.l.b16 %v1221
        %v1634 = vunpack.c.l.b16 %v1222
        %v1635 = vunpack.c.l.b16 %v1223
        %v1636 = vpack.c.b16 %v1633, %v1632
        %v1637 = vpack.c.b16 %v1635, %v1634
        %v1641 = vsel %vm1265, %v1627, 0
        %1643 = vmatprep.subr.bf16.mxu0 0
        %1644 = vmatpush1.bf16.msra.mxu0 %v1636
        %1645 = vmatprep.subr.bf16.mxu0 0
        %1646 = vmatpush1.bf16.msra.mxu0 %v1637
        %1647 = vmatprep.subr.bf16.mxu0 0
        %1648 = vmatpush1.bf16.msra.mxu0 0
        %1649 = vmatprep.subr.bf16.mxu0 0
        %1650 = vmatpush1.bf16.msra.mxu0 0
        %1651 = vmatprep.subr.bf16.mxu0 0
        %1652 = vmatpush1.bf16.msra.mxu0 0
        %1653 = vmatprep.subr.bf16.mxu0 0
        %1654 = vmatpush1.bf16.msra.mxu0 0
        %1655 = vmatprep.subr.bf16.mxu0 0
        %1656 = vmatpush1.bf16.msra.mxu0 0
        %1657 = vmatprep.subr.bf16.mxu0 0
        %1658 = vmatpush1.bf16.msra.mxu0 0
        %1659 = vmatprep.subr.bf16.mxu0 0
        %1660 = vmatpush1.bf16.msra.mxu0 0
        %1661 = vmatprep.subr.bf16.mxu0 0
        %1662 = vmatpush1.bf16.msra.mxu0 0
        %1663 = vmatprep.subr.bf16.mxu0 0
        %1664 = vmatpush1.bf16.msra.mxu0 0
        %1665 = vmatprep.subr.bf16.mxu0 0
        %1666 = vmatpush1.bf16.msra.mxu0 0
        %1667 = vmatprep.subr.bf16.mxu0 0
        %1668 = vmatpush1.bf16.msra.mxu0 0
        %1669 = vmatprep.subr.bf16.mxu0 0
        %1670 = vmatpush1.bf16.msra.mxu0 0
        %1671 = vmatprep.subr.bf16.mxu0 0
        %1672 = vmatpush1.bf16.msra.mxu0 0
        %1673 = vmatprep.subr.bf16.mxu0 0
        %1674 = vmatpush1.bf16.msra.mxu0 0
        %1675 = vmatprep.mubr.bf16.mxu0 0
        %1676 = vmatmul.mubr.bf16.gmra.mrb[0].mxu0 %v1641
        %v1677 = vpop.f32.mrb[0].mxu0
        %v1678 = vadd.f32 0.0, %v1677
        %v1679 = vpop.f32.mrb[0].mxu0
        %v1680 = vpop.f32.mrb[0].mxu0
        %v1681 = vadd.f32 0.0, %v1680
        %v1682 = vpop.f32.mrb[0].mxu0
        %1683 = vdwg.mxu0
        %v1684 = vadd.f32 %v1620, %v1678
        %v1685 = vadd.f32 %v1621, %v1681
        %s1686 = sadd.s32 %s1241, 41
        %s1687 = scalar_lea.vmem [#allocation3], %s1686
        %v1688 = vld [vmem:[%s1687] ss:$2 sm:$0xff]
        %s1689 = scalar_lea.vmem %s1687, 16 [#allocation3]
        %v1690 = vld [vmem:[%s1689] ss:$2 sm:$0x1]
        %v1691 = vpack.c.bf16 %v1690, %v1688
        %v1696 = vunpack.c.l.b16 %v1225
        %v1697 = vunpack.c.l.b16 %v1226
        %v1698 = vunpack.c.l.b16 %v1227
        %v1699 = vunpack.c.l.b16 %v1228
        %v1700 = vpack.c.b16 %v1697, %v1696
        %v1701 = vpack.c.b16 %v1699, %v1698
        %v1705 = vsel %vm1265, %v1691, 0
        %1707 = vmatprep.subr.bf16.mxu0 0
        %1708 = vmatpush1.bf16.msra.mxu0 %v1700
        %1709 = vmatprep.subr.bf16.mxu0 0
        %1710 = vmatpush1.bf16.msra.mxu0 %v1701
        %1711 = vmatprep.subr.bf16.mxu0 0
        %1712 = vmatpush1.bf16.msra.mxu0 0
        %1713 = vmatprep.subr.bf16.mxu0 0
        %1714 = vmatpush1.bf16.msra.mxu0 0
        %1715 = vmatprep.subr.bf16.mxu0 0
        %1716 = vmatpush1.bf16.msra.mxu0 0
        %1717 = vmatprep.subr.bf16.mxu0 0
        %1718 = vmatpush1.bf16.msra.mxu0 0
        %1719 = vmatprep.subr.bf16.mxu0 0
        %1720 = vmatpush1.bf16.msra.mxu0 0
        %1721 = vmatprep.subr.bf16.mxu0 0
        %1722 = vmatpush1.bf16.msra.mxu0 0
        %1723 = vmatprep.subr.bf16.mxu0 0
        %1724 = vmatpush1.bf16.msra.mxu0 0
        %1725 = vmatprep.subr.bf16.mxu0 0
        %1726 = vmatpush1.bf16.msra.mxu0 0
        %1727 = vmatprep.subr.bf16.mxu0 0
        %1728 = vmatpush1.bf16.msra.mxu0 0
        %1729 = vmatprep.subr.bf16.mxu0 0
        %1730 = vmatpush1.bf16.msra.mxu0 0
        %1731 = vmatprep.subr.bf16.mxu0 0
        %1732 = vmatpush1.bf16.msra.mxu0 0
        %1733 = vmatprep.subr.bf16.mxu0 0
        %1734 = vmatpush1.bf16.msra.mxu0 0
        %1735 = vmatprep.subr.bf16.mxu0 0
        %1736 = vmatpush1.bf16.msra.mxu0 0
        %1737 = vmatprep.subr.bf16.mxu0 0
        %1738 = vmatpush1.bf16.msra.mxu0 0
        %1739 = vmatprep.mubr.bf16.mxu0 0
        %1740 = vmatmul.mubr.bf16.gmra.mrb[0].mxu0 %v1705
        %v1741 = vpop.f32.mrb[0].mxu0
        %v1742 = vadd.f32 0.0, %v1741
        %v1743 = vpop.f32.mrb[0].mxu0
        %v1744 = vpop.f32.mrb[0].mxu0
        %v1745 = vadd.f32 0.0, %v1744
        %v1746 = vpop.f32.mrb[0].mxu0
        %1747 = vdwg.mxu0
        %v1748 = vadd.f32 %v1684, %v1742
        %v1749 = vadd.f32 %v1685, %v1745
        %s1750 = sadd.s32 %s1241, 42
        %s1751 = scalar_lea.vmem [#allocation3], %s1750
        %v1752 = vld [vmem:[%s1751] ss:$2 sm:$0xff]
        %s1753 = scalar_lea.vmem %s1751, 16 [#allocation3]
        %v1754 = vld [vmem:[%s1753] ss:$2 sm:$0x1]
        %v1755 = vpack.c.bf16 %v1754, %v1752
        %v1760 = vunpack.c.l.b16 %v1230
        %v1761 = vunpack.c.l.b16 %v1231
        %v1762 = vunpack.c.l.b16 %v1232
        %v1763 = vunpack.c.l.b16 %v1233
        %v1764 = vpack.c.b16 %v1761, %v1760
        %v1765 = vpack.c.b16 %v1763, %v1762
        %v1769 = vsel %vm1265, %v1755, 0
        %1771 = vmatprep.subr.bf16.mxu0 0
        %1772 = vmatpush1.bf16.msra.mxu0 %v1764
        %1773 = vmatprep.subr.bf16.mxu0 0
        %1774 = vmatpush1.bf16.msra.mxu0 %v1765
        %1775 = vmatprep.subr.bf16.mxu0 0
        %1776 = vmatpush1.bf16.msra.mxu0 0
        %1777 = vmatprep.subr.bf16.mxu0 0
        %1778 = vmatpush1.bf16.msra.mxu0 0
        %1779 = vmatprep.subr.bf16.mxu0 0
        %1780 = vmatpush1.bf16.msra.mxu0 0
        %1781 = vmatprep.subr.bf16.mxu0 0
        %1782 = vmatpush1.bf16.msra.mxu0 0
        %1783 = vmatprep.subr.bf16.mxu0 0
        %1784 = vmatpush1.bf16.msra.mxu0 0
        %1785 = vmatprep.subr.bf16.mxu0 0
        %1786 = vmatpush1.bf16.msra.mxu0 0
        %1787 = vmatprep.subr.bf16.mxu0 0
        %1788 = vmatpush1.bf16.msra.mxu0 0
        %1789 = vmatprep.subr.bf16.mxu0 0
        %1790 = vmatpush1.bf16.msra.mxu0 0
        %1791 = vmatprep.subr.bf16.mxu0 0
        %1792 = vmatpush1.bf16.msra.mxu0 0
        %1793 = vmatprep.subr.bf16.mxu0 0
        %1794 = vmatpush1.bf16.msra.mxu0 0
        %1795 = vmatprep.subr.bf16.mxu0 0
        %1796 = vmatpush1.bf16.msra.mxu0 0
        %1797 = vmatprep.subr.bf16.mxu0 0
        %1798 = vmatpush1.bf16.msra.mxu0 0
        %1799 = vmatprep.subr.bf16.mxu0 0
        %1800 = vmatpush1.bf16.msra.mxu0 0
        %1801 = vmatprep.subr.bf16.mxu0 0
        %1802 = vmatpush1.bf16.msra.mxu0 0
        %1803 = vmatprep.mubr.bf16.mxu0 0
        %1804 = vmatmul.mubr.bf16.gmra.mrb[0].mxu0 %v1769
        %v1805 = vpop.f32.mrb[0].mxu0
        %v1806 = vadd.f32 0.0, %v1805
        %v1807 = vpop.f32.mrb[0].mxu0
        %v1808 = vpop.f32.mrb[0].mxu0
        %v1809 = vadd.f32 0.0, %v1808
        %v1810 = vpop.f32.mrb[0].mxu0
        %1811 = vdwg.mxu0
        %v1812 = vadd.f32 %v1748, %v1806
        %v1813 = vadd.f32 %v1749, %v1809
        %v1814 = vlaneseq
        %v1815 = vshrl.u32 %v1814, 7
        %v1816 = vsub.s32 0, %v1815
        %v1817 = vrot.slane %v1234, %v1816
        %v1818 = vadd.f32 %v1812, %v1817
        %v1819 = vadd.f32 %v1813, %v1817
        %vm1820 = vcmp.gt.f32.partialorder %v1818, 0.0
        %vm1821 = vcmp.gt.f32.partialorder %v1819, 0.0
        %v1822 = vmin.f32 %v1818, 0.0
        %v1823 = vmin.f32 %v1819, 0.0
        %v1824 = vmul.f32 %v1822, 1.442695
        %v1825 = vpow.pop %v1824
        %v1826 = vmul.f32 %v1823, 1.442695
        %v1827 = vpow.pop %v1826
        %v1828 = vsub.f32 %v1825, 1.0
        %v1829 = vsub.f32 %v1827, 1.0
        %v1830 = vsel %vm1820, %v1818, %v1828
        %v1831 = vsel %vm1821, %v1819, %v1829
        %s1832 = smul.u32 %s1236, 9
        %s1833 = scalar_lea.vmem [#allocation4], %s1832
        %1834 = vst.msk [vmem:[%s1833] sm:$0xff] %vm1265, %v1830
        %vm1835 = vcmask 253952
        %1836 = vst.msk [vmem:[%s1833 + $0x8] sm:$0x1] %vm1835, %v1831
      $region63: #{cnn_forward.2} parent=43 // loop_footer
        %s1240 = sadd.s32 1, %s1236
      $region64: #{cnn_forward.2} parent=43 // loop_footer_branch
        %1235 = sbr.rel target = $region60
      $region65: #{cnn_forward.2} parent=43 // loop_exit
        _
      %v1837 = vld [vmem:[%s4] sm:$0xf]
      %v1838 = vld [vmem:[%s4 + $0x4] sm:$0xf]
      %v1839 = vld [vmem:[%s4 + $0x8] sm:$0xf]
      %v1840 = vld [vmem:[%s4 + $0xc] sm:$0xf]
      %s1841 = scalar_lea.vmem %s4, 16
      %v1842 = vld [vmem:[%s1841] sm:$0xf]
      %v1843 = vld [vmem:[%s1841 + $0x4] sm:$0xf]
      %v1844 = vld [vmem:[%s1841 + $0x8] sm:$0xf]
      %v1845 = vld [vmem:[%s1841 + $0xc] sm:$0xf]
      %s1846 = scalar_lea.vmem %s4, 32
      %v1847 = vld [vmem:[%s1846] sm:$0xf]
      %v1848 = vld [vmem:[%s1846 + $0x4] sm:$0xf]
      %v1849 = vld [vmem:[%s1846 + $0x8] sm:$0xf]
      %v1850 = vld [vmem:[%s1846 + $0xc] sm:$0xf]
      %s1851 = scalar_lea.vmem %s4, 48
      %v1852 = vld [vmem:[%s1851] sm:$0xf]
      %v1853 = vld [vmem:[%s1851 + $0x4] sm:$0xf]
      %v1854 = vld [vmem:[%s1851 + $0x8] sm:$0xf]
      %v1855 = vld [vmem:[%s1851 + $0xc] sm:$0xf]
      %s1856 = scalar_lea.vmem %s4, 64
      %v1857 = vld [vmem:[%s1856] sm:$0xf]
      %v1858 = vld [vmem:[%s1856 + $0x4] sm:$0xf]
      %v1859 = vld [vmem:[%s1856 + $0x8] sm:$0xf]
      %v1860 = vld [vmem:[%s1856 + $0xc] sm:$0xf]
      %s1861 = scalar_lea.vmem %s4, 80
      %v1862 = vld [vmem:[%s1861] sm:$0xf]
      %v1863 = vld [vmem:[%s1861 + $0x4] sm:$0xf]
      %v1864 = vld [vmem:[%s1861 + $0x8] sm:$0xf]
      %v1865 = vld [vmem:[%s1861 + $0xc] sm:$0xf]
      %s1866 = scalar_lea.vmem %s4, 96
      %v1867 = vld [vmem:[%s1866] sm:$0xf]
      %v1868 = vld [vmem:[%s1866 + $0x4] sm:$0xf]
      %v1869 = vld [vmem:[%s1866 + $0x8] sm:$0xf]
      %v1870 = vld [vmem:[%s1866 + $0xc] sm:$0xf]
      %s1871 = scalar_lea.vmem %s4, 112
      %v1872 = vld [vmem:[%s1871] sm:$0xf]
      %v1873 = vld [vmem:[%s1871 + $0x4] sm:$0xf]
      %v1874 = vld [vmem:[%s1871 + $0x8] sm:$0xf]
      %v1875 = vld [vmem:[%s1871 + $0xc] sm:$0xf]
      %s1876 = scalar_lea.vmem %s4, 128
      %v1877 = vld [vmem:[%s1876] sm:$0xf]
      %v1878 = vld [vmem:[%s1876 + $0x4] sm:$0xf]
      %v1879 = vld [vmem:[%s1876 + $0x8] sm:$0xf]
      %v1880 = vld [vmem:[%s1876 + $0xc] sm:$0xf]
      %v1881 = vld [vmem:[%s5 + $0x3] sm:$0x1]
      loop: start=0, step=1, limit=7
      $region66: #{cnn_forward.2} parent=43 // loop_pre_header
        _
      $region67: #{cnn_forward.2} parent=43 // loop_header
        %s1883 = sphi 0, %s1887
        %p1884 = scmp.ge.s32.totalorder %s1883, 7
      $region68: #{cnn_forward.2} parent=43 // loop_header_branch
        %1886 = sbr.rel (%p1884) target = $region72
      $region69: #{cnn_forward.2} parent=43 // loop_body
        %s1888 = smul.u32 %s1883, 9
        %s1889 = scalar_lea.vmem [#allocation4], %s1888
        %v1890 = vld [vmem:[%s1889] sm:$0x7f]
        %v1891 = vpack.c.bf16 %v1890, %v1890
        %s1892 = sadd.s32 %s1888, 1
        %s1893 = scalar_lea.vmem [#allocation4], %s1892
        %v1894 = vld [vmem:[%s1893] sm:$0x7f]
        %v1895 = vpack.c.bf16 %v1894, %v1894
        %v1900 = vunpack.c.l.b16 %v1842
        %v1901 = vunpack.c.l.b16 %v1843
        %v1902 = vunpack.c.l.b16 %v1844
        %v1903 = vunpack.c.l.b16 %v1845
        %v1904 = vpack.c.b16 %v1901, %v1900
        %v1905 = vpack.c.b16 %v1903, %v1902
        %vm1908 = vcmask 261120
        %v1910 = vsel %vm1908, %v1895, 0
        %1912 = vmatprep.subr.bf16.mxu0 0
        %1913 = vmatpush1.bf16.msra.mxu0 %v1904
        %1914 = vmatprep.subr.bf16.mxu0 0
        %1915 = vmatpush1.bf16.msra.mxu0 %v1905
        %1916 = vmatprep.subr.bf16.mxu0 0
        %1917 = vmatpush1.bf16.msra.mxu0 0
        %1918 = vmatprep.subr.bf16.mxu0 0
        %1919 = vmatpush1.bf16.msra.mxu0 0
        %1920 = vmatprep.subr.bf16.mxu0 0
        %1921 = vmatpush1.bf16.msra.mxu0 0
        %1922 = vmatprep.subr.bf16.mxu0 0
        %1923 = vmatpush1.bf16.msra.mxu0 0
        %1924 = vmatprep.subr.bf16.mxu0 0
        %1925 = vmatpush1.bf16.msra.mxu0 0
        %1926 = vmatprep.subr.bf16.mxu0 0
        %1927 = vmatpush1.bf16.msra.mxu0 0
        %1928 = vmatprep.subr.bf16.mxu0 0
        %1929 = vmatpush1.bf16.msra.mxu0 0
        %1930 = vmatprep.subr.bf16.mxu0 0
        %1931 = vmatpush1.bf16.msra.mxu0 0
        %1932 = vmatprep.subr.bf16.mxu0 0
        %1933 = vmatpush1.bf16.msra.mxu0 0
        %1934 = vmatprep.subr.bf16.mxu0 0
        %1935 = vmatpush1.bf16.msra.mxu0 0
        %1936 = vmatprep.subr.bf16.mxu0 0
        %1937 = vmatpush1.bf16.msra.mxu0 0
        %1938 = vmatprep.subr.bf16.mxu0 0
        %1939 = vmatpush1.bf16.msra.mxu0 0
        %1940 = vmatprep.subr.bf16.mxu0 0
        %1941 = vmatpush1.bf16.msra.mxu0 0
        %1942 = vmatprep.subr.bf16.mxu0 0
        %1943 = vmatpush1.bf16.msra.mxu0 0
        %1944 = vmatprep.mubr.bf16.mxu0 0
        %1945 = vmatmul.mubr.bf16.gmra.mrb[0].mxu0 %v1910
        %v1946 = vpop.f32.mrb[0].mxu0
        %v1947 = vadd.f32 0.0, %v1946
        %v1948 = vpop.f32.mrb[0].mxu0
        %v1949 = vpop.f32.mrb[0].mxu0
        %v1950 = vpop.f32.mrb[0].mxu0
        %1951 = vdwg.mxu0
        %v1956 = vunpack.c.l.b16 %v1837
        %v1957 = vunpack.c.l.b16 %v1838
        %v1958 = vunpack.c.l.b16 %v1839
        %v1959 = vunpack.c.l.b16 %v1840
        %v1960 = vpack.c.b16 %v1957, %v1956
        %v1961 = vpack.c.b16 %v1959, %v1958
        %v1965 = vsel %vm1908, %v1891, 0
        %1967 = vmatprep.subr.bf16.mxu0 0
        %1968 = vmatpush1.bf16.msra.mxu0 %v1960
        %1969 = vmatprep.subr.bf16.mxu0 0
        %1970 = vmatpush1.bf16.msra.mxu0 %v1961
        %1971 = vmatprep.subr.bf16.mxu0 0
        %1972 = vmatpush1.bf16.msra.mxu0 0
        %1973 = vmatprep.subr.bf16.mxu0 0
        %1974 = vmatpush1.bf16.msra.mxu0 0
        %1975 = vmatprep.subr.bf16.mxu0 0
        %1976 = vmatpush1.bf16.msra.mxu0 0
        %1977 = vmatprep.subr.bf16.mxu0 0
        %1978 = vmatpush1.bf16.msra.mxu0 0
        %1979 = vmatprep.subr.bf16.mxu0 0
        %1980 = vmatpush1.bf16.msra.mxu0 0
        %1981 = vmatprep.subr.bf16.mxu0 0
        %1982 = vmatpush1.bf16.msra.mxu0 0
        %1983 = vmatprep.subr.bf16.mxu0 0
        %1984 = vmatpush1.bf16.msra.mxu0 0
        %1985 = vmatprep.subr.bf16.mxu0 0
        %1986 = vmatpush1.bf16.msra.mxu0 0
        %1987 = vmatprep.subr.bf16.mxu0 0
        %1988 = vmatpush1.bf16.msra.mxu0 0
        %1989 = vmatprep.subr.bf16.mxu0 0
        %1990 = vmatpush1.bf16.msra.mxu0 0
        %1991 = vmatprep.subr.bf16.mxu0 0
        %1992 = vmatpush1.bf16.msra.mxu0 0
        %1993 = vmatprep.subr.bf16.mxu0 0
        %1994 = vmatpush1.bf16.msra.mxu0 0
        %1995 = vmatprep.subr.bf16.mxu0 0
        %1996 = vmatpush1.bf16.msra.mxu0 0
        %1997 = vmatprep.subr.bf16.mxu0 0
        %1998 = vmatpush1.bf16.msra.mxu0 0
        %1999 = vmatprep.mubr.bf16.mxu0 0
        %2000 = vmatmul.mubr.bf16.gmra.mrb[0].mxu0 %v1965
        %v2001 = vpop.f32.mrb[0].mxu0
        %v2002 = vadd.f32 %v1947, %v2001
        %v2003 = vpop.f32.mrb[0].mxu0
        %v2004 = vpop.f32.mrb[0].mxu0
        %v2005 = vpop.f32.mrb[0].mxu0
        %2006 = vdwg.mxu0
        %s2007 = sadd.s32 %s1888, 2
        %s2008 = scalar_lea.vmem [#allocation4], %s2007
        %v2009 = vld [vmem:[%s2008] sm:$0x7f]
        %v2010 = vpack.c.bf16 %v2009, %v2009
        %v2015 = vunpack.c.l.b16 %v1847
        %v2016 = vunpack.c.l.b16 %v1848
        %v2017 = vunpack.c.l.b16 %v1849
        %v2018 = vunpack.c.l.b16 %v1850
        %v2019 = vpack.c.b16 %v2016, %v2015
        %v2020 = vpack.c.b16 %v2018, %v2017
        %v2024 = vsel %vm1908, %v2010, 0
        %2026 = vmatprep.subr.bf16.mxu0 0
        %2027 = vmatpush1.bf16.msra.mxu0 %v2019
        %2028 = vmatprep.subr.bf16.mxu0 0
        %2029 = vmatpush1.bf16.msra.mxu0 %v2020
        %2030 = vmatprep.subr.bf16.mxu0 0
        %2031 = vmatpush1.bf16.msra.mxu0 0
        %2032 = vmatprep.subr.bf16.mxu0 0
        %2033 = vmatpush1.bf16.msra.mxu0 0
        %2034 = vmatprep.subr.bf16.mxu0 0
        %2035 = vmatpush1.bf16.msra.mxu0 0
        %2036 = vmatprep.subr.bf16.mxu0 0
        %2037 = vmatpush1.bf16.msra.mxu0 0
        %2038 = vmatprep.subr.bf16.mxu0 0
        %2039 = vmatpush1.bf16.msra.mxu0 0
        %2040 = vmatprep.subr.bf16.mxu0 0
        %2041 = vmatpush1.bf16.msra.mxu0 0
        %2042 = vmatprep.subr.bf16.mxu0 0
        %2043 = vmatpush1.bf16.msra.mxu0 0
        %2044 = vmatprep.subr.bf16.mxu0 0
        %2045 = vmatpush1.bf16.msra.mxu0 0
        %2046 = vmatprep.subr.bf16.mxu0 0
        %2047 = vmatpush1.bf16.msra.mxu0 0
        %2048 = vmatprep.subr.bf16.mxu0 0
        %2049 = vmatpush1.bf16.msra.mxu0 0
        %2050 = vmatprep.subr.bf16.mxu0 0
        %2051 = vmatpush1.bf16.msra.mxu0 0
        %2052 = vmatprep.subr.bf16.mxu0 0
        %2053 = vmatpush1.bf16.msra.mxu0 0
        %2054 = vmatprep.subr.bf16.mxu0 0
        %2055 = vmatpush1.bf16.msra.mxu0 0
        %2056 = vmatprep.subr.bf16.mxu0 0
        %2057 = vmatpush1.bf16.msra.mxu0 0
        %2058 = vmatprep.mubr.bf16.mxu0 0
        %2059 = vmatmul.mubr.bf16.gmra.mrb[0].mxu0 %v2024
        %v2060 = vpop.f32.mrb[0].mxu0
        %v2061 = vadd.f32 0.0, %v2060
        %v2062 = vpop.f32.mrb[0].mxu0
        %v2063 = vpop.f32.mrb[0].mxu0
        %v2064 = vpop.f32.mrb[0].mxu0
        %2065 = vdwg.mxu0
        %v2066 = vadd.f32 %v2002, %v2061
        %s2067 = sadd.s32 %s1888, 9
        %s2068 = scalar_lea.vmem [#allocation4], %s2067
        %v2069 = vld [vmem:[%s2068] sm:$0x7f]
        %v2070 = vpack.c.bf16 %v2069, %v2069
        %v2075 = vunpack.c.l.b16 %v1852
        %v2076 = vunpack.c.l.b16 %v1853
        %v2077 = vunpack.c.l.b16 %v1854
        %v2078 = vunpack.c.l.b16 %v1855
        %v2079 = vpack.c.b16 %v2076, %v2075
        %v2080 = vpack.c.b16 %v2078, %v2077
        %v2084 = vsel %vm1908, %v2070, 0
        %2086 = vmatprep.subr.bf16.mxu0 0
        %2087 = vmatpush1.bf16.msra.mxu0 %v2079
        %2088 = vmatprep.subr.bf16.mxu0 0
        %2089 = vmatpush1.bf16.msra.mxu0 %v2080
        %2090 = vmatprep.subr.bf16.mxu0 0
        %2091 = vmatpush1.bf16.msra.mxu0 0
        %2092 = vmatprep.subr.bf16.mxu0 0
        %2093 = vmatpush1.bf16.msra.mxu0 0
        %2094 = vmatprep.subr.bf16.mxu0 0
        %2095 = vmatpush1.bf16.msra.mxu0 0
        %2096 = vmatprep.subr.bf16.mxu0 0
        %2097 = vmatpush1.bf16.msra.mxu0 0
        %2098 = vmatprep.subr.bf16.mxu0 0
        %2099 = vmatpush1.bf16.msra.mxu0 0
        %2100 = vmatprep.subr.bf16.mxu0 0
        %2101 = vmatpush1.bf16.msra.mxu0 0
        %2102 = vmatprep.subr.bf16.mxu0 0
        %2103 = vmatpush1.bf16.msra.mxu0 0
        %2104 = vmatprep.subr.bf16.mxu0 0
        %2105 = vmatpush1.bf16.msra.mxu0 0
        %2106 = vmatprep.subr.bf16.mxu0 0
        %2107 = vmatpush1.bf16.msra.mxu0 0
        %2108 = vmatprep.subr.bf16.mxu0 0
        %2109 = vmatpush1.bf16.msra.mxu0 0
        %2110 = vmatprep.subr.bf16.mxu0 0
        %2111 = vmatpush1.bf16.msra.mxu0 0
        %2112 = vmatprep.subr.bf16.mxu0 0
        %2113 = vmatpush1.bf16.msra.mxu0 0
        %2114 = vmatprep.subr.bf16.mxu0 0
        %2115 = vmatpush1.bf16.msra.mxu0 0
        %2116 = vmatprep.subr.bf16.mxu0 0
        %2117 = vmatpush1.bf16.msra.mxu0 0
        %2118 = vmatprep.mubr.bf16.mxu0 0
        %2119 = vmatmul.mubr.bf16.gmra.mrb[0].mxu0 %v2084
        %v2120 = vpop.f32.mrb[0].mxu0
        %v2121 = vadd.f32 0.0, %v2120
        %v2122 = vpop.f32.mrb[0].mxu0
        %v2123 = vpop.f32.mrb[0].mxu0
        %v2124 = vpop.f32.mrb[0].mxu0
        %2125 = vdwg.mxu0
        %v2126 = vadd.f32 %v2066, %v2121
        %s2127 = sadd.s32 %s1888, 10
        %s2128 = scalar_lea.vmem [#allocation4], %s2127
        %v2129 = vld [vmem:[%s2128] sm:$0x7f]
        %v2130 = vpack.c.bf16 %v2129, %v2129
        %v2135 = vunpack.c.l.b16 %v1857
        %v2136 = vunpack.c.l.b16 %v1858
        %v2137 = vunpack.c.l.b16 %v1859
        %v2138 = vunpack.c.l.b16 %v1860
        %v2139 = vpack.c.b16 %v2136, %v2135
        %v2140 = vpack.c.b16 %v2138, %v2137
        %v2144 = vsel %vm1908, %v2130, 0
        %2146 = vmatprep.subr.bf16.mxu0 0
        %2147 = vmatpush1.bf16.msra.mxu0 %v2139
        %2148 = vmatprep.subr.bf16.mxu0 0
        %2149 = vmatpush1.bf16.msra.mxu0 %v2140
        %2150 = vmatprep.subr.bf16.mxu0 0
        %2151 = vmatpush1.bf16.msra.mxu0 0
        %2152 = vmatprep.subr.bf16.mxu0 0
        %2153 = vmatpush1.bf16.msra.mxu0 0
        %2154 = vmatprep.subr.bf16.mxu0 0
        %2155 = vmatpush1.bf16.msra.mxu0 0
        %2156 = vmatprep.subr.bf16.mxu0 0
        %2157 = vmatpush1.bf16.msra.mxu0 0
        %2158 = vmatprep.subr.bf16.mxu0 0
        %2159 = vmatpush1.bf16.msra.mxu0 0
        %2160 = vmatprep.subr.bf16.mxu0 0
        %2161 = vmatpush1.bf16.msra.mxu0 0
        %2162 = vmatprep.subr.bf16.mxu0 0
        %2163 = vmatpush1.bf16.msra.mxu0 0
        %2164 = vmatprep.subr.bf16.mxu0 0
        %2165 = vmatpush1.bf16.msra.mxu0 0
        %2166 = vmatprep.subr.bf16.mxu0 0
        %2167 = vmatpush1.bf16.msra.mxu0 0
        %2168 = vmatprep.subr.bf16.mxu0 0
        %2169 = vmatpush1.bf16.msra.mxu0 0
        %2170 = vmatprep.subr.bf16.mxu0 0
        %2171 = vmatpush1.bf16.msra.mxu0 0
        %2172 = vmatprep.subr.bf16.mxu0 0
        %2173 = vmatpush1.bf16.msra.mxu0 0
        %2174 = vmatprep.subr.bf16.mxu0 0
        %2175 = vmatpush1.bf16.msra.mxu0 0
        %2176 = vmatprep.subr.bf16.mxu0 0
        %2177 = vmatpush1.bf16.msra.mxu0 0
        %2178 = vmatprep.mubr.bf16.mxu0 0
        %2179 = vmatmul.mubr.bf16.gmra.mrb[0].mxu0 %v2144
        %v2180 = vpop.f32.mrb[0].mxu0
        %v2181 = vadd.f32 0.0, %v2180
        %v2182 = vpop.f32.mrb[0].mxu0
        %v2183 = vpop.f32.mrb[0].mxu0
        %v2184 = vpop.f32.mrb[0].mxu0
        %2185 = vdwg.mxu0
        %v2186 = vadd.f32 %v2126, %v2181
        %s2187 = sadd.s32 %s1888, 11
        %s2188 = scalar_lea.vmem [#allocation4], %s2187
        %v2189 = vld [vmem:[%s2188] sm:$0x7f]
        %v2190 = vpack.c.bf16 %v2189, %v2189
        %v2195 = vunpack.c.l.b16 %v1862
        %v2196 = vunpack.c.l.b16 %v1863
        %v2197 = vunpack.c.l.b16 %v1864
        %v2198 = vunpack.c.l.b16 %v1865
        %v2199 = vpack.c.b16 %v2196, %v2195
        %v2200 = vpack.c.b16 %v2198, %v2197
        %v2204 = vsel %vm1908, %v2190, 0
        %2206 = vmatprep.subr.bf16.mxu0 0
        %2207 = vmatpush1.bf16.msra.mxu0 %v2199
        %2208 = vmatprep.subr.bf16.mxu0 0
        %2209 = vmatpush1.bf16.msra.mxu0 %v2200
        %2210 = vmatprep.subr.bf16.mxu0 0
        %2211 = vmatpush1.bf16.msra.mxu0 0
        %2212 = vmatprep.subr.bf16.mxu0 0
        %2213 = vmatpush1.bf16.msra.mxu0 0
        %2214 = vmatprep.subr.bf16.mxu0 0
        %2215 = vmatpush1.bf16.msra.mxu0 0
        %2216 = vmatprep.subr.bf16.mxu0 0
        %2217 = vmatpush1.bf16.msra.mxu0 0
        %2218 = vmatprep.subr.bf16.mxu0 0
        %2219 = vmatpush1.bf16.msra.mxu0 0
        %2220 = vmatprep.subr.bf16.mxu0 0
        %2221 = vmatpush1.bf16.msra.mxu0 0
        %2222 = vmatprep.subr.bf16.mxu0 0
        %2223 = vmatpush1.bf16.msra.mxu0 0
        %2224 = vmatprep.subr.bf16.mxu0 0
        %2225 = vmatpush1.bf16.msra.mxu0 0
        %2226 = vmatprep.subr.bf16.mxu0 0
        %2227 = vmatpush1.bf16.msra.mxu0 0
        %2228 = vmatprep.subr.bf16.mxu0 0
        %2229 = vmatpush1.bf16.msra.mxu0 0
        %2230 = vmatprep.subr.bf16.mxu0 0
        %2231 = vmatpush1.bf16.msra.mxu0 0
        %2232 = vmatprep.subr.bf16.mxu0 0
        %2233 = vmatpush1.bf16.msra.mxu0 0
        %2234 = vmatprep.subr.bf16.mxu0 0
        %2235 = vmatpush1.bf16.msra.mxu0 0
        %2236 = vmatprep.subr.bf16.mxu0 0
        %2237 = vmatpush1.bf16.msra.mxu0 0
        %2238 = vmatprep.mubr.bf16.mxu0 0
        %2239 = vmatmul.mubr.bf16.gmra.mrb[0].mxu0 %v2204
        %v2240 = vpop.f32.mrb[0].mxu0
        %v2241 = vadd.f32 0.0, %v2240
        %v2242 = vpop.f32.mrb[0].mxu0
        %v2243 = vpop.f32.mrb[0].mxu0
        %v2244 = vpop.f32.mrb[0].mxu0
        %2245 = vdwg.mxu0
        %v2246 = vadd.f32 %v2186, %v2241
        %s2247 = sadd.s32 %s1888, 18
        %s2248 = scalar_lea.vmem [#allocation4], %s2247
        %v2249 = vld [vmem:[%s2248] sm:$0x7f]
        %v2250 = vpack.c.bf16 %v2249, %v2249
        %v2255 = vunpack.c.l.b16 %v1867
        %v2256 = vunpack.c.l.b16 %v1868
        %v2257 = vunpack.c.l.b16 %v1869
        %v2258 = vunpack.c.l.b16 %v1870
        %v2259 = vpack.c.b16 %v2256, %v2255
        %v2260 = vpack.c.b16 %v2258, %v2257
        %v2264 = vsel %vm1908, %v2250, 0
        %2266 = vmatprep.subr.bf16.mxu0 0
        %2267 = vmatpush1.bf16.msra.mxu0 %v2259
        %2268 = vmatprep.subr.bf16.mxu0 0
        %2269 = vmatpush1.bf16.msra.mxu0 %v2260
        %2270 = vmatprep.subr.bf16.mxu0 0
        %2271 = vmatpush1.bf16.msra.mxu0 0
        %2272 = vmatprep.subr.bf16.mxu0 0
        %2273 = vmatpush1.bf16.msra.mxu0 0
        %2274 = vmatprep.subr.bf16.mxu0 0
        %2275 = vmatpush1.bf16.msra.mxu0 0
        %2276 = vmatprep.subr.bf16.mxu0 0
        %2277 = vmatpush1.bf16.msra.mxu0 0
        %2278 = vmatprep.subr.bf16.mxu0 0
        %2279 = vmatpush1.bf16.msra.mxu0 0
        %2280 = vmatprep.subr.bf16.mxu0 0
        %2281 = vmatpush1.bf16.msra.mxu0 0
        %2282 = vmatprep.subr.bf16.mxu0 0
        %2283 = vmatpush1.bf16.msra.mxu0 0
        %2284 = vmatprep.subr.bf16.mxu0 0
        %2285 = vmatpush1.bf16.msra.mxu0 0
        %2286 = vmatprep.subr.bf16.mxu0 0
        %2287 = vmatpush1.bf16.msra.mxu0 0
        %2288 = vmatprep.subr.bf16.mxu0 0
        %2289 = vmatpush1.bf16.msra.mxu0 0
        %2290 = vmatprep.subr.bf16.mxu0 0
        %2291 = vmatpush1.bf16.msra.mxu0 0
        %2292 = vmatprep.subr.bf16.mxu0 0
        %2293 = vmatpush1.bf16.msra.mxu0 0
        %2294 = vmatprep.subr.bf16.mxu0 0
        %2295 = vmatpush1.bf16.msra.mxu0 0
        %2296 = vmatprep.subr.bf16.mxu0 0
        %2297 = vmatpush1.bf16.msra.mxu0 0
        %2298 = vmatprep.mubr.bf16.mxu0 0
        %2299 = vmatmul.mubr.bf16.gmra.mrb[0].mxu0 %v2264
        %v2300 = vpop.f32.mrb[0].mxu0
        %v2301 = vadd.f32 0.0, %v2300
        %v2302 = vpop.f32.mrb[0].mxu0
        %v2303 = vpop.f32.mrb[0].mxu0
        %v2304 = vpop.f32.mrb[0].mxu0
        %2305 = vdwg.mxu0
        %v2306 = vadd.f32 %v2246, %v2301
        %s2307 = sadd.s32 %s1888, 19
        %s2308 = scalar_lea.vmem [#allocation4], %s2307
        %v2309 = vld [vmem:[%s2308] sm:$0x7f]
        %v2310 = vpack.c.bf16 %v2309, %v2309
        %v2315 = vunpack.c.l.b16 %v1872
        %v2316 = vunpack.c.l.b16 %v1873
        %v2317 = vunpack.c.l.b16 %v1874
        %v2318 = vunpack.c.l.b16 %v1875
        %v2319 = vpack.c.b16 %v2316, %v2315
        %v2320 = vpack.c.b16 %v2318, %v2317
        %v2324 = vsel %vm1908, %v2310, 0
        %2326 = vmatprep.subr.bf16.mxu0 0
        %2327 = vmatpush1.bf16.msra.mxu0 %v2319
        %2328 = vmatprep.subr.bf16.mxu0 0
        %2329 = vmatpush1.bf16.msra.mxu0 %v2320
        %2330 = vmatprep.subr.bf16.mxu0 0
        %2331 = vmatpush1.bf16.msra.mxu0 0
        %2332 = vmatprep.subr.bf16.mxu0 0
        %2333 = vmatpush1.bf16.msra.mxu0 0
        %2334 = vmatprep.subr.bf16.mxu0 0
        %2335 = vmatpush1.bf16.msra.mxu0 0
        %2336 = vmatprep.subr.bf16.mxu0 0
        %2337 = vmatpush1.bf16.msra.mxu0 0
        %2338 = vmatprep.subr.bf16.mxu0 0
        %2339 = vmatpush1.bf16.msra.mxu0 0
        %2340 = vmatprep.subr.bf16.mxu0 0
        %2341 = vmatpush1.bf16.msra.mxu0 0
        %2342 = vmatprep.subr.bf16.mxu0 0
        %2343 = vmatpush1.bf16.msra.mxu0 0
        %2344 = vmatprep.subr.bf16.mxu0 0
        %2345 = vmatpush1.bf16.msra.mxu0 0
        %2346 = vmatprep.subr.bf16.mxu0 0
        %2347 = vmatpush1.bf16.msra.mxu0 0
        %2348 = vmatprep.subr.bf16.mxu0 0
        %2349 = vmatpush1.bf16.msra.mxu0 0
        %2350 = vmatprep.subr.bf16.mxu0 0
        %2351 = vmatpush1.bf16.msra.mxu0 0
        %2352 = vmatprep.subr.bf16.mxu0 0
        %2353 = vmatpush1.bf16.msra.mxu0 0
        %2354 = vmatprep.subr.bf16.mxu0 0
        %2355 = vmatpush1.bf16.msra.mxu0 0
        %2356 = vmatprep.subr.bf16.mxu0 0
        %2357 = vmatpush1.bf16.msra.mxu0 0
        %2358 = vmatprep.mubr.bf16.mxu0 0
        %2359 = vmatmul.mubr.bf16.gmra.mrb[0].mxu0 %v2324
        %v2360 = vpop.f32.mrb[0].mxu0
        %v2361 = vadd.f32 0.0, %v2360
        %v2362 = vpop.f32.mrb[0].mxu0
        %v2363 = vpop.f32.mrb[0].mxu0
        %v2364 = vpop.f32.mrb[0].mxu0
        %2365 = vdwg.mxu0
        %v2366 = vadd.f32 %v2306, %v2361
        %s2367 = sadd.s32 %s1888, 20
        %s2368 = scalar_lea.vmem [#allocation4], %s2367
        %v2369 = vld [vmem:[%s2368] sm:$0x7f]
        %v2370 = vpack.c.bf16 %v2369, %v2369
        %v2375 = vunpack.c.l.b16 %v1877
        %v2376 = vunpack.c.l.b16 %v1878
        %v2377 = vunpack.c.l.b16 %v1879
        %v2378 = vunpack.c.l.b16 %v1880
        %v2379 = vpack.c.b16 %v2376, %v2375
        %v2380 = vpack.c.b16 %v2378, %v2377
        %v2384 = vsel %vm1908, %v2370, 0
        %2386 = vmatprep.subr.bf16.mxu0 0
        %2387 = vmatpush1.bf16.msra.mxu0 %v2379
        %2388 = vmatprep.subr.bf16.mxu0 0
        %2389 = vmatpush1.bf16.msra.mxu0 %v2380
        %2390 = vmatprep.subr.bf16.mxu0 0
        %2391 = vmatpush1.bf16.msra.mxu0 0
        %2392 = vmatprep.subr.bf16.mxu0 0
        %2393 = vmatpush1.bf16.msra.mxu0 0
        %2394 = vmatprep.subr.bf16.mxu0 0
        %2395 = vmatpush1.bf16.msra.mxu0 0
        %2396 = vmatprep.subr.bf16.mxu0 0
        %2397 = vmatpush1.bf16.msra.mxu0 0
        %2398 = vmatprep.subr.bf16.mxu0 0
        %2399 = vmatpush1.bf16.msra.mxu0 0
        %2400 = vmatprep.subr.bf16.mxu0 0
        %2401 = vmatpush1.bf16.msra.mxu0 0
        %2402 = vmatprep.subr.bf16.mxu0 0
        %2403 = vmatpush1.bf16.msra.mxu0 0
        %2404 = vmatprep.subr.bf16.mxu0 0
        %2405 = vmatpush1.bf16.msra.mxu0 0
        %2406 = vmatprep.subr.bf16.mxu0 0
        %2407 = vmatpush1.bf16.msra.mxu0 0
        %2408 = vmatprep.subr.bf16.mxu0 0
        %2409 = vmatpush1.bf16.msra.mxu0 0
        %2410 = vmatprep.subr.bf16.mxu0 0
        %2411 = vmatpush1.bf16.msra.mxu0 0
        %2412 = vmatprep.subr.bf16.mxu0 0
        %2413 = vmatpush1.bf16.msra.mxu0 0
        %2414 = vmatprep.subr.bf16.mxu0 0
        %2415 = vmatpush1.bf16.msra.mxu0 0
        %2416 = vmatprep.subr.bf16.mxu0 0
        %2417 = vmatpush1.bf16.msra.mxu0 0
        %2418 = vmatprep.mubr.bf16.mxu0 0
        %2419 = vmatmul.mubr.bf16.gmra.mrb[0].mxu0 %v2384
        %v2420 = vpop.f32.mrb[0].mxu0
        %v2421 = vadd.f32 0.0, %v2420
        %v2422 = vpop.f32.mrb[0].mxu0
        %v2423 = vpop.f32.mrb[0].mxu0
        %v2424 = vpop.f32.mrb[0].mxu0
        %2425 = vdwg.mxu0
        %v2426 = vadd.f32 %v2366, %v2421
        %v2427 = vlaneseq
        %v2428 = vshrl.u32 %v2427, 7
        %v2429 = vsub.s32 0, %v2428
        %v2430 = vrot.slane %v1881, %v2429
        %v2431 = vadd.f32 %v2426, %v2430
        %vm2432 = vcmp.gt.f32.partialorder %v2431, 0.0
        %v2433 = vmin.f32 %v2431, 0.0
        %v2434 = vmul.f32 %v2433, 1.442695
        %v2435 = vpow.pop %v2434
        %v2436 = vsub.f32 %v2435, 1.0
        %v2437 = vsel %vm2432, %v2431, %v2436
        %s2438 = smul.u32 %s1883, 7
        %s2439 = scalar_lea.vmem %s251, %s2438
        %vm2440 = vcmask 260096
        %2441 = vst.msk [vmem:[%s2439] sm:$0x7f] %vm2440, %v2437
      $region70: #{cnn_forward.2} parent=43 // loop_footer
        %s1887 = sadd.s32 1, %s1883
      $region71: #{cnn_forward.2} parent=43 // loop_footer_branch
        %1882 = sbr.rel target = $region67
      $region72: #{cnn_forward.2} parent=43 // loop_exit
        _
      %p2442 = scmp.lt.s32.totalorder %s17, 1
      %s2443 = scalar_select %p2442, %s17, 1
      %s2444 = smul.addr %s2443, 7
      %s2445 = smul.addr %s2444, 8
      %s2446 = scalar_lea.vmem %s6, %s2445
      // Predicated region
      $region73: #{cnn_forward.2} parent=43 // pred_check
        %p2447 = pneg %p166
      $region74: #{cnn_forward.2} parent=43 // pred_check_branch
        %2449 = sbr.rel (%p2447) target = $region76
      $region75: #{cnn_forward.2} parent=43 // pred_region
        _
      $region76: #{cnn_forward.2} parent=43 // pred_fallthru
        _
    $region44: #{cnn_forward.2} parent=5 // pred_fallthru
      _
    %p2450 = scmp.le.s32.totalorder 2, %s12
    // Predicated region
    $region77: #{cnn_forward.2} parent=5 // pred_check
      %p2451 = pneg %p2450
    $region78: #{cnn_forward.2} parent=5 // pred_check_branch
      %2453 = sbr.rel (%p2451) target = $region80
    $region79: #{cnn_forward.2} parent=5 // pred_region
      %s2454 = ssub.s32 %s12, 2
      // Predicated region
      $region81: #{cnn_forward.2} parent=79 // pred_check
        %p2455 = pneg %p172
      $region82: #{cnn_forward.2} parent=79 // pred_check_branch
        %2457 = sbr.rel (%p2455) target = $region84
      $region83: #{cnn_forward.2} parent=79 // pred_region
        %p2458 = scmp.lt.s32.totalorder %s18, 1
        %s2459 = scalar_select %p2458, %s18, 1
        %s2460 = smul.addr %s2459, 7
        %s2461 = smul.addr %s2460, 8
        %s2462 = scalar_lea.vmem %s6, %s2461
      $region84: #{cnn_forward.2} parent=79 // pred_fallthru
        _
    $region80: #{cnn_forward.2} parent=5 // pred_fallthru
      _
  $region6: #{cnn_forward.2} parent=0 // loop_footer
    %s16 = sadd.s32 1, %s12
  $region7: #{cnn_forward.2} parent=0 // loop_footer_branch
    %11 = sbr.rel target = $region3
  $region8: #{cnn_forward.2} parent=0 // loop_exit
    _

// kernel: cnn_forward.3
$region0: #{cnn_forward.3}
  #allocation0 [shape = 'u32[]', space=smem, size = 0x4, offset = 0x4, fixed_abs, tag = 'smem constant byte address 0x4 - core index']
  #allocation1 [shape = 'u32[144,128]{1,0:T(1,128)}', space=vmem, size = 0x12000, scoped, tag = 'internal scratch']
  %s0 = inlined_call_operand.vmem [shape: f32[8,1568], index: 0, kind: input, shape index: {}]
  %s1 = inlined_call_operand.vmem [shape: bf16[1568,512], index: 1, kind: input, shape index: {}]
  %s2 = inlined_call_operand.vmem [shape: f32[1,512], index: 2, kind: input, shape index: {}]
  %s3 = inlined_call_operand.vmem [shape: f32[8,512], index: 3, kind: output, shape index: {}]
  %s4 = sld [smem:[#allocation0]]
  $region22: #{cnn_forward.3} parent=0
    _
  %s6 = ssub.s32 1, %s4
  %s7 = scalar_select 0, %s6, %s4
  // Predicated region
  $region2: #{cnn_forward.3} parent=0 // pred_check
    _
  $region3: #{cnn_forward.3} parent=0 // pred_check_branch
    %9 = sbr.rel (0) target = $region5
  $region4: #{cnn_forward.3} parent=0 // pred_region
    _
  $region5: #{cnn_forward.3} parent=0 // pred_fallthru
    _
  // Predicated region
  $region6: #{cnn_forward.3} parent=0 // pred_check
    _
  $region7: #{cnn_forward.3} parent=0 // pred_check_branch
    %11 = sbr.rel (0) target = $region9
  $region8: #{cnn_forward.3} parent=0 // pred_region
    _
  $region9: #{cnn_forward.3} parent=0 // pred_fallthru
    _
  // Predicated region
  $region10: #{cnn_forward.3} parent=0 // pred_check
    _
  $region11: #{cnn_forward.3} parent=0 // pred_check_branch
    %13 = sbr.rel (0) target = $region13
  $region12: #{cnn_forward.3} parent=0 // pred_region
    _
  $region13: #{cnn_forward.3} parent=0 // pred_fallthru
    _
  %v15 = vld [vmem:[%s0] sm:$0xff]
  %v16 = vld [vmem:[%s0 + $0x8] sm:$0xff]
  %v17 = vld [vmem:[%s0 + $0x10] sm:$0xff]
  %v18 = vld [vmem:[%s0 + $0x18] sm:$0xff]
  %v19 = vld [vmem:[%s0 + $0x20] sm:$0xff]
  %v20 = vld [vmem:[%s0 + $0x28] sm:$0xff]
  %v21 = vld [vmem:[%s0 + $0x30] sm:$0xff]
  %v22 = vld [vmem:[%s0 + $0x38] sm:$0xff]
  %v23 = vld [vmem:[%s0 + $0x40] sm:$0xff]
  %v24 = vld [vmem:[%s0 + $0x48] sm:$0xff]
  %v25 = vld [vmem:[%s0 + $0x50] sm:$0xff]
  %v26 = vld [vmem:[%s0 + $0x58] sm:$0xff]
  %v27 = vld [vmem:[%s0 + $0x60] sm:$0xff]
  %v28 = vpack.c.bf16 %v15, %v15
  %v29 = vpack.c.bf16 %v16, %v16
  %v30 = vpack.c.bf16 %v17, %v17
  %v31 = vpack.c.bf16 %v18, %v18
  %v32 = vpack.c.bf16 %v19, %v19
  %v33 = vpack.c.bf16 %v20, %v20
  %v34 = vpack.c.bf16 %v21, %v21
  %v35 = vpack.c.bf16 %v22, %v22
  %v36 = vpack.c.bf16 %v23, %v23
  %v37 = vpack.c.bf16 %v24, %v24
  %v38 = vpack.c.bf16 %v25, %v25
  %v39 = vpack.c.bf16 %v26, %v26
  %v40 = vpack.c.bf16 %v27, %v27
  %v41 = vld [vmem:[%s1] sm:$0xff]
  %v42 = vld [vmem:[%s1 + $0x8] sm:$0xff]
  %v43 = vld [vmem:[%s1 + $0x10] sm:$0xff]
  %v44 = vld [vmem:[%s1 + $0x18] sm:$0xff]
  %v45 = vld [vmem:[%s1 + $0x20] sm:$0xff]
  %v46 = vld [vmem:[%s1 + $0x28] sm:$0xff]
  %v47 = vld [vmem:[%s1 + $0x30] sm:$0xff]
  %v48 = vld [vmem:[%s1 + $0x38] sm:$0xff]
  %v49 = vld [vmem:[%s1 + $0x40] sm:$0xff]
  %v50 = vld [vmem:[%s1 + $0x48] sm:$0xff]
  %v51 = vld [vmem:[%s1 + $0x50] sm:$0xff]
  %v52 = vld [vmem:[%s1 + $0x58] sm:$0xff]
  %v53 = vld [vmem:[%s1 + $0x60] sm:$0xff]
  %v54 = vld [vmem:[%s1 + $0x68] sm:$0xff]
  %v55 = vld [vmem:[%s1 + $0x70] sm:$0xff]
  %v56 = vld [vmem:[%s1 + $0x78] sm:$0xff]
  %v57 = vld [vmem:[%s1 + $0x80] sm:$0xff]
  %v58 = vld [vmem:[%s1 + $0x88] sm:$0xff]
  %v59 = vld [vmem:[%s1 + $0x90] sm:$0xff]
  %v60 = vld [vmem:[%s1 + $0x98] sm:$0xff]
  %v61 = vld [vmem:[%s1 + $0xa0] sm:$0xff]
  %v62 = vld [vmem:[%s1 + $0xa8] sm:$0xff]
  %v63 = vld [vmem:[%s1 + $0xb0] sm:$0xff]
  %v64 = vld [vmem:[%s1 + $0xb8] sm:$0xff]
  %v65 = vld [vmem:[%s1 + $0xc0] sm:$0xff]
  %v66 = vld [vmem:[%s1 + $0xc8] sm:$0xff]
  %v67 = vld [vmem:[%s1 + $0xd0] sm:$0xff]
  %v68 = vld [vmem:[%s1 + $0xd8] sm:$0xff]
  %v69 = vld [vmem:[%s1 + $0xe0] sm:$0xff]
  %v70 = vld [vmem:[%s1 + $0xe8] sm:$0xff]
  %v71 = vld [vmem:[%s1 + $0xf0] sm:$0xff]
  %v72 = vld [vmem:[%s1 + $0xf8] sm:$0xff]
  %v73 = vld [vmem:[%s1 + $0x100] sm:$0xff]
  %v74 = vld [vmem:[%s1 + $0x108] sm:$0xff]
  %v75 = vld [vmem:[%s1 + $0x110] sm:$0xff]
  %v76 = vld [vmem:[%s1 + $0x118] sm:$0xff]
  %v77 = vld [vmem:[%s1 + $0x120] sm:$0xff]
  %v78 = vld [vmem:[%s1 + $0x128] sm:$0xff]
  %v79 = vld [vmem:[%s1 + $0x130] sm:$0xff]
  %v80 = vld [vmem:[%s1 + $0x138] sm:$0xff]
  %v81 = vld [vmem:[%s1 + $0x140] sm:$0xff]
  %v82 = vld [vmem:[%s1 + $0x148] sm:$0xff]
  %v83 = vld [vmem:[%s1 + $0x150] sm:$0xff]
  %v84 = vld [vmem:[%s1 + $0x158] sm:$0xff]
  %v85 = vld [vmem:[%s1 + $0x160] sm:$0xff]
  %v86 = vld [vmem:[%s1 + $0x168] sm:$0xff]
  %v87 = vld [vmem:[%s1 + $0x170] sm:$0xff]
  %v88 = vld [vmem:[%s1 + $0x178] sm:$0xff]
  %v89 = vld [vmem:[%s1 + $0x180] sm:$0xff]
  %v90 = vld [vmem:[%s1 + $0x188] sm:$0xff]
  %v91 = vld [vmem:[%s1 + $0x190] sm:$0xff]
  %v92 = vld [vmem:[%s1 + $0x198] sm:$0xff]
  %v93 = vld [vmem:[%s1 + $0x1a0] sm:$0xff]
  %v94 = vld [vmem:[%s1 + $0x1a8] sm:$0xff]
  %v95 = vld [vmem:[%s1 + $0x1b0] sm:$0xff]
  %v96 = vld [vmem:[%s1 + $0x1b8] sm:$0xff]
  %v97 = vld [vmem:[%s1 + $0x1c0] sm:$0xff]
  %v98 = vld [vmem:[%s1 + $0x1c8] sm:$0xff]
  %v99 = vld [vmem:[%s1 + $0x1d0] sm:$0xff]
  %v100 = vld [vmem:[%s1 + $0x1d8] sm:$0xff]
  %v101 = vld [vmem:[%s1 + $0x1e0] sm:$0xff]
  %v102 = vld [vmem:[%s1 + $0x1e8] sm:$0xff]
  %v103 = vld [vmem:[%s1 + $0x1f0] sm:$0xff]
  %v104 = vld [vmem:[%s1 + $0x1f8] sm:$0xff]
  %v105 = vld [vmem:[%s1 + $0x200] sm:$0xff]
  %v106 = vld [vmem:[%s1 + $0x208] sm:$0xff]
  %v107 = vld [vmem:[%s1 + $0x210] sm:$0xff]
  %v108 = vld [vmem:[%s1 + $0x218] sm:$0xff]
  %v109 = vld [vmem:[%s1 + $0x220] sm:$0xff]
  %v110 = vld [vmem:[%s1 + $0x228] sm:$0xff]
  %v111 = vld [vmem:[%s1 + $0x230] sm:$0xff]
  %v112 = vld [vmem:[%s1 + $0x238] sm:$0xff]
  %v113 = vld [vmem:[%s1 + $0x240] sm:$0xff]
  %v114 = vld [vmem:[%s1 + $0x248] sm:$0xff]
  %v115 = vld [vmem:[%s1 + $0x250] sm:$0xff]
  %v116 = vld [vmem:[%s1 + $0x258] sm:$0xff]
  %v117 = vld [vmem:[%s1 + $0x260] sm:$0xff]
  %v118 = vld [vmem:[%s1 + $0x268] sm:$0xff]
  %v119 = vld [vmem:[%s1 + $0x270] sm:$0xff]
  %v120 = vld [vmem:[%s1 + $0x278] sm:$0xff]
  %v121 = vld [vmem:[%s1 + $0x280] sm:$0xff]
  %v122 = vld [vmem:[%s1 + $0x288] sm:$0xff]
  %v123 = vld [vmem:[%s1 + $0x290] sm:$0xff]
  %v124 = vld [vmem:[%s1 + $0x298] sm:$0xff]
  %v125 = vld [vmem:[%s1 + $0x2a0] sm:$0xff]
  %v126 = vld [vmem:[%s1 + $0x2a8] sm:$0xff]
  %v127 = vld [vmem:[%s1 + $0x2b0] sm:$0xff]
  %v128 = vld [vmem:[%s1 + $0x2b8] sm:$0xff]
  %v129 = vld [vmem:[%s1 + $0x2c0] sm:$0xff]
  %v130 = vld [vmem:[%s1 + $0x2c8] sm:$0xff]
  %v131 = vld [vmem:[%s1 + $0x2d0] sm:$0xff]
  %v132 = vld [vmem:[%s1 + $0x2d8] sm:$0xff]
  %v133 = vld [vmem:[%s1 + $0x2e0] sm:$0xff]
  %v134 = vld [vmem:[%s1 + $0x2e8] sm:$0xff]
  %v135 = vld [vmem:[%s1 + $0x2f0] sm:$0xff]
  %v136 = vld [vmem:[%s1 + $0x2f8] sm:$0xff]
  %v137 = vld [vmem:[%s1 + $0x300] sm:$0xff]
  %v138 = vld [vmem:[%s1 + $0x308] sm:$0xff]
  %v139 = vld [vmem:[%s1 + $0x310] sm:$0xff]
  %v140 = vld [vmem:[%s1 + $0x318] sm:$0xff]
  %v141 = vld [vmem:[%s1 + $0x320] sm:$0xff]
  %v142 = vld [vmem:[%s1 + $0x328] sm:$0xff]
  %v143 = vld [vmem:[%s1 + $0x330] sm:$0xff]
  %v144 = vld [vmem:[%s1 + $0x338] sm:$0xff]
  %v145 = vld [vmem:[%s1 + $0x340] sm:$0xff]
  %v146 = vld [vmem:[%s1 + $0x348] sm:$0xff]
  %v147 = vld [vmem:[%s1 + $0x350] sm:$0xff]
  %v148 = vld [vmem:[%s1 + $0x358] sm:$0xff]
  %v149 = vld [vmem:[%s1 + $0x360] sm:$0xff]
  %v150 = vld [vmem:[%s1 + $0x368] sm:$0xff]
  %v151 = vld [vmem:[%s1 + $0x370] sm:$0xff]
  %v152 = vld [vmem:[%s1 + $0x378] sm:$0xff]
  %v153 = vld [vmem:[%s1 + $0x380] sm:$0xff]
  %v154 = vld [vmem:[%s1 + $0x388] sm:$0xff]
  %v155 = vld [vmem:[%s1 + $0x390] sm:$0xff]
  %v156 = vld [vmem:[%s1 + $0x398] sm:$0xff]
  %v157 = vld [vmem:[%s1 + $0x3a0] sm:$0xff]
  %v158 = vld [vmem:[%s1 + $0x3a8] sm:$0xff]
  %v159 = vld [vmem:[%s1 + $0x3b0] sm:$0xff]
  %v160 = vld [vmem:[%s1 + $0x3b8] sm:$0xff]
  %v161 = vld [vmem:[%s1 + $0x3c0] sm:$0xff]
  %v162 = vld [vmem:[%s1 + $0x3c8] sm:$0xff]
  %v163 = vld [vmem:[%s1 + $0x3d0] sm:$0xff]
  %v164 = vld [vmem:[%s1 + $0x3d8] sm:$0xff]
  %v165 = vld [vmem:[%s1 + $0x3e0] sm:$0xff]
  %v166 = vld [vmem:[%s1 + $0x3e8] sm:$0xff]
  %v167 = vld [vmem:[%s1 + $0x3f0] sm:$0xff]
  %v168 = vld [vmem:[%s1 + $0x3f8] sm:$0xff]
  %v169 = vld [vmem:[%s1 + $0x400] sm:$0xff]
  %v170 = vld [vmem:[%s1 + $0x408] sm:$0xff]
  %v171 = vld [vmem:[%s1 + $0x410] sm:$0xff]
  %v172 = vld [vmem:[%s1 + $0x418] sm:$0xff]
  %v173 = vld [vmem:[%s1 + $0x420] sm:$0xff]
  %v174 = vld [vmem:[%s1 + $0x428] sm:$0xff]
  %v175 = vld [vmem:[%s1 + $0x430] sm:$0xff]
  %v176 = vld [vmem:[%s1 + $0x438] sm:$0xff]
  %v177 = vld [vmem:[%s1 + $0x440] sm:$0xff]
  %v178 = vld [vmem:[%s1 + $0x448] sm:$0xff]
  %v179 = vld [vmem:[%s1 + $0x450] sm:$0xff]
  %v180 = vld [vmem:[%s1 + $0x458] sm:$0xff]
  %v181 = vld [vmem:[%s1 + $0x460] sm:$0xff]
  %v182 = vld [vmem:[%s1 + $0x468] sm:$0xff]
  %v183 = vld [vmem:[%s1 + $0x470] sm:$0xff]
  %v184 = vld [vmem:[%s1 + $0x478] sm:$0xff]
  %v185 = vld [vmem:[%s1 + $0x480] sm:$0xff]
  %v186 = vld [vmem:[%s1 + $0x488] sm:$0xff]
  %v187 = vld [vmem:[%s1 + $0x490] sm:$0xff]
  %v188 = vld [vmem:[%s1 + $0x498] sm:$0xff]
  %v189 = vld [vmem:[%s1 + $0x4a0] sm:$0xff]
  %v190 = vld [vmem:[%s1 + $0x4a8] sm:$0xff]
  %v191 = vld [vmem:[%s1 + $0x4b0] sm:$0xff]
  %v192 = vld [vmem:[%s1 + $0x4b8] sm:$0xff]
  %v193 = vld [vmem:[%s1 + $0x4c0] sm:$0xff]
  %v194 = vld [vmem:[%s1 + $0x4c8] sm:$0xff]
  %v195 = vld [vmem:[%s1 + $0x4d0] sm:$0xff]
  %v196 = vld [vmem:[%s1 + $0x4d8] sm:$0xff]
  %v197 = vld [vmem:[%s1 + $0x4e0] sm:$0xff]
  %v198 = vld [vmem:[%s1 + $0x4e8] sm:$0xff]
  %v199 = vld [vmem:[%s1 + $0x4f0] sm:$0xff]
  %v200 = vld [vmem:[%s1 + $0x4f8] sm:$0xff]
  %v201 = vld [vmem:[%s1 + $0x500] sm:$0xff]
  %v202 = vld [vmem:[%s1 + $0x508] sm:$0xff]
  %v203 = vld [vmem:[%s1 + $0x510] sm:$0xff]
  %v204 = vld [vmem:[%s1 + $0x518] sm:$0xff]
  %v205 = vld [vmem:[%s1 + $0x520] sm:$0xff]
  %v206 = vld [vmem:[%s1 + $0x528] sm:$0xff]
  %v207 = vld [vmem:[%s1 + $0x530] sm:$0xff]
  %v208 = vld [vmem:[%s1 + $0x538] sm:$0xff]
  %v209 = vld [vmem:[%s1 + $0x540] sm:$0xff]
  %v210 = vld [vmem:[%s1 + $0x548] sm:$0xff]
  %v211 = vld [vmem:[%s1 + $0x550] sm:$0xff]
  %v212 = vld [vmem:[%s1 + $0x558] sm:$0xff]
  %v213 = vld [vmem:[%s1 + $0x560] sm:$0xff]
  %v214 = vld [vmem:[%s1 + $0x568] sm:$0xff]
  %v215 = vld [vmem:[%s1 + $0x570] sm:$0xff]
  %v216 = vld [vmem:[%s1 + $0x578] sm:$0xff]
  %v217 = vld [vmem:[%s1 + $0x580] sm:$0xff]
  %v218 = vld [vmem:[%s1 + $0x588] sm:$0xff]
  %v219 = vld [vmem:[%s1 + $0x590] sm:$0xff]
  %v220 = vld [vmem:[%s1 + $0x598] sm:$0xff]
  %v221 = vld [vmem:[%s1 + $0x5a0] sm:$0xff]
  %v222 = vld [vmem:[%s1 + $0x5a8] sm:$0xff]
  %v223 = vld [vmem:[%s1 + $0x5b0] sm:$0xff]
  %v224 = vld [vmem:[%s1 + $0x5b8] sm:$0xff]
  %v225 = vld [vmem:[%s1 + $0x5c0] sm:$0xff]
  %v226 = vld [vmem:[%s1 + $0x5c8] sm:$0xff]
  %v227 = vld [vmem:[%s1 + $0x5d0] sm:$0xff]
  %v228 = vld [vmem:[%s1 + $0x5d8] sm:$0xff]
  %v229 = vld [vmem:[%s1 + $0x5e0] sm:$0xff]
  %v230 = vld [vmem:[%s1 + $0x5e8] sm:$0xff]
  %v231 = vld [vmem:[%s1 + $0x5f0] sm:$0xff]
  %v232 = vld [vmem:[%s1 + $0x5f8] sm:$0xff]
  %v233 = vld [vmem:[%s1 + $0x600] sm:$0xff]
  %v234 = vld [vmem:[%s1 + $0x608] sm:$0xff]
  %v235 = vld [vmem:[%s1 + $0x610] sm:$0xff]
  %v236 = vld [vmem:[%s1 + $0x618] sm:$0xff]
  %v237 = vld [vmem:[%s1 + $0x620] sm:$0xff]
  %v238 = vld [vmem:[%s1 + $0x628] sm:$0xff]
  %v239 = vld [vmem:[%s1 + $0x630] sm:$0xff]
  %v240 = vld [vmem:[%s1 + $0x638] sm:$0xff]
  %v241 = vld [vmem:[%s1 + $0x640] sm:$0xff]
  %v242 = vld [vmem:[%s1 + $0x648] sm:$0xff]
  %v243 = vld [vmem:[%s1 + $0x650] sm:$0xff]
  %v244 = vld [vmem:[%s1 + $0x658] sm:$0xff]
  %v245 = vld [vmem:[%s1 + $0x660] sm:$0xff]
  %v246 = vld [vmem:[%s1 + $0x668] sm:$0xff]
  %v247 = vld [vmem:[%s1 + $0x670] sm:$0xff]
  %v248 = vld [vmem:[%s1 + $0x678] sm:$0xff]
  %v249 = vld [vmem:[%s1 + $0x680] sm:$0xff]
  %v250 = vld [vmem:[%s1 + $0x688] sm:$0xff]
  %v251 = vld [vmem:[%s1 + $0x690] sm:$0xff]
  %v252 = vld [vmem:[%s1 + $0x698] sm:$0xff]
  %v253 = vld [vmem:[%s1 + $0x6a0] sm:$0xff]
  %v254 = vld [vmem:[%s1 + $0x6a8] sm:$0xff]
  %v255 = vld [vmem:[%s1 + $0x6b0] sm:$0xff]
  %v256 = vld [vmem:[%s1 + $0x6b8] sm:$0xff]
  %v257 = vld [vmem:[%s1 + $0x6c0] sm:$0xff]
  %v258 = vld [vmem:[%s1 + $0x6c8] sm:$0xff]
  %v259 = vld [vmem:[%s1 + $0x6d0] sm:$0xff]
  %v260 = vld [vmem:[%s1 + $0x6d8] sm:$0xff]
  %v261 = vld [vmem:[%s1 + $0x6e0] sm:$0xff]
  %v262 = vld [vmem:[%s1 + $0x6e8] sm:$0xff]
  %v263 = vld [vmem:[%s1 + $0x6f0] sm:$0xff]
  %v264 = vld [vmem:[%s1 + $0x6f8] sm:$0xff]
  %v265 = vld [vmem:[%s1 + $0x700] sm:$0xff]
  %v266 = vld [vmem:[%s1 + $0x708] sm:$0xff]
  %v267 = vld [vmem:[%s1 + $0x710] sm:$0xff]
  %v268 = vld [vmem:[%s1 + $0x718] sm:$0xff]
  %v269 = vld [vmem:[%s1 + $0x720] sm:$0xff]
  %v270 = vld [vmem:[%s1 + $0x728] sm:$0xff]
  %v271 = vld [vmem:[%s1 + $0x730] sm:$0xff]
  %v272 = vld [vmem:[%s1 + $0x738] sm:$0xff]
  %v273 = vld [vmem:[%s1 + $0x740] sm:$0xff]
  %v274 = vld [vmem:[%s1 + $0x748] sm:$0xff]
  %v275 = vld [vmem:[%s1 + $0x750] sm:$0xff]
  %v276 = vld [vmem:[%s1 + $0x758] sm:$0xff]
  %v277 = vld [vmem:[%s1 + $0x760] sm:$0xff]
  %v278 = vld [vmem:[%s1 + $0x768] sm:$0xff]
  %v279 = vld [vmem:[%s1 + $0x770] sm:$0xff]
  %v280 = vld [vmem:[%s1 + $0x778] sm:$0xff]
  %v281 = vld [vmem:[%s1 + $0x780] sm:$0xff]
  %v282 = vld [vmem:[%s1 + $0x788] sm:$0xff]
  %v283 = vld [vmem:[%s1 + $0x790] sm:$0xff]
  %v284 = vld [vmem:[%s1 + $0x798] sm:$0xff]
  %v285 = vld [vmem:[%s1 + $0x7a0] sm:$0xff]
  %v286 = vld [vmem:[%s1 + $0x7a8] sm:$0xff]
  %v287 = vld [vmem:[%s1 + $0x7b0] sm:$0xff]
  %v288 = vld [vmem:[%s1 + $0x7b8] sm:$0xff]
  %v289 = vld [vmem:[%s1 + $0x7c0] sm:$0xff]
  %v290 = vld [vmem:[%s1 + $0x7c8] sm:$0xff]
  %v291 = vld [vmem:[%s1 + $0x7d0] sm:$0xff]
  %v292 = vld [vmem:[%s1 + $0x7d8] sm:$0xff]
  %v293 = vld [vmem:[%s1 + $0x7e0] sm:$0xff]
  %v294 = vld [vmem:[%s1 + $0x7e8] sm:$0xff]
  %v295 = vld [vmem:[%s1 + $0x7f0] sm:$0xff]
  %v296 = vld [vmem:[%s1 + $0x7f8] sm:$0xff]
  %v297 = vld [vmem:[%s1 + $0x800] sm:$0xff]
  %v298 = vld [vmem:[%s1 + $0x808] sm:$0xff]
  %v299 = vld [vmem:[%s1 + $0x810] sm:$0xff]
  %v300 = vld [vmem:[%s1 + $0x818] sm:$0xff]
  %v301 = vld [vmem:[%s1 + $0x820] sm:$0xff]
  %v302 = vld [vmem:[%s1 + $0x828] sm:$0xff]
  %v303 = vld [vmem:[%s1 + $0x830] sm:$0xff]
  %v304 = vld [vmem:[%s1 + $0x838] sm:$0xff]
  %v305 = vld [vmem:[%s1 + $0x840] sm:$0xff]
  %v306 = vld [vmem:[%s1 + $0x848] sm:$0xff]
  %v307 = vld [vmem:[%s1 + $0x850] sm:$0xff]
  %v308 = vld [vmem:[%s1 + $0x858] sm:$0xff]
  %v309 = vld [vmem:[%s1 + $0x860] sm:$0xff]
  %v310 = vld [vmem:[%s1 + $0x868] sm:$0xff]
  %v311 = vld [vmem:[%s1 + $0x870] sm:$0xff]
  %v312 = vld [vmem:[%s1 + $0x878] sm:$0xff]
  %v313 = vld [vmem:[%s1 + $0x880] sm:$0xff]
  %v314 = vld [vmem:[%s1 + $0x888] sm:$0xff]
  %v315 = vld [vmem:[%s1 + $0x890] sm:$0xff]
  %v316 = vld [vmem:[%s1 + $0x898] sm:$0xff]
  %v317 = vld [vmem:[%s1 + $0x8a0] sm:$0xff]
  %v318 = vld [vmem:[%s1 + $0x8a8] sm:$0xff]
  %v319 = vld [vmem:[%s1 + $0x8b0] sm:$0xff]
  %v320 = vld [vmem:[%s1 + $0x8b8] sm:$0xff]
  %v321 = vld [vmem:[%s1 + $0x8c0] sm:$0xff]
  %v322 = vld [vmem:[%s1 + $0x8c8] sm:$0xff]
  %v323 = vld [vmem:[%s1 + $0x8d0] sm:$0xff]
  %v324 = vld [vmem:[%s1 + $0x8d8] sm:$0xff]
  %v325 = vld [vmem:[%s1 + $0x8e0] sm:$0xff]
  %v326 = vld [vmem:[%s1 + $0x8e8] sm:$0xff]
  %v327 = vld [vmem:[%s1 + $0x8f0] sm:$0xff]
  %v328 = vld [vmem:[%s1 + $0x8f8] sm:$0xff]
  %v329 = vld [vmem:[%s1 + $0x900] sm:$0xff]
  %v330 = vld [vmem:[%s1 + $0x908] sm:$0xff]
  %v331 = vld [vmem:[%s1 + $0x910] sm:$0xff]
  %v332 = vld [vmem:[%s1 + $0x918] sm:$0xff]
  %v333 = vld [vmem:[%s1 + $0x920] sm:$0xff]
  %v334 = vld [vmem:[%s1 + $0x928] sm:$0xff]
  %v335 = vld [vmem:[%s1 + $0x930] sm:$0xff]
  %v336 = vld [vmem:[%s1 + $0x938] sm:$0xff]
  %v337 = vld [vmem:[%s1 + $0x940] sm:$0xff]
  %v338 = vld [vmem:[%s1 + $0x948] sm:$0xff]
  %v339 = vld [vmem:[%s1 + $0x950] sm:$0xff]
  %v340 = vld [vmem:[%s1 + $0x958] sm:$0xff]
  %v341 = vld [vmem:[%s1 + $0x960] sm:$0xff]
  %v342 = vld [vmem:[%s1 + $0x968] sm:$0xff]
  %v343 = vld [vmem:[%s1 + $0x970] sm:$0xff]
  %v344 = vld [vmem:[%s1 + $0x978] sm:$0xff]
  %v345 = vld [vmem:[%s1 + $0x980] sm:$0xff]
  %v346 = vld [vmem:[%s1 + $0x988] sm:$0xff]
  %v347 = vld [vmem:[%s1 + $0x990] sm:$0xff]
  %v348 = vld [vmem:[%s1 + $0x998] sm:$0xff]
  %v349 = vld [vmem:[%s1 + $0x9a0] sm:$0xff]
  %v350 = vld [vmem:[%s1 + $0x9a8] sm:$0xff]
  %v351 = vld [vmem:[%s1 + $0x9b0] sm:$0xff]
  %v352 = vld [vmem:[%s1 + $0x9b8] sm:$0xff]
  %v353 = vld [vmem:[%s1 + $0x9c0] sm:$0xff]
  %v354 = vld [vmem:[%s1 + $0x9c8] sm:$0xff]
  %v355 = vld [vmem:[%s1 + $0x9d0] sm:$0xff]
  %v356 = vld [vmem:[%s1 + $0x9d8] sm:$0xff]
  %v357 = vld [vmem:[%s1 + $0x9e0] sm:$0xff]
  %v358 = vld [vmem:[%s1 + $0x9e8] sm:$0xff]
  %v359 = vld [vmem:[%s1 + $0x9f0] sm:$0xff]
  %v360 = vld [vmem:[%s1 + $0x9f8] sm:$0xff]
  %v361 = vld [vmem:[%s1 + $0xa00] sm:$0xff]
  %v362 = vld [vmem:[%s1 + $0xa08] sm:$0xff]
  %v363 = vld [vmem:[%s1 + $0xa10] sm:$0xff]
  %v364 = vld [vmem:[%s1 + $0xa18] sm:$0xff]
  %v365 = vld [vmem:[%s1 + $0xa20] sm:$0xff]
  %v366 = vld [vmem:[%s1 + $0xa28] sm:$0xff]
  %v367 = vld [vmem:[%s1 + $0xa30] sm:$0xff]
  %v368 = vld [vmem:[%s1 + $0xa38] sm:$0xff]
  %v369 = vld [vmem:[%s1 + $0xa40] sm:$0xff]
  %v370 = vld [vmem:[%s1 + $0xa48] sm:$0xff]
  %v371 = vld [vmem:[%s1 + $0xa50] sm:$0xff]
  %v372 = vld [vmem:[%s1 + $0xa58] sm:$0xff]
  %v373 = vld [vmem:[%s1 + $0xa60] sm:$0xff]
  %v374 = vld [vmem:[%s1 + $0xa68] sm:$0xff]
  %v375 = vld [vmem:[%s1 + $0xa70] sm:$0xff]
  %v376 = vld [vmem:[%s1 + $0xa78] sm:$0xff]
  %v377 = vld [vmem:[%s1 + $0xa80] sm:$0xff]
  %v378 = vld [vmem:[%s1 + $0xa88] sm:$0xff]
  %v379 = vld [vmem:[%s1 + $0xa90] sm:$0xff]
  %v380 = vld [vmem:[%s1 + $0xa98] sm:$0xff]
  %v381 = vld [vmem:[%s1 + $0xaa0] sm:$0xff]
  %v382 = vld [vmem:[%s1 + $0xaa8] sm:$0xff]
  %v383 = vld [vmem:[%s1 + $0xab0] sm:$0xff]
  %v384 = vld [vmem:[%s1 + $0xab8] sm:$0xff]
  %v385 = vld [vmem:[%s1 + $0xac0] sm:$0xff]
  %v386 = vld [vmem:[%s1 + $0xac8] sm:$0xff]
  %v387 = vld [vmem:[%s1 + $0xad0] sm:$0xff]
  %v388 = vld [vmem:[%s1 + $0xad8] sm:$0xff]
  %v389 = vld [vmem:[%s1 + $0xae0] sm:$0xff]
  %v390 = vld [vmem:[%s1 + $0xae8] sm:$0xff]
  %v391 = vld [vmem:[%s1 + $0xaf0] sm:$0xff]
  %v392 = vld [vmem:[%s1 + $0xaf8] sm:$0xff]
  %v393 = vld [vmem:[%s1 + $0xb00] sm:$0xff]
  %v394 = vld [vmem:[%s1 + $0xb08] sm:$0xff]
  %v395 = vld [vmem:[%s1 + $0xb10] sm:$0xff]
  %v396 = vld [vmem:[%s1 + $0xb18] sm:$0xff]
  %v397 = vld [vmem:[%s1 + $0xb20] sm:$0xff]
  %v398 = vld [vmem:[%s1 + $0xb28] sm:$0xff]
  %v399 = vld [vmem:[%s1 + $0xb30] sm:$0xff]
  %v400 = vld [vmem:[%s1 + $0xb38] sm:$0xff]
  %v401 = vld [vmem:[%s1 + $0xb40] sm:$0xff]
  %v402 = vld [vmem:[%s1 + $0xb48] sm:$0xff]
  %v403 = vld [vmem:[%s1 + $0xb50] sm:$0xff]
  %v404 = vld [vmem:[%s1 + $0xb58] sm:$0xff]
  %v405 = vld [vmem:[%s1 + $0xb60] sm:$0xff]
  %v406 = vld [vmem:[%s1 + $0xb68] sm:$0xff]
  %v407 = vld [vmem:[%s1 + $0xb70] sm:$0xff]
  %v408 = vld [vmem:[%s1 + $0xb78] sm:$0xff]
  %v409 = vld [vmem:[%s1 + $0xb80] sm:$0xff]
  %v410 = vld [vmem:[%s1 + $0xb88] sm:$0xff]
  %v411 = vld [vmem:[%s1 + $0xb90] sm:$0xff]
  %v412 = vld [vmem:[%s1 + $0xb98] sm:$0xff]
  %v413 = vld [vmem:[%s1 + $0xba0] sm:$0xff]
  %v414 = vld [vmem:[%s1 + $0xba8] sm:$0xff]
  %v415 = vld [vmem:[%s1 + $0xbb0] sm:$0xff]
  %v416 = vld [vmem:[%s1 + $0xbb8] sm:$0xff]
  %v417 = vld [vmem:[%s1 + $0xbc0] sm:$0xff]
  %v418 = vld [vmem:[%s1 + $0xbc8] sm:$0xff]
  %v419 = vld [vmem:[%s1 + $0xbd0] sm:$0xff]
  %v420 = vld [vmem:[%s1 + $0xbd8] sm:$0xff]
  %v421 = vld [vmem:[%s1 + $0xbe0] sm:$0xff]
  %v422 = vld [vmem:[%s1 + $0xbe8] sm:$0xff]
  %v423 = vld [vmem:[%s1 + $0xbf0] sm:$0xff]
  %v424 = vld [vmem:[%s1 + $0xbf8] sm:$0xff]
  %v425 = vld [vmem:[%s1 + $0xc00] sm:$0xff]
  %v426 = vld [vmem:[%s1 + $0xc08] sm:$0xff]
  %v427 = vld [vmem:[%s1 + $0xc10] sm:$0xff]
  %v428 = vld [vmem:[%s1 + $0xc18] sm:$0xff]
  %v429 = vld [vmem:[%s1 + $0xc20] sm:$0xff]
  %v430 = vld [vmem:[%s1 + $0xc28] sm:$0xff]
  %v431 = vld [vmem:[%s1 + $0xc30] sm:$0xff]
  %v432 = vld [vmem:[%s1 + $0xc38] sm:$0xff]
  %v433 = vld [vmem:[%s2] sm:$0xf]
  %v435 = vlaneseq
  %v436 = vshrl.u32 %v435, 7
  %v437 = vsub.s32 0, %v436
  %v438 = vrot.slane %v433, %v437
  %v439 = vlaneseq
  %v440 = vshrl.u32 %v439, 7
  %v441 = vsub.s32 1, %v440
  %v442 = vrot.slane %v433, %v441
  %v443 = vlaneseq
  %v444 = vshrl.u32 %v443, 7
  %v445 = vsub.s32 2, %v444
  %v446 = vrot.slane %v433, %v445
  %v447 = vlaneseq
  %v448 = vshrl.u32 %v447, 7
  %v449 = vsub.s32 3, %v448
  %v450 = vrot.slane %v433, %v449
  %v847 = vunpack.c.l.b16 %v41
  %v848 = vunpack.c.h.b16 %v41
  %v849 = vunpack.c.l.b16 %v42
  %v850 = vunpack.c.h.b16 %v42
  %v851 = vunpack.c.l.b16 %v43
  %v852 = vunpack.c.h.b16 %v43
  %v853 = vunpack.c.l.b16 %v44
  %v854 = vunpack.c.h.b16 %v44
  %v855 = vunpack.c.l.b16 %v45
  %v856 = vunpack.c.h.b16 %v45
  %v857 = vunpack.c.l.b16 %v46
  %v858 = vunpack.c.h.b16 %v46
  %v859 = vunpack.c.l.b16 %v47
  %v860 = vunpack.c.h.b16 %v47
  %v861 = vunpack.c.l.b16 %v48
  %v862 = vunpack.c.h.b16 %v48
  %v863 = vunpack.c.l.b16 %v49
  %v864 = vunpack.c.h.b16 %v49
  %v865 = vunpack.c.l.b16 %v50
  %v866 = vunpack.c.h.b16 %v50
  %v867 = vunpack.c.l.b16 %v51
  %v868 = vunpack.c.h.b16 %v51
  %v869 = vunpack.c.l.b16 %v52
  %v870 = vunpack.c.h.b16 %v52
  %v871 = vunpack.c.l.b16 %v53
  %v872 = vunpack.c.h.b16 %v53
  %v873 = vunpack.c.l.b16 %v54
  %v874 = vunpack.c.h.b16 %v54
  %v875 = vunpack.c.l.b16 %v55
  %v876 = vunpack.c.h.b16 %v55
  %v877 = vunpack.c.l.b16 %v56
  %v878 = vunpack.c.h.b16 %v56
  %v879 = vunpack.c.l.b16 %v57
  %v880 = vunpack.c.h.b16 %v57
  %v881 = vunpack.c.l.b16 %v58
  %v882 = vunpack.c.h.b16 %v58
  %v883 = vunpack.c.l.b16 %v59
  %v884 = vunpack.c.h.b16 %v59
  %v885 = vunpack.c.l.b16 %v60
  %v886 = vunpack.c.h.b16 %v60
  %v887 = vunpack.c.l.b16 %v61
  %v888 = vunpack.c.h.b16 %v61
  %v889 = vunpack.c.l.b16 %v62
  %v890 = vunpack.c.h.b16 %v62
  %v891 = vunpack.c.l.b16 %v63
  %v892 = vunpack.c.h.b16 %v63
  %v893 = vunpack.c.l.b16 %v64
  %v894 = vunpack.c.h.b16 %v64
  %v895 = vunpack.c.l.b16 %v65
  %v896 = vunpack.c.h.b16 %v65
  %v897 = vunpack.c.l.b16 %v66
  %v898 = vunpack.c.h.b16 %v66
  %v899 = vunpack.c.l.b16 %v67
  %v900 = vunpack.c.h.b16 %v67
  %v901 = vunpack.c.l.b16 %v68
  %v902 = vunpack.c.h.b16 %v68
  %v903 = vunpack.c.l.b16 %v69
  %v904 = vunpack.c.h.b16 %v69
  %v905 = vunpack.c.l.b16 %v70
  %v906 = vunpack.c.h.b16 %v70
  %v907 = vunpack.c.l.b16 %v71
  %v908 = vunpack.c.h.b16 %v71
  %v909 = vunpack.c.l.b16 %v72
  %v910 = vunpack.c.h.b16 %v72
  %v911 = vunpack.c.l.b16 %v73
  %v912 = vunpack.c.h.b16 %v73
  %v913 = vunpack.c.l.b16 %v74
  %v914 = vunpack.c.h.b16 %v74
  %v915 = vunpack.c.l.b16 %v75
  %v916 = vunpack.c.h.b16 %v75
  %v917 = vunpack.c.l.b16 %v76
  %v918 = vunpack.c.h.b16 %v76
  %v919 = vunpack.c.l.b16 %v77
  %v920 = vunpack.c.h.b16 %v77
  %v921 = vunpack.c.l.b16 %v78
  %v922 = vunpack.c.h.b16 %v78
  %v923 = vunpack.c.l.b16 %v79
  %v924 = vunpack.c.h.b16 %v79
  %v925 = vunpack.c.l.b16 %v80
  %v926 = vunpack.c.h.b16 %v80
  %v927 = vunpack.c.l.b16 %v81
  %v928 = vunpack.c.h.b16 %v81
  %v929 = vunpack.c.l.b16 %v82
  %v930 = vunpack.c.h.b16 %v82
  %v931 = vunpack.c.l.b16 %v83
  %v932 = vunpack.c.h.b16 %v83
  %v933 = vunpack.c.l.b16 %v84
  %v934 = vunpack.c.h.b16 %v84
  %v935 = vunpack.c.l.b16 %v85
  %v936 = vunpack.c.h.b16 %v85
  %v937 = vunpack.c.l.b16 %v86
  %v938 = vunpack.c.h.b16 %v86
  %v939 = vunpack.c.l.b16 %v87
  %v940 = vunpack.c.h.b16 %v87
  %v941 = vunpack.c.l.b16 %v88
  %v942 = vunpack.c.h.b16 %v88
  %v943 = vunpack.c.l.b16 %v89
  %v944 = vunpack.c.h.b16 %v89
  %v945 = vunpack.c.l.b16 %v90
  %v946 = vunpack.c.h.b16 %v90
  %v947 = vunpack.c.l.b16 %v91
  %v948 = vunpack.c.h.b16 %v91
  %v949 = vunpack.c.l.b16 %v92
  %v950 = vunpack.c.h.b16 %v92
  %v951 = vunpack.c.l.b16 %v93
  %v952 = vunpack.c.h.b16 %v93
  %v953 = vunpack.c.l.b16 %v94
  %v954 = vunpack.c.h.b16 %v94
  %v955 = vunpack.c.l.b16 %v95
  %v956 = vunpack.c.h.b16 %v95
  %v957 = vunpack.c.l.b16 %v96
  %v958 = vunpack.c.h.b16 %v96
  %v959 = vunpack.c.l.b16 %v97
  %v960 = vunpack.c.h.b16 %v97
  %v961 = vunpack.c.l.b16 %v98
  %v962 = vunpack.c.h.b16 %v98
  %v963 = vunpack.c.l.b16 %v99
  %v964 = vunpack.c.h.b16 %v99
  %v965 = vunpack.c.l.b16 %v100
  %v966 = vunpack.c.h.b16 %v100
  %v967 = vunpack.c.l.b16 %v101
  %v968 = vunpack.c.h.b16 %v101
  %v969 = vunpack.c.l.b16 %v102
  %v970 = vunpack.c.h.b16 %v102
  %v971 = vunpack.c.l.b16 %v103
  %v972 = vunpack.c.h.b16 %v103
  %v973 = vunpack.c.l.b16 %v104
  %v974 = vunpack.c.h.b16 %v104
  %v975 = vunpack.c.l.b16 %v105
  %v976 = vunpack.c.h.b16 %v105
  %v977 = vunpack.c.l.b16 %v106
  %v978 = vunpack.c.h.b16 %v106
  %v979 = vunpack.c.l.b16 %v107
  %v980 = vunpack.c.h.b16 %v107
  %v981 = vunpack.c.l.b16 %v108
  %v982 = vunpack.c.h.b16 %v108
  %v983 = vunpack.c.l.b16 %v109
  %v984 = vunpack.c.h.b16 %v109
  %v985 = vunpack.c.l.b16 %v110
  %v986 = vunpack.c.h.b16 %v110
  %v987 = vunpack.c.l.b16 %v111
  %v988 = vunpack.c.h.b16 %v111
  %v989 = vunpack.c.l.b16 %v112
  %v990 = vunpack.c.h.b16 %v112
  %v991 = vunpack.c.l.b16 %v113
  %v992 = vunpack.c.h.b16 %v113
  %v993 = vunpack.c.l.b16 %v114
  %v994 = vunpack.c.h.b16 %v114
  %v995 = vunpack.c.l.b16 %v115
  %v996 = vunpack.c.h.b16 %v115
  %v997 = vunpack.c.l.b16 %v116
  %v998 = vunpack.c.h.b16 %v116
  %v999 = vunpack.c.l.b16 %v117
  %v1000 = vunpack.c.h.b16 %v117
  %v1001 = vunpack.c.l.b16 %v118
  %v1002 = vunpack.c.h.b16 %v118
  %v1003 = vunpack.c.l.b16 %v119
  %v1004 = vunpack.c.h.b16 %v119
  %v1005 = vunpack.c.l.b16 %v120
  %v1006 = vunpack.c.h.b16 %v120
  %v1007 = vunpack.c.l.b16 %v121
  %v1008 = vunpack.c.h.b16 %v121
  %v1009 = vunpack.c.l.b16 %v122
  %v1010 = vunpack.c.h.b16 %v122
  %v1011 = vunpack.c.l.b16 %v123
  %v1012 = vunpack.c.h.b16 %v123
  %v1013 = vunpack.c.l.b16 %v124
  %v1014 = vunpack.c.h.b16 %v124
  %v1015 = vunpack.c.l.b16 %v125
  %v1016 = vunpack.c.h.b16 %v125
  %v1017 = vunpack.c.l.b16 %v126
  %v1018 = vunpack.c.h.b16 %v126
  %v1019 = vunpack.c.l.b16 %v127
  %v1020 = vunpack.c.h.b16 %v127
  %v1021 = vunpack.c.l.b16 %v128
  %v1022 = vunpack.c.h.b16 %v128
  %v1023 = vunpack.c.l.b16 %v129
  %v1024 = vunpack.c.h.b16 %v129
  %v1025 = vunpack.c.l.b16 %v130
  %v1026 = vunpack.c.h.b16 %v130
  %v1027 = vunpack.c.l.b16 %v131
  %v1028 = vunpack.c.h.b16 %v131
  %v1029 = vunpack.c.l.b16 %v132
  %v1030 = vunpack.c.h.b16 %v132
  %v1031 = vunpack.c.l.b16 %v133
  %v1032 = vunpack.c.h.b16 %v133
  %v1033 = vunpack.c.l.b16 %v134
  %v1034 = vunpack.c.h.b16 %v134
  %v1035 = vunpack.c.l.b16 %v135
  %v1036 = vunpack.c.h.b16 %v135
  %v1037 = vunpack.c.l.b16 %v136
  %v1038 = vunpack.c.h.b16 %v136
  %v1039 = vunpack.c.l.b16 %v137
  %v1040 = vunpack.c.h.b16 %v137
  %v1041 = vunpack.c.l.b16 %v138
  %v1042 = vunpack.c.h.b16 %v138
  %v1043 = vunpack.c.l.b16 %v139
  %v1044 = vunpack.c.h.b16 %v139
  %v1045 = vunpack.c.l.b16 %v140
  %v1046 = vunpack.c.h.b16 %v140
  %v1047 = vunpack.c.l.b16 %v141
  %v1048 = vunpack.c.h.b16 %v141
  %v1049 = vunpack.c.l.b16 %v142
  %v1050 = vunpack.c.h.b16 %v142
  %v1051 = vunpack.c.l.b16 %v143
  %v1052 = vunpack.c.h.b16 %v143
  %v1053 = vunpack.c.l.b16 %v144
  %v1054 = vunpack.c.h.b16 %v144
  %v1055 = vunpack.c.l.b16 %v145
  %v1056 = vunpack.c.h.b16 %v145
  %v1057 = vunpack.c.l.b16 %v146
  %v1058 = vunpack.c.h.b16 %v146
  %v1059 = vunpack.c.l.b16 %v147
  %v1060 = vunpack.c.h.b16 %v147
  %v1061 = vunpack.c.l.b16 %v148
  %v1062 = vunpack.c.h.b16 %v148
  %v1063 = vunpack.c.l.b16 %v149
  %v1064 = vunpack.c.h.b16 %v149
  %v1065 = vunpack.c.l.b16 %v150
  %v1066 = vunpack.c.h.b16 %v150
  %v1067 = vunpack.c.l.b16 %v151
  %v1068 = vunpack.c.h.b16 %v151
  %v1069 = vunpack.c.l.b16 %v152
  %v1070 = vunpack.c.h.b16 %v152
  %v1071 = vunpack.c.l.b16 %v153
  %v1072 = vunpack.c.h.b16 %v153
  %v1073 = vunpack.c.l.b16 %v154
  %v1074 = vunpack.c.h.b16 %v154
  %v1075 = vunpack.c.l.b16 %v155
  %v1076 = vunpack.c.h.b16 %v155
  %v1077 = vunpack.c.l.b16 %v156
  %v1078 = vunpack.c.h.b16 %v156
  %v1079 = vunpack.c.l.b16 %v157
  %v1080 = vunpack.c.h.b16 %v157
  %v1081 = vunpack.c.l.b16 %v158
  %v1082 = vunpack.c.h.b16 %v158
  %v1083 = vunpack.c.l.b16 %v159
  %v1084 = vunpack.c.h.b16 %v159
  %v1085 = vunpack.c.l.b16 %v160
  %v1086 = vunpack.c.h.b16 %v160
  %v1087 = vunpack.c.l.b16 %v161
  %v1088 = vunpack.c.h.b16 %v161
  %v1089 = vunpack.c.l.b16 %v162
  %v1090 = vunpack.c.h.b16 %v162
  %v1091 = vunpack.c.l.b16 %v163
  %v1092 = vunpack.c.h.b16 %v163
  %v1093 = vunpack.c.l.b16 %v164
  %v1094 = vunpack.c.h.b16 %v164
  %v1095 = vunpack.c.l.b16 %v165
  %v1096 = vunpack.c.h.b16 %v165
  %v1097 = vunpack.c.l.b16 %v166
  %v1098 = vunpack.c.h.b16 %v166
  %v1099 = vunpack.c.l.b16 %v167
  %v1100 = vunpack.c.h.b16 %v167
  %v1101 = vunpack.c.l.b16 %v168
  %v1102 = vunpack.c.h.b16 %v168
  %v1103 = vunpack.c.l.b16 %v169
  %v1104 = vunpack.c.h.b16 %v169
  %v1105 = vunpack.c.l.b16 %v170
  %v1106 = vunpack.c.h.b16 %v170
  %v1107 = vunpack.c.l.b16 %v171
  %v1108 = vunpack.c.h.b16 %v171
  %v1109 = vunpack.c.l.b16 %v172
  %v1110 = vunpack.c.h.b16 %v172
  %v1111 = vunpack.c.l.b16 %v173
  %v1112 = vunpack.c.h.b16 %v173
  %v1113 = vunpack.c.l.b16 %v174
  %v1114 = vunpack.c.h.b16 %v174
  %v1115 = vunpack.c.l.b16 %v175
  %v1116 = vunpack.c.h.b16 %v175
  %v1117 = vunpack.c.l.b16 %v176
  %v1118 = vunpack.c.h.b16 %v176
  %v1119 = vunpack.c.l.b16 %v177
  %v1120 = vunpack.c.h.b16 %v177
  %v1121 = vunpack.c.l.b16 %v178
  %v1122 = vunpack.c.h.b16 %v178
  %v1123 = vunpack.c.l.b16 %v179
  %v1124 = vunpack.c.h.b16 %v179
  %v1125 = vunpack.c.l.b16 %v180
  %v1126 = vunpack.c.h.b16 %v180
  %v1127 = vunpack.c.l.b16 %v181
  %v1128 = vunpack.c.h.b16 %v181
  %v1129 = vunpack.c.l.b16 %v182
  %v1130 = vunpack.c.h.b16 %v182
  %v1131 = vunpack.c.l.b16 %v183
  %v1132 = vunpack.c.h.b16 %v183
  %v1133 = vunpack.c.l.b16 %v184
  %v1134 = vunpack.c.h.b16 %v184
  %v1135 = vunpack.c.l.b16 %v185
  %v1136 = vunpack.c.h.b16 %v185
  %v1137 = vunpack.c.l.b16 %v186
  %v1138 = vunpack.c.h.b16 %v186
  %v1139 = vunpack.c.l.b16 %v187
  %v1140 = vunpack.c.h.b16 %v187
  %v1141 = vunpack.c.l.b16 %v188
  %v1142 = vunpack.c.h.b16 %v188
  %v1143 = vunpack.c.l.b16 %v189
  %v1144 = vunpack.c.h.b16 %v189
  %v1145 = vunpack.c.l.b16 %v190
  %v1146 = vunpack.c.h.b16 %v190
  %v1147 = vunpack.c.l.b16 %v191
  %v1148 = vunpack.c.h.b16 %v191
  %v1149 = vunpack.c.l.b16 %v192
  %v1150 = vunpack.c.h.b16 %v192
  %v1151 = vunpack.c.l.b16 %v193
  %v1152 = vunpack.c.h.b16 %v193
  %v1153 = vunpack.c.l.b16 %v194
  %v1154 = vunpack.c.h.b16 %v194
  %v1155 = vunpack.c.l.b16 %v195
  %v1156 = vunpack.c.h.b16 %v195
  %v1157 = vunpack.c.l.b16 %v196
  %v1158 = vunpack.c.h.b16 %v196
  %v1159 = vunpack.c.l.b16 %v197
  %v1160 = vunpack.c.h.b16 %v197
  %v1161 = vunpack.c.l.b16 %v198
  %v1162 = vunpack.c.h.b16 %v198
  %v1163 = vunpack.c.l.b16 %v199
  %v1164 = vunpack.c.h.b16 %v199
  %v1165 = vunpack.c.l.b16 %v200
  %v1166 = vunpack.c.h.b16 %v200
  %v1167 = vunpack.c.l.b16 %v201
  %v1168 = vunpack.c.h.b16 %v201
  %v1169 = vunpack.c.l.b16 %v202
  %v1170 = vunpack.c.h.b16 %v202
  %v1171 = vunpack.c.l.b16 %v203
  %v1172 = vunpack.c.h.b16 %v203
  %v1173 = vunpack.c.l.b16 %v204
  %v1174 = vunpack.c.h.b16 %v204
  %v1175 = vunpack.c.l.b16 %v205
  %v1176 = vunpack.c.h.b16 %v205
  %v1177 = vunpack.c.l.b16 %v206
  %v1178 = vunpack.c.h.b16 %v206
  %v1179 = vunpack.c.l.b16 %v207
  %v1180 = vunpack.c.h.b16 %v207
  %v1181 = vunpack.c.l.b16 %v208
  %v1182 = vunpack.c.h.b16 %v208
  %v1183 = vunpack.c.l.b16 %v209
  %v1184 = vunpack.c.h.b16 %v209
  %v1185 = vunpack.c.l.b16 %v210
  %v1186 = vunpack.c.h.b16 %v210
  %v1187 = vunpack.c.l.b16 %v211
  %v1188 = vunpack.c.h.b16 %v211
  %v1189 = vunpack.c.l.b16 %v212
  %v1190 = vunpack.c.h.b16 %v212
  %v1191 = vunpack.c.l.b16 %v213
  %v1192 = vunpack.c.h.b16 %v213
  %v1193 = vunpack.c.l.b16 %v214
  %v1194 = vunpack.c.h.b16 %v214
  %v1195 = vunpack.c.l.b16 %v215
  %v1196 = vunpack.c.h.b16 %v215
  %v1197 = vunpack.c.l.b16 %v216
  %v1198 = vunpack.c.h.b16 %v216
  %v1199 = vunpack.c.l.b16 %v217
  %v1200 = vunpack.c.h.b16 %v217
  %v1201 = vunpack.c.l.b16 %v218
  %v1202 = vunpack.c.h.b16 %v218
  %v1203 = vunpack.c.l.b16 %v219
  %v1204 = vunpack.c.h.b16 %v219
  %v1205 = vunpack.c.l.b16 %v220
  %v1206 = vunpack.c.h.b16 %v220
  %v1207 = vunpack.c.l.b16 %v221
  %v1208 = vunpack.c.h.b16 %v221
  %v1209 = vunpack.c.l.b16 %v222
  %v1210 = vunpack.c.h.b16 %v222
  %v1211 = vunpack.c.l.b16 %v223
  %v1212 = vunpack.c.h.b16 %v223
  %v1213 = vunpack.c.l.b16 %v224
  %v1214 = vunpack.c.h.b16 %v224
  %v1215 = vunpack.c.l.b16 %v225
  %v1216 = vunpack.c.h.b16 %v225
  %v1217 = vunpack.c.l.b16 %v226
  %v1218 = vunpack.c.h.b16 %v226
  %v1219 = vunpack.c.l.b16 %v227
  %v1220 = vunpack.c.h.b16 %v227
  %v1221 = vunpack.c.l.b16 %v228
  %v1222 = vunpack.c.h.b16 %v228
  %v1223 = vunpack.c.l.b16 %v229
  %v1224 = vunpack.c.h.b16 %v229
  %v1225 = vunpack.c.l.b16 %v230
  %v1226 = vunpack.c.h.b16 %v230
  %v1227 = vunpack.c.l.b16 %v231
  %v1228 = vunpack.c.h.b16 %v231
  %v1229 = vunpack.c.l.b16 %v232
  %v1230 = vunpack.c.h.b16 %v232
  %v1231 = vunpack.c.l.b16 %v233
  %v1232 = vunpack.c.h.b16 %v233
  %v1233 = vunpack.c.l.b16 %v234
  %v1234 = vunpack.c.h.b16 %v234
  %v1235 = vunpack.c.l.b16 %v235
  %v1236 = vunpack.c.h.b16 %v235
  %v1237 = vunpack.c.l.b16 %v236
  %v1238 = vunpack.c.h.b16 %v236
  %v1239 = vunpack.c.l.b16 %v237
  %v1240 = vunpack.c.h.b16 %v237
  %v1241 = vunpack.c.l.b16 %v238
  %v1242 = vunpack.c.h.b16 %v238
  %v1243 = vunpack.c.l.b16 %v239
  %v1244 = vunpack.c.h.b16 %v239
  %v1245 = vunpack.c.l.b16 %v240
  %v1246 = vunpack.c.h.b16 %v240
  %v1247 = vunpack.c.l.b16 %v241
  %v1248 = vunpack.c.h.b16 %v241
  %v1249 = vunpack.c.l.b16 %v242
  %v1250 = vunpack.c.h.b16 %v242
  %v1251 = vunpack.c.l.b16 %v243
  %v1252 = vunpack.c.h.b16 %v243
  %v1253 = vunpack.c.l.b16 %v244
  %v1254 = vunpack.c.h.b16 %v244
  %v1255 = vunpack.c.l.b16 %v245
  %v1256 = vunpack.c.h.b16 %v245
  %v1257 = vunpack.c.l.b16 %v246
  %v1258 = vunpack.c.h.b16 %v246
  %v1259 = vunpack.c.l.b16 %v247
  %v1260 = vunpack.c.h.b16 %v247
  %v1261 = vunpack.c.l.b16 %v248
  %v1262 = vunpack.c.h.b16 %v248
  %v1263 = vunpack.c.l.b16 %v249
  %v1264 = vunpack.c.h.b16 %v249
  %v1265 = vunpack.c.l.b16 %v250
  %v1266 = vunpack.c.h.b16 %v250
  %v1267 = vunpack.c.l.b16 %v251
  %v1268 = vunpack.c.h.b16 %v251
  %v1269 = vunpack.c.l.b16 %v252
  %v1270 = vunpack.c.h.b16 %v252
  %v1271 = vunpack.c.l.b16 %v253
  %v1272 = vunpack.c.h.b16 %v253
  %v1273 = vunpack.c.l.b16 %v254
  %v1274 = vunpack.c.h.b16 %v254
  %v1275 = vunpack.c.l.b16 %v255
  %v1276 = vunpack.c.h.b16 %v255
  %v1277 = vunpack.c.l.b16 %v256
  %v1278 = vunpack.c.h.b16 %v256
  %v1279 = vunpack.c.l.b16 %v257
  %v1280 = vunpack.c.h.b16 %v257
  %v1281 = vunpack.c.l.b16 %v258
  %v1282 = vunpack.c.h.b16 %v258
  %v1283 = vunpack.c.l.b16 %v259
  %v1284 = vunpack.c.h.b16 %v259
  %v1285 = vunpack.c.l.b16 %v260
  %v1286 = vunpack.c.h.b16 %v260
  %v1287 = vunpack.c.l.b16 %v261
  %v1288 = vunpack.c.h.b16 %v261
  %v1289 = vunpack.c.l.b16 %v262
  %v1290 = vunpack.c.h.b16 %v262
  %v1291 = vunpack.c.l.b16 %v263
  %v1292 = vunpack.c.h.b16 %v263
  %v1293 = vunpack.c.l.b16 %v264
  %v1294 = vunpack.c.h.b16 %v264
  %v1295 = vunpack.c.l.b16 %v265
  %v1296 = vunpack.c.h.b16 %v265
  %v1297 = vunpack.c.l.b16 %v266
  %v1298 = vunpack.c.h.b16 %v266
  %v1299 = vunpack.c.l.b16 %v267
  %v1300 = vunpack.c.h.b16 %v267
  %v1301 = vunpack.c.l.b16 %v268
  %v1302 = vunpack.c.h.b16 %v268
  %v1303 = vunpack.c.l.b16 %v269
  %v1304 = vunpack.c.h.b16 %v269
  %v1305 = vunpack.c.l.b16 %v270
  %v1306 = vunpack.c.h.b16 %v270
  %v1307 = vunpack.c.l.b16 %v271
  %v1308 = vunpack.c.h.b16 %v271
  %v1309 = vunpack.c.l.b16 %v272
  %v1310 = vunpack.c.h.b16 %v272
  %v1311 = vunpack.c.l.b16 %v273
  %v1312 = vunpack.c.h.b16 %v273
  %v1313 = vunpack.c.l.b16 %v274
  %v1314 = vunpack.c.h.b16 %v274
  %v1315 = vunpack.c.l.b16 %v275
  %v1316 = vunpack.c.h.b16 %v275
  %v1317 = vunpack.c.l.b16 %v276
  %v1318 = vunpack.c.h.b16 %v276
  %v1319 = vunpack.c.l.b16 %v277
  %v1320 = vunpack.c.h.b16 %v277
  %v1321 = vunpack.c.l.b16 %v278
  %v1322 = vunpack.c.h.b16 %v278
  %v1323 = vunpack.c.l.b16 %v279
  %v1324 = vunpack.c.h.b16 %v279
  %v1325 = vunpack.c.l.b16 %v280
  %v1326 = vunpack.c.h.b16 %v280
  %v1327 = vunpack.c.l.b16 %v281
  %v1328 = vunpack.c.h.b16 %v281
  %v1329 = vunpack.c.l.b16 %v282
  %v1330 = vunpack.c.h.b16 %v282
  %v1331 = vunpack.c.l.b16 %v283
  %v1332 = vunpack.c.h.b16 %v283
  %v1333 = vunpack.c.l.b16 %v284
  %v1334 = vunpack.c.h.b16 %v284
  %v1335 = vunpack.c.l.b16 %v285
  %v1336 = vunpack.c.h.b16 %v285
  %v1337 = vunpack.c.l.b16 %v286
  %v1338 = vunpack.c.h.b16 %v286
  %v1339 = vunpack.c.l.b16 %v287
  %v1340 = vunpack.c.h.b16 %v287
  %v1341 = vunpack.c.l.b16 %v288
  %v1342 = vunpack.c.h.b16 %v288
  %v1343 = vunpack.c.l.b16 %v289
  %v1344 = vunpack.c.h.b16 %v289
  %v1345 = vunpack.c.l.b16 %v290
  %v1346 = vunpack.c.h.b16 %v290
  %v1347 = vunpack.c.l.b16 %v291
  %v1348 = vunpack.c.h.b16 %v291
  %v1349 = vunpack.c.l.b16 %v292
  %v1350 = vunpack.c.h.b16 %v292
  %v1351 = vunpack.c.l.b16 %v293
  %v1352 = vunpack.c.h.b16 %v293
  %v1353 = vunpack.c.l.b16 %v294
  %v1354 = vunpack.c.h.b16 %v294
  %v1355 = vunpack.c.l.b16 %v295
  %v1356 = vunpack.c.h.b16 %v295
  %v1357 = vunpack.c.l.b16 %v296
  %v1358 = vunpack.c.h.b16 %v296
  %v1359 = vunpack.c.l.b16 %v297
  %v1360 = vunpack.c.h.b16 %v297
  %v1361 = vunpack.c.l.b16 %v298
  %v1362 = vunpack.c.h.b16 %v298
  %v1363 = vunpack.c.l.b16 %v299
  %v1364 = vunpack.c.h.b16 %v299
  %v1365 = vunpack.c.l.b16 %v300
  %v1366 = vunpack.c.h.b16 %v300
  %v1367 = vunpack.c.l.b16 %v301
  %v1368 = vunpack.c.h.b16 %v301
  %v1369 = vunpack.c.l.b16 %v302
  %v1370 = vunpack.c.h.b16 %v302
  %v1371 = vunpack.c.l.b16 %v303
  %v1372 = vunpack.c.h.b16 %v303
  %v1373 = vunpack.c.l.b16 %v304
  %v1374 = vunpack.c.h.b16 %v304
  %v1375 = vunpack.c.l.b16 %v305
  %v1376 = vunpack.c.h.b16 %v305
  %v1377 = vunpack.c.l.b16 %v306
  %v1378 = vunpack.c.h.b16 %v306
  %v1379 = vunpack.c.l.b16 %v307
  %v1380 = vunpack.c.h.b16 %v307
  %v1381 = vunpack.c.l.b16 %v308
  %v1382 = vunpack.c.h.b16 %v308
  %v1383 = vunpack.c.l.b16 %v309
  %v1384 = vunpack.c.h.b16 %v309
  %v1385 = vunpack.c.l.b16 %v310
  %v1386 = vunpack.c.h.b16 %v310
  %v1387 = vunpack.c.l.b16 %v311
  %v1388 = vunpack.c.h.b16 %v311
  %v1389 = vunpack.c.l.b16 %v312
  %v1390 = vunpack.c.h.b16 %v312
  %v1391 = vunpack.c.l.b16 %v313
  %v1392 = vunpack.c.h.b16 %v313
  %v1393 = vunpack.c.l.b16 %v314
  %v1394 = vunpack.c.h.b16 %v314
  %v1395 = vunpack.c.l.b16 %v315
  %v1396 = vunpack.c.h.b16 %v315
  %v1397 = vunpack.c.l.b16 %v316
  %v1398 = vunpack.c.h.b16 %v316
  %v1399 = vunpack.c.l.b16 %v317
  %v1400 = vunpack.c.h.b16 %v317
  %v1401 = vunpack.c.l.b16 %v318
  %v1402 = vunpack.c.h.b16 %v318
  %v1403 = vunpack.c.l.b16 %v319
  %v1404 = vunpack.c.h.b16 %v319
  %v1405 = vunpack.c.l.b16 %v320
  %v1406 = vunpack.c.h.b16 %v320
  %v1407 = vunpack.c.l.b16 %v321
  %v1408 = vunpack.c.h.b16 %v321
  %v1409 = vunpack.c.l.b16 %v322
  %v1410 = vunpack.c.h.b16 %v322
  %v1411 = vunpack.c.l.b16 %v323
  %v1412 = vunpack.c.h.b16 %v323
  %v1413 = vunpack.c.l.b16 %v324
  %v1414 = vunpack.c.h.b16 %v324
  %v1415 = vunpack.c.l.b16 %v325
  %v1416 = vunpack.c.h.b16 %v325
  %v1417 = vunpack.c.l.b16 %v326
  %v1418 = vunpack.c.h.b16 %v326
  %v1419 = vunpack.c.l.b16 %v327
  %v1420 = vunpack.c.h.b16 %v327
  %v1421 = vunpack.c.l.b16 %v328
  %v1422 = vunpack.c.h.b16 %v328
  %v1423 = vunpack.c.l.b16 %v329
  %v1424 = vunpack.c.h.b16 %v329
  %v1425 = vunpack.c.l.b16 %v330
  %v1426 = vunpack.c.h.b16 %v330
  %v1427 = vunpack.c.l.b16 %v331
  %v1428 = vunpack.c.h.b16 %v331
  %v1429 = vunpack.c.l.b16 %v332
  %v1430 = vunpack.c.h.b16 %v332
  %v1431 = vunpack.c.l.b16 %v333
  %v1432 = vunpack.c.h.b16 %v333
  %v1433 = vunpack.c.l.b16 %v334
  %v1434 = vunpack.c.h.b16 %v334
  %v1435 = vunpack.c.l.b16 %v335
  %v1436 = vunpack.c.h.b16 %v335
  %v1437 = vunpack.c.l.b16 %v336
  %v1438 = vunpack.c.h.b16 %v336
  %v1439 = vunpack.c.l.b16 %v337
  %v1440 = vunpack.c.h.b16 %v337
  %v1441 = vunpack.c.l.b16 %v338
  %v1442 = vunpack.c.h.b16 %v338
  %v1443 = vunpack.c.l.b16 %v339
  %v1444 = vunpack.c.h.b16 %v339
  %v1445 = vunpack.c.l.b16 %v340
  %v1446 = vunpack.c.h.b16 %v340
  %v1447 = vunpack.c.l.b16 %v341
  %v1448 = vunpack.c.h.b16 %v341
  %v1449 = vunpack.c.l.b16 %v342
  %v1450 = vunpack.c.h.b16 %v342
  %v1451 = vunpack.c.l.b16 %v343
  %v1452 = vunpack.c.h.b16 %v343
  %v1453 = vunpack.c.l.b16 %v344
  %v1454 = vunpack.c.h.b16 %v344
  %v1455 = vunpack.c.l.b16 %v345
  %v1456 = vunpack.c.h.b16 %v345
  %v1457 = vunpack.c.l.b16 %v346
  %v1458 = vunpack.c.h.b16 %v346
  %v1459 = vunpack.c.l.b16 %v347
  %v1460 = vunpack.c.h.b16 %v347
  %v1461 = vunpack.c.l.b16 %v348
  %v1462 = vunpack.c.h.b16 %v348
  %v1463 = vunpack.c.l.b16 %v349
  %v1464 = vunpack.c.h.b16 %v349
  %v1465 = vunpack.c.l.b16 %v350
  %v1466 = vunpack.c.h.b16 %v350
  %v1467 = vunpack.c.l.b16 %v351
  %v1468 = vunpack.c.h.b16 %v351
  %v1469 = vunpack.c.l.b16 %v352
  %v1470 = vunpack.c.h.b16 %v352
  %v1471 = vunpack.c.l.b16 %v353
  %v1472 = vunpack.c.h.b16 %v353
  %v1473 = vunpack.c.l.b16 %v354
  %v1474 = vunpack.c.h.b16 %v354
  %v1475 = vunpack.c.l.b16 %v355
  %v1476 = vunpack.c.h.b16 %v355
  %v1477 = vunpack.c.l.b16 %v356
  %v1478 = vunpack.c.h.b16 %v356
  %v1479 = vunpack.c.l.b16 %v357
  %v1480 = vunpack.c.h.b16 %v357
  %v1481 = vunpack.c.l.b16 %v358
  %v1482 = vunpack.c.h.b16 %v358
  %v1483 = vunpack.c.l.b16 %v359
  %v1484 = vunpack.c.h.b16 %v359
  %v1485 = vunpack.c.l.b16 %v360
  %v1486 = vunpack.c.h.b16 %v360
  %v1487 = vunpack.c.l.b16 %v361
  %v1488 = vunpack.c.h.b16 %v361
  %v1489 = vunpack.c.l.b16 %v362
  %v1490 = vunpack.c.h.b16 %v362
  %v1491 = vunpack.c.l.b16 %v363
  %v1492 = vunpack.c.h.b16 %v363
  %v1493 = vunpack.c.l.b16 %v364
  %v1494 = vunpack.c.h.b16 %v364
  %v1495 = vunpack.c.l.b16 %v365
  %v1496 = vunpack.c.h.b16 %v365
  %v1497 = vunpack.c.l.b16 %v366
  %v1498 = vunpack.c.h.b16 %v366
  %v1499 = vunpack.c.l.b16 %v367
  %v1500 = vunpack.c.h.b16 %v367
  %v1501 = vunpack.c.l.b16 %v368
  %v1502 = vunpack.c.h.b16 %v368
  %v1503 = vunpack.c.l.b16 %v369
  %v1504 = vunpack.c.h.b16 %v369
  %v1505 = vunpack.c.l.b16 %v370
  %v1506 = vunpack.c.h.b16 %v370
  %v1507 = vunpack.c.l.b16 %v371
  %v1508 = vunpack.c.h.b16 %v371
  %v1509 = vunpack.c.l.b16 %v372
  %v1510 = vunpack.c.h.b16 %v372
  %v1511 = vunpack.c.l.b16 %v373
  %v1512 = vunpack.c.h.b16 %v373
  %v1513 = vunpack.c.l.b16 %v374
  %v1514 = vunpack.c.h.b16 %v374
  %v1515 = vunpack.c.l.b16 %v375
  %v1516 = vunpack.c.h.b16 %v375
  %v1517 = vunpack.c.l.b16 %v376
  %v1518 = vunpack.c.h.b16 %v376
  %v1519 = vunpack.c.l.b16 %v377
  %v1520 = vunpack.c.h.b16 %v377
  %v1521 = vunpack.c.l.b16 %v378
  %v1522 = vunpack.c.h.b16 %v378
  %v1523 = vunpack.c.l.b16 %v379
  %v1524 = vunpack.c.h.b16 %v379
  %v1525 = vunpack.c.l.b16 %v380
  %v1526 = vunpack.c.h.b16 %v380
  %v1527 = vunpack.c.l.b16 %v381
  %v1528 = vunpack.c.h.b16 %v381
  %v1529 = vunpack.c.l.b16 %v382
  %v1530 = vunpack.c.h.b16 %v382
  %v1531 = vunpack.c.l.b16 %v383
  %v1532 = vunpack.c.h.b16 %v383
  %v1533 = vunpack.c.l.b16 %v384
  %v1534 = vunpack.c.h.b16 %v384
  %v1535 = vunpack.c.l.b16 %v385
  %v1536 = vunpack.c.h.b16 %v385
  %v1537 = vunpack.c.l.b16 %v386
  %v1538 = vunpack.c.h.b16 %v386
  %v1539 = vunpack.c.l.b16 %v387
  %v1540 = vunpack.c.h.b16 %v387
  %v1541 = vunpack.c.l.b16 %v388
  %v1542 = vunpack.c.h.b16 %v388
  %v1543 = vunpack.c.l.b16 %v389
  %v1544 = vunpack.c.h.b16 %v389
  %v1545 = vunpack.c.l.b16 %v390
  %v1546 = vunpack.c.h.b16 %v390
  %v1547 = vunpack.c.l.b16 %v391
  %v1548 = vunpack.c.h.b16 %v391
  %v1549 = vunpack.c.l.b16 %v392
  %v1550 = vunpack.c.h.b16 %v392
  %v1551 = vunpack.c.l.b16 %v393
  %v1552 = vunpack.c.h.b16 %v393
  %v1553 = vunpack.c.l.b16 %v394
  %v1554 = vunpack.c.h.b16 %v394
  %v1555 = vunpack.c.l.b16 %v395
  %v1556 = vunpack.c.h.b16 %v395
  %v1557 = vunpack.c.l.b16 %v396
  %v1558 = vunpack.c.h.b16 %v396
  %v1559 = vunpack.c.l.b16 %v397
  %v1560 = vunpack.c.h.b16 %v397
  %v1561 = vunpack.c.l.b16 %v398
  %v1562 = vunpack.c.h.b16 %v398
  %v1563 = vunpack.c.l.b16 %v399
  %v1564 = vunpack.c.h.b16 %v399
  %v1565 = vunpack.c.l.b16 %v400
  %v1566 = vunpack.c.h.b16 %v400
  %v1567 = vunpack.c.l.b16 %v401
  %v1568 = vunpack.c.h.b16 %v401
  %v1569 = vunpack.c.l.b16 %v402
  %v1570 = vunpack.c.h.b16 %v402
  %v1571 = vunpack.c.l.b16 %v403
  %v1572 = vunpack.c.h.b16 %v403
  %v1573 = vunpack.c.l.b16 %v404
  %v1574 = vunpack.c.h.b16 %v404
  %v1575 = vunpack.c.l.b16 %v405
  %v1576 = vunpack.c.h.b16 %v405
  %v1577 = vunpack.c.l.b16 %v406
  %v1578 = vunpack.c.h.b16 %v406
  %v1579 = vunpack.c.l.b16 %v407
  %v1580 = vunpack.c.h.b16 %v407
  %v1581 = vunpack.c.l.b16 %v408
  %v1582 = vunpack.c.h.b16 %v408
  %v1583 = vunpack.c.l.b16 %v409
  %v1584 = vunpack.c.h.b16 %v409
  %v1585 = vunpack.c.l.b16 %v410
  %v1586 = vunpack.c.h.b16 %v410
  %v1587 = vunpack.c.l.b16 %v411
  %v1588 = vunpack.c.h.b16 %v411
  %v1589 = vunpack.c.l.b16 %v412
  %v1590 = vunpack.c.h.b16 %v412
  %v1591 = vunpack.c.l.b16 %v413
  %v1592 = vunpack.c.h.b16 %v413
  %v1593 = vunpack.c.l.b16 %v414
  %v1594 = vunpack.c.h.b16 %v414
  %v1595 = vunpack.c.l.b16 %v415
  %v1596 = vunpack.c.h.b16 %v415
  %v1597 = vunpack.c.l.b16 %v416
  %v1598 = vunpack.c.h.b16 %v416
  %v1599 = vunpack.c.l.b16 %v417
  %v1600 = vunpack.c.h.b16 %v417
  %v1601 = vunpack.c.l.b16 %v418
  %v1602 = vunpack.c.h.b16 %v418
  %v1603 = vunpack.c.l.b16 %v419
  %v1604 = vunpack.c.h.b16 %v419
  %v1605 = vunpack.c.l.b16 %v420
  %v1606 = vunpack.c.h.b16 %v420
  %v1607 = vunpack.c.l.b16 %v421
  %v1608 = vunpack.c.h.b16 %v421
  %v1609 = vunpack.c.l.b16 %v422
  %v1610 = vunpack.c.h.b16 %v422
  %v1611 = vunpack.c.l.b16 %v423
  %v1612 = vunpack.c.h.b16 %v423
  %v1613 = vunpack.c.l.b16 %v424
  %v1614 = vunpack.c.h.b16 %v424
  %v1615 = vunpack.c.l.b16 %v425
  %v1616 = vunpack.c.h.b16 %v425
  %v1617 = vunpack.c.l.b16 %v426
  %v1618 = vunpack.c.h.b16 %v426
  %v1619 = vunpack.c.l.b16 %v427
  %v1620 = vunpack.c.h.b16 %v427
  %v1621 = vunpack.c.l.b16 %v428
  %v1622 = vunpack.c.h.b16 %v428
  %v1623 = vunpack.c.l.b16 %v429
  %v1624 = vunpack.c.h.b16 %v429
  %v1625 = vunpack.c.l.b16 %v430
  %v1626 = vunpack.c.h.b16 %v430
  %v1627 = vunpack.c.l.b16 %v431
  %v1628 = vunpack.c.h.b16 %v431
  %v1629 = vunpack.c.l.b16 %v432
  %v1630 = vunpack.c.h.b16 %v432
  %v1631 = vpack.c.b16 %v851, %v847
  %v1632 = vpack.c.b16 %v852, %v848
  %v1633 = vpack.c.b16 %v853, %v849
  %v1634 = vpack.c.b16 %v854, %v850
  %v1635 = vpack.c.b16 %v859, %v855
  %v1636 = vpack.c.b16 %v860, %v856
  %v1637 = vpack.c.b16 %v861, %v857
  %v1638 = vpack.c.b16 %v862, %v858
  %v1639 = vpack.c.b16 %v867, %v863
  %v1640 = vpack.c.b16 %v868, %v864
  %v1641 = vpack.c.b16 %v869, %v865
  %v1642 = vpack.c.b16 %v870, %v866
  %v1643 = vpack.c.b16 %v875, %v871
  %v1644 = vpack.c.b16 %v876, %v872
  %v1645 = vpack.c.b16 %v877, %v873
  %v1646 = vpack.c.b16 %v878, %v874
  %v1647 = vpack.c.b16 %v883, %v879
  %v1648 = vpack.c.b16 %v884, %v880
  %v1649 = vpack.c.b16 %v885, %v881
  %v1650 = vpack.c.b16 %v886, %v882
  %v1651 = vpack.c.b16 %v891, %v887
  %v1652 = vpack.c.b16 %v892, %v888
  %v1653 = vpack.c.b16 %v893, %v889
  %v1654 = vpack.c.b16 %v894, %v890
  %v1655 = vpack.c.b16 %v899, %v895
  %v1656 = vpack.c.b16 %v900, %v896
  %v1657 = vpack.c.b16 %v901, %v897
  %v1658 = vpack.c.b16 %v902, %v898
  %v1659 = vpack.c.b16 %v907, %v903
  %v1660 = vpack.c.b16 %v908, %v904
  %v1661 = vpack.c.b16 %v909, %v905
  %v1662 = vpack.c.b16 %v910, %v906
  %v1663 = vpack.c.b16 %v915, %v911
  %v1664 = vpack.c.b16 %v916, %v912
  %v1665 = vpack.c.b16 %v917, %v913
  %v1666 = vpack.c.b16 %v918, %v914
  %v1667 = vpack.c.b16 %v923, %v919
  %v1668 = vpack.c.b16 %v924, %v920
  %v1669 = vpack.c.b16 %v925, %v921
  %v1670 = vpack.c.b16 %v926, %v922
  %v1671 = vpack.c.b16 %v931, %v927
  %v1672 = vpack.c.b16 %v932, %v928
  %v1673 = vpack.c.b16 %v933, %v929
  %v1674 = vpack.c.b16 %v934, %v930
  %v1675 = vpack.c.b16 %v939, %v935
  %v1676 = vpack.c.b16 %v940, %v936
  %v1677 = vpack.c.b16 %v941, %v937
  %v1678 = vpack.c.b16 %v942, %v938
  %v1679 = vpack.c.b16 %v947, %v943
  %v1680 = vpack.c.b16 %v948, %v944
  %v1681 = vpack.c.b16 %v949, %v945
  %v1682 = vpack.c.b16 %v950, %v946
  %v1683 = vpack.c.b16 %v955, %v951
  %v1684 = vpack.c.b16 %v956, %v952
  %v1685 = vpack.c.b16 %v957, %v953
  %v1686 = vpack.c.b16 %v958, %v954
  %v1687 = vpack.c.b16 %v963, %v959
  %v1688 = vpack.c.b16 %v964, %v960
  %v1689 = vpack.c.b16 %v965, %v961
  %v1690 = vpack.c.b16 %v966, %v962
  %v1691 = vpack.c.b16 %v971, %v967
  %v1692 = vpack.c.b16 %v972, %v968
  %v1693 = vpack.c.b16 %v973, %v969
  %v1694 = vpack.c.b16 %v974, %v970
  %v1695 = vpack.c.b16 %v979, %v975
  %v1696 = vpack.c.b16 %v980, %v976
  %v1697 = vpack.c.b16 %v981, %v977
  %v1698 = vpack.c.b16 %v982, %v978
  %v1699 = vpack.c.b16 %v987, %v983
  %v1700 = vpack.c.b16 %v988, %v984
  %v1701 = vpack.c.b16 %v989, %v985
  %v1702 = vpack.c.b16 %v990, %v986
  %v1703 = vpack.c.b16 %v995, %v991
  %v1704 = vpack.c.b16 %v996, %v992
  %v1705 = vpack.c.b16 %v997, %v993
  %v1706 = vpack.c.b16 %v998, %v994
  %v1707 = vpack.c.b16 %v1003, %v999
  %v1708 = vpack.c.b16 %v1004, %v1000
  %v1709 = vpack.c.b16 %v1005, %v1001
  %v1710 = vpack.c.b16 %v1006, %v1002
  %v1711 = vpack.c.b16 %v1011, %v1007
  %v1712 = vpack.c.b16 %v1012, %v1008
  %v1713 = vpack.c.b16 %v1013, %v1009
  %v1714 = vpack.c.b16 %v1014, %v1010
  %v1715 = vpack.c.b16 %v1019, %v1015
  %v1716 = vpack.c.b16 %v1020, %v1016
  %v1717 = vpack.c.b16 %v1021, %v1017
  %v1718 = vpack.c.b16 %v1022, %v1018
  %v1719 = vpack.c.b16 %v1027, %v1023
  %v1720 = vpack.c.b16 %v1028, %v1024
  %v1721 = vpack.c.b16 %v1029, %v1025
  %v1722 = vpack.c.b16 %v1030, %v1026
  %v1723 = vpack.c.b16 %v1035, %v1031
  %v1724 = vpack.c.b16 %v1036, %v1032
  %v1725 = vpack.c.b16 %v1037, %v1033
  %v1726 = vpack.c.b16 %v1038, %v1034
  %v1727 = vpack.c.b16 %v1043, %v1039
  %v1728 = vpack.c.b16 %v1044, %v1040
  %v1729 = vpack.c.b16 %v1045, %v1041
  %v1730 = vpack.c.b16 %v1046, %v1042
  %v1731 = vpack.c.b16 %v1051, %v1047
  %v1732 = vpack.c.b16 %v1052, %v1048
  %v1733 = vpack.c.b16 %v1053, %v1049
  %v1734 = vpack.c.b16 %v1054, %v1050
  %v1735 = vpack.c.b16 %v1059, %v1055
  %v1736 = vpack.c.b16 %v1060, %v1056
  %v1737 = vpack.c.b16 %v1061, %v1057
  %v1738 = vpack.c.b16 %v1062, %v1058
  %v1739 = vpack.c.b16 %v1067, %v1063
  %v1740 = vpack.c.b16 %v1068, %v1064
  %v1741 = vpack.c.b16 %v1069, %v1065
  %v1742 = vpack.c.b16 %v1070, %v1066
  %v1743 = vpack.c.b16 %v1075, %v1071
  %v1744 = vpack.c.b16 %v1076, %v1072
  %v1745 = vpack.c.b16 %v1077, %v1073
  %v1746 = vpack.c.b16 %v1078, %v1074
  %v1747 = vpack.c.b16 %v1083, %v1079
  %v1748 = vpack.c.b16 %v1084, %v1080
  %v1749 = vpack.c.b16 %v1085, %v1081
  %v1750 = vpack.c.b16 %v1086, %v1082
  %v1751 = vpack.c.b16 %v1091, %v1087
  %v1752 = vpack.c.b16 %v1092, %v1088
  %v1753 = vpack.c.b16 %v1093, %v1089
  %v1754 = vpack.c.b16 %v1094, %v1090
  %v1755 = vpack.c.b16 %v1099, %v1095
  %v1756 = vpack.c.b16 %v1100, %v1096
  %v1757 = vpack.c.b16 %v1101, %v1097
  %v1758 = vpack.c.b16 %v1102, %v1098
  %v1759 = vpack.c.b16 %v1107, %v1103
  %v1760 = vpack.c.b16 %v1108, %v1104
  %v1761 = vpack.c.b16 %v1109, %v1105
  %v1762 = vpack.c.b16 %v1110, %v1106
  %v1763 = vpack.c.b16 %v1115, %v1111
  %v1764 = vpack.c.b16 %v1116, %v1112
  %v1765 = vpack.c.b16 %v1117, %v1113
  %v1766 = vpack.c.b16 %v1118, %v1114
  %v1767 = vpack.c.b16 %v1123, %v1119
  %v1768 = vpack.c.b16 %v1124, %v1120
  %v1769 = vpack.c.b16 %v1125, %v1121
  %v1770 = vpack.c.b16 %v1126, %v1122
  %v1771 = vpack.c.b16 %v1131, %v1127
  %v1772 = vpack.c.b16 %v1132, %v1128
  %v1773 = vpack.c.b16 %v1133, %v1129
  %v1774 = vpack.c.b16 %v1134, %v1130
  %v1775 = vpack.c.b16 %v1139, %v1135
  %v1776 = vpack.c.b16 %v1140, %v1136
  %v1777 = vpack.c.b16 %v1141, %v1137
  %v1778 = vpack.c.b16 %v1142, %v1138
  %v1779 = vpack.c.b16 %v1147, %v1143
  %v1780 = vpack.c.b16 %v1148, %v1144
  %v1781 = vpack.c.b16 %v1149, %v1145
  %v1782 = vpack.c.b16 %v1150, %v1146
  %v1783 = vpack.c.b16 %v1155, %v1151
  %v1784 = vpack.c.b16 %v1156, %v1152
  %v1785 = vpack.c.b16 %v1157, %v1153
  %v1786 = vpack.c.b16 %v1158, %v1154
  %v1787 = vpack.c.b16 %v1163, %v1159
  %v1788 = vpack.c.b16 %v1164, %v1160
  %v1789 = vpack.c.b16 %v1165, %v1161
  %v1790 = vpack.c.b16 %v1166, %v1162
  %v1791 = vpack.c.b16 %v1171, %v1167
  %v1792 = vpack.c.b16 %v1172, %v1168
  %v1793 = vpack.c.b16 %v1173, %v1169
  %v1794 = vpack.c.b16 %v1174, %v1170
  %v1795 = vpack.c.b16 %v1179, %v1175
  %v1796 = vpack.c.b16 %v1180, %v1176
  %v1797 = vpack.c.b16 %v1181, %v1177
  %v1798 = vpack.c.b16 %v1182, %v1178
  %v1799 = vpack.c.b16 %v1187, %v1183
  %v1800 = vpack.c.b16 %v1188, %v1184
  %v1801 = vpack.c.b16 %v1189, %v1185
  %v1802 = vpack.c.b16 %v1190, %v1186
  %v1803 = vpack.c.b16 %v1195, %v1191
  %v1804 = vpack.c.b16 %v1196, %v1192
  %v1805 = vpack.c.b16 %v1197, %v1193
  %v1806 = vpack.c.b16 %v1198, %v1194
  %v1807 = vpack.c.b16 %v1203, %v1199
  %v1808 = vpack.c.b16 %v1204, %v1200
  %v1809 = vpack.c.b16 %v1205, %v1201
  %v1810 = vpack.c.b16 %v1206, %v1202
  %v1811 = vpack.c.b16 %v1211, %v1207
  %v1812 = vpack.c.b16 %v1212, %v1208
  %v1813 = vpack.c.b16 %v1213, %v1209
  %v1814 = vpack.c.b16 %v1214, %v1210
  %v1815 = vpack.c.b16 %v1219, %v1215
  %v1816 = vpack.c.b16 %v1220, %v1216
  %v1817 = vpack.c.b16 %v1221, %v1217
  %v1818 = vpack.c.b16 %v1222, %v1218
  %v1819 = vpack.c.b16 %v1227, %v1223
  %v1820 = vpack.c.b16 %v1228, %v1224
  %v1821 = vpack.c.b16 %v1229, %v1225
  %v1822 = vpack.c.b16 %v1230, %v1226
  %v1823 = vpack.c.b16 %v1235, %v1231
  %v1824 = vpack.c.b16 %v1236, %v1232
  %v1825 = vpack.c.b16 %v1237, %v1233
  %v1826 = vpack.c.b16 %v1238, %v1234
  %v1827 = vpack.c.b16 %v1243, %v1239
  %v1828 = vpack.c.b16 %v1244, %v1240
  %v1829 = vpack.c.b16 %v1245, %v1241
  %v1830 = vpack.c.b16 %v1246, %v1242
  %v1831 = vpack.c.b16 %v1251, %v1247
  %v1832 = vpack.c.b16 %v1252, %v1248
  %v1833 = vpack.c.b16 %v1253, %v1249
  %v1834 = vpack.c.b16 %v1254, %v1250
  %v1835 = vpack.c.b16 %v1259, %v1255
  %v1836 = vpack.c.b16 %v1260, %v1256
  %v1837 = vpack.c.b16 %v1261, %v1257
  %v1838 = vpack.c.b16 %v1262, %v1258
  %v1839 = vpack.c.b16 %v1267, %v1263
  %v1840 = vpack.c.b16 %v1268, %v1264
  %v1841 = vpack.c.b16 %v1269, %v1265
  %v1842 = vpack.c.b16 %v1270, %v1266
  %v1843 = vpack.c.b16 %v1275, %v1271
  %v1844 = vpack.c.b16 %v1276, %v1272
  %v1845 = vpack.c.b16 %v1277, %v1273
  %v1846 = vpack.c.b16 %v1278, %v1274
  %v1847 = vpack.c.b16 %v1283, %v1279
  %v1848 = vpack.c.b16 %v1284, %v1280
  %v1849 = vpack.c.b16 %v1285, %v1281
  %v1850 = vpack.c.b16 %v1286, %v1282
  %v1851 = vpack.c.b16 %v1291, %v1287
  %v1852 = vpack.c.b16 %v1292, %v1288
  %v1853 = vpack.c.b16 %v1293, %v1289
  %v1854 = vpack.c.b16 %v1294, %v1290
  %v1855 = vpack.c.b16 %v1299, %v1295
  %v1856 = vpack.c.b16 %v1300, %v1296
  %v1857 = vpack.c.b16 %v1301, %v1297
  %v1858 = vpack.c.b16 %v1302, %v1298
  %v1859 = vpack.c.b16 %v1307, %v1303
  %v1860 = vpack.c.b16 %v1308, %v1304
  %v1861 = vpack.c.b16 %v1309, %v1305
  %v1862 = vpack.c.b16 %v1310, %v1306
  %v1863 = vpack.c.b16 %v1315, %v1311
  %v1864 = vpack.c.b16 %v1316, %v1312
  %v1865 = vpack.c.b16 %v1317, %v1313
  %v1866 = vpack.c.b16 %v1318, %v1314
  %v1867 = vpack.c.b16 %v1323, %v1319
  %v1868 = vpack.c.b16 %v1324, %v1320
  %v1869 = vpack.c.b16 %v1325, %v1321
  %v1870 = vpack.c.b16 %v1326, %v1322
  %v1871 = vpack.c.b16 %v1331, %v1327
  %v1872 = vpack.c.b16 %v1332, %v1328
  %v1873 = vpack.c.b16 %v1333, %v1329
  %v1874 = vpack.c.b16 %v1334, %v1330
  %v1875 = vpack.c.b16 %v1339, %v1335
  %v1876 = vpack.c.b16 %v1340, %v1336
  %v1877 = vpack.c.b16 %v1341, %v1337
  %v1878 = vpack.c.b16 %v1342, %v1338
  %v1879 = vpack.c.b16 %v1347, %v1343
  %v1880 = vpack.c.b16 %v1348, %v1344
  %v1881 = vpack.c.b16 %v1349, %v1345
  %v1882 = vpack.c.b16 %v1350, %v1346
  %v1883 = vpack.c.b16 %v1355, %v1351
  %v1884 = vpack.c.b16 %v1356, %v1352
  %v1885 = vpack.c.b16 %v1357, %v1353
  %v1886 = vpack.c.b16 %v1358, %v1354
  %v1887 = vpack.c.b16 %v1363, %v1359
  %v1888 = vpack.c.b16 %v1364, %v1360
  %v1889 = vpack.c.b16 %v1365, %v1361
  %v1890 = vpack.c.b16 %v1366, %v1362
  %v1891 = vpack.c.b16 %v1371, %v1367
  %v1892 = vpack.c.b16 %v1372, %v1368
  %v1893 = vpack.c.b16 %v1373, %v1369
  %v1894 = vpack.c.b16 %v1374, %v1370
  %v1895 = vpack.c.b16 %v1379, %v1375
  %v1896 = vpack.c.b16 %v1380, %v1376
  %v1897 = vpack.c.b16 %v1381, %v1377
  %v1898 = vpack.c.b16 %v1382, %v1378
  %v1899 = vpack.c.b16 %v1387, %v1383
  %v1900 = vpack.c.b16 %v1388, %v1384
  %v1901 = vpack.c.b16 %v1389, %v1385
  %v1902 = vpack.c.b16 %v1390, %v1386
  %v1903 = vpack.c.b16 %v1395, %v1391
  %v1904 = vpack.c.b16 %v1396, %v1392
  %v1905 = vpack.c.b16 %v1397, %v1393
  %v1906 = vpack.c.b16 %v1398, %v1394
  %v1907 = vpack.c.b16 %v1403, %v1399
  %v1908 = vpack.c.b16 %v1404, %v1400
  %v1909 = vpack.c.b16 %v1405, %v1401
  %v1910 = vpack.c.b16 %v1406, %v1402
  %v1911 = vpack.c.b16 %v1411, %v1407
  %v1912 = vpack.c.b16 %v1412, %v1408
  %v1913 = vpack.c.b16 %v1413, %v1409
  %v1914 = vpack.c.b16 %v1414, %v1410
  %v1915 = vpack.c.b16 %v1419, %v1415
  %v1916 = vpack.c.b16 %v1420, %v1416
  %v1917 = vpack.c.b16 %v1421, %v1417
  %v1918 = vpack.c.b16 %v1422, %v1418
  %v1919 = vpack.c.b16 %v1427, %v1423
  %v1920 = vpack.c.b16 %v1428, %v1424
  %v1921 = vpack.c.b16 %v1429, %v1425
  %v1922 = vpack.c.b16 %v1430, %v1426
  %v1923 = vpack.c.b16 %v1435, %v1431
  %v1924 = vpack.c.b16 %v1436, %v1432
  %v1925 = vpack.c.b16 %v1437, %v1433
  %v1926 = vpack.c.b16 %v1438, %v1434
  %v1927 = vpack.c.b16 %v1443, %v1439
  %v1928 = vpack.c.b16 %v1444, %v1440
  %v1929 = vpack.c.b16 %v1445, %v1441
  %v1930 = vpack.c.b16 %v1446, %v1442
  %v1931 = vpack.c.b16 %v1451, %v1447
  %v1932 = vpack.c.b16 %v1452, %v1448
  %v1933 = vpack.c.b16 %v1453, %v1449
  %v1934 = vpack.c.b16 %v1454, %v1450
  %v1935 = vpack.c.b16 %v1459, %v1455
  %v1936 = vpack.c.b16 %v1460, %v1456
  %v1937 = vpack.c.b16 %v1461, %v1457
  %v1938 = vpack.c.b16 %v1462, %v1458
  %v1939 = vpack.c.b16 %v1467, %v1463
  %v1940 = vpack.c.b16 %v1468, %v1464
  %v1941 = vpack.c.b16 %v1469, %v1465
  %v1942 = vpack.c.b16 %v1470, %v1466
  %v1943 = vpack.c.b16 %v1475, %v1471
  %v1944 = vpack.c.b16 %v1476, %v1472
  %v1945 = vpack.c.b16 %v1477, %v1473
  %v1946 = vpack.c.b16 %v1478, %v1474
  %v1947 = vpack.c.b16 %v1483, %v1479
  %v1948 = vpack.c.b16 %v1484, %v1480
  %v1949 = vpack.c.b16 %v1485, %v1481
  %v1950 = vpack.c.b16 %v1486, %v1482
  %v1951 = vpack.c.b16 %v1491, %v1487
  %v1952 = vpack.c.b16 %v1492, %v1488
  %v1953 = vpack.c.b16 %v1493, %v1489
  %v1954 = vpack.c.b16 %v1494, %v1490
  %v1955 = vpack.c.b16 %v1499, %v1495
  %v1956 = vpack.c.b16 %v1500, %v1496
  %v1957 = vpack.c.b16 %v1501, %v1497
  %v1958 = vpack.c.b16 %v1502, %v1498
  %v1959 = vpack.c.b16 %v1507, %v1503
  %v1960 = vpack.c.b16 %v1508, %v1504
  %v1961 = vpack.c.b16 %v1509, %v1505
  %v1962 = vpack.c.b16 %v1510, %v1506
  %v1963 = vpack.c.b16 %v1515, %v1511
  %v1964 = vpack.c.b16 %v1516, %v1512
  %v1965 = vpack.c.b16 %v1517, %v1513
  %v1966 = vpack.c.b16 %v1518, %v1514
  %v1967 = vpack.c.b16 %v1523, %v1519
  %v1968 = vpack.c.b16 %v1524, %v1520
  %v1969 = vpack.c.b16 %v1525, %v1521
  %v1970 = vpack.c.b16 %v1526, %v1522
  %v1971 = vpack.c.b16 %v1531, %v1527
  %v1972 = vpack.c.b16 %v1532, %v1528
  %v1973 = vpack.c.b16 %v1533, %v1529
  %v1974 = vpack.c.b16 %v1534, %v1530
  %v1975 = vpack.c.b16 %v1539, %v1535
  %v1976 = vpack.c.b16 %v1540, %v1536
  %v1977 = vpack.c.b16 %v1541, %v1537
  %v1978 = vpack.c.b16 %v1542, %v1538
  %v1979 = vpack.c.b16 %v1547, %v1543
  %v1980 = vpack.c.b16 %v1548, %v1544
  %v1981 = vpack.c.b16 %v1549, %v1545
  %v1982 = vpack.c.b16 %v1550, %v1546
  %v1983 = vpack.c.b16 %v1555, %v1551
  %v1984 = vpack.c.b16 %v1556, %v1552
  %v1985 = vpack.c.b16 %v1557, %v1553
  %v1986 = vpack.c.b16 %v1558, %v1554
  %v1987 = vpack.c.b16 %v1563, %v1559
  %v1988 = vpack.c.b16 %v1564, %v1560
  %v1989 = vpack.c.b16 %v1565, %v1561
  %v1990 = vpack.c.b16 %v1566, %v1562
  %v1991 = vpack.c.b16 %v1571, %v1567
  %v1992 = vpack.c.b16 %v1572, %v1568
  %v1993 = vpack.c.b16 %v1573, %v1569
  %v1994 = vpack.c.b16 %v1574, %v1570
  %v1995 = vpack.c.b16 %v1579, %v1575
  %v1996 = vpack.c.b16 %v1580, %v1576
  %v1997 = vpack.c.b16 %v1581, %v1577
  %v1998 = vpack.c.b16 %v1582, %v1578
  %v1999 = vpack.c.b16 %v1587, %v1583
  %v2000 = vpack.c.b16 %v1588, %v1584
  %v2001 = vpack.c.b16 %v1589, %v1585
  %v2002 = vpack.c.b16 %v1590, %v1586
  %v2003 = vpack.c.b16 %v1595, %v1591
  %v2004 = vpack.c.b16 %v1596, %v1592
  %v2005 = vpack.c.b16 %v1597, %v1593
  %v2006 = vpack.c.b16 %v1598, %v1594
  %v2007 = vpack.c.b16 %v1603, %v1599
  %v2008 = vpack.c.b16 %v1604, %v1600
  %v2009 = vpack.c.b16 %v1605, %v1601
  %v2010 = vpack.c.b16 %v1606, %v1602
  %v2011 = vpack.c.b16 %v1611, %v1607
  %v2012 = vpack.c.b16 %v1612, %v1608
  %v2013 = vpack.c.b16 %v1613, %v1609
  %v2014 = vpack.c.b16 %v1614, %v1610
  %v2015 = vpack.c.b16 %v1619, %v1615
  %v2016 = vpack.c.b16 %v1620, %v1616
  %v2017 = vpack.c.b16 %v1621, %v1617
  %v2018 = vpack.c.b16 %v1622, %v1618
  %v2019 = vpack.c.b16 %v1627, %v1623
  %v2020 = vpack.c.b16 %v1628, %v1624
  %v2021 = vpack.c.b16 %v1629, %v1625
  %v2022 = vpack.c.b16 %v1630, %v1626
  %vm2415 = vcmask 261120
  %v2417 = vsel %vm2415, %v40, 0
  %2419 = vmatprep.subr.bf16.mxu0 %v1632
  %2420 = vmatpush1.bf16.msra.mxu0 %v1631
  %2421 = vmatprep.subr.bf16.mxu0 %v1636
  %2422 = vmatpush1.bf16.msra.mxu0 %v1635
  %2423 = vmatprep.subr.bf16.mxu0 %v1640
  %2424 = vmatpush1.bf16.msra.mxu0 %v1639
  %2425 = vmatprep.subr.bf16.mxu0 %v1644
  %2426 = vmatpush1.bf16.msra.mxu0 %v1643
  %2427 = vmatprep.subr.bf16.mxu0 %v1648
  %2428 = vmatpush1.bf16.msra.mxu0 %v1647
  %2429 = vmatprep.subr.bf16.mxu0 %v1652
  %2430 = vmatpush1.bf16.msra.mxu0 %v1651
  %2431 = vmatprep.subr.bf16.mxu0 %v1656
  %2432 = vmatpush1.bf16.msra.mxu0 %v1655
  %2433 = vmatprep.subr.bf16.mxu0 %v1660
  %2434 = vmatpush1.bf16.msra.mxu0 %v1659
  %2435 = vmatprep.subr.bf16.mxu0 %v1664
  %2436 = vmatpush1.bf16.msra.mxu0 %v1663
  %2437 = vmatprep.subr.bf16.mxu0 %v1668
  %2438 = vmatpush1.bf16.msra.mxu0 %v1667
  %2439 = vmatprep.subr.bf16.mxu0 %v1672
  %2440 = vmatpush1.bf16.msra.mxu0 %v1671
  %2441 = vmatprep.subr.bf16.mxu0 %v1676
  %2442 = vmatpush1.bf16.msra.mxu0 %v1675
  %2443 = vmatprep.subr.bf16.mxu0 %v1680
  %2444 = vmatpush1.bf16.msra.mxu0 %v1679
  %2445 = vmatprep.subr.bf16.mxu0 %v1684
  %2446 = vmatpush1.bf16.msra.mxu0 %v1683
  %2447 = vmatprep.subr.bf16.mxu0 %v1688
  %2448 = vmatpush1.bf16.msra.mxu0 %v1687
  %2449 = vmatprep.subr.bf16.mxu0 %v1692
  %2450 = vmatpush1.bf16.msra.mxu0 %v1691
  %2451 = vmatprep.mubr.bf16.mxu0 %v29
  %2452 = vmatmul.mubr.bf16.gmra.mrb[0].mxu0 %v28
  %v2453 = vpop.f32.mrb[0].mxu0
  %v2454 = vadd.f32 %v438, %v2453
  %v2455 = vpop.f32.mrb[0].mxu0
  %v2456 = vadd.f32 %v442, %v2455
  %v2457 = vpop.f32.mrb[0].mxu0
  %v2458 = vpop.f32.mrb[0].mxu0
  %2459 = vdwg.mxu0
  %2460 = vmatprep.subr.bf16.mxu0 %v1696
  %2461 = vmatpush1.bf16.msra.mxu0 %v1695
  %2462 = vmatprep.subr.bf16.mxu0 %v1700
  %2463 = vmatpush1.bf16.msra.mxu0 %v1699
  %2464 = vmatprep.subr.bf16.mxu0 %v1704
  %2465 = vmatpush1.bf16.msra.mxu0 %v1703
  %2466 = vmatprep.subr.bf16.mxu0 %v1708
  %2467 = vmatpush1.bf16.msra.mxu0 %v1707
  %2468 = vmatprep.subr.bf16.mxu0 %v1712
  %2469 = vmatpush1.bf16.msra.mxu0 %v1711
  %2470 = vmatprep.subr.bf16.mxu0 %v1716
  %2471 = vmatpush1.bf16.msra.mxu0 %v1715
  %2472 = vmatprep.subr.bf16.mxu0 %v1720
  %2473 = vmatpush1.bf16.msra.mxu0 %v1719
  %2474 = vmatprep.subr.bf16.mxu0 %v1724
  %2475 = vmatpush1.bf16.msra.mxu0 %v1723
  %2476 = vmatprep.subr.bf16.mxu0 %v1728
  %2477 = vmatpush1.bf16.msra.mxu0 %v1727
  %2478 = vmatprep.subr.bf16.mxu0 %v1732
  %2479 = vmatpush1.bf16.msra.mxu0 %v1731
  %2480 = vmatprep.subr.bf16.mxu0 %v1736
  %2481 = vmatpush1.bf16.msra.mxu0 %v1735
  %2482 = vmatprep.subr.bf16.mxu0 %v1740
  %2483 = vmatpush1.bf16.msra.mxu0 %v1739
  %2484 = vmatprep.subr.bf16.mxu0 %v1744
  %2485 = vmatpush1.bf16.msra.mxu0 %v1743
  %2486 = vmatprep.subr.bf16.mxu0 %v1748
  %2487 = vmatpush1.bf16.msra.mxu0 %v1747
  %2488 = vmatprep.subr.bf16.mxu0 %v1752
  %2489 = vmatpush1.bf16.msra.mxu0 %v1751
  %2490 = vmatprep.subr.bf16.mxu0 %v1756
  %2491 = vmatpush1.bf16.msra.mxu0 %v1755
  %2492 = vmatprep.mubr.bf16.mxu0 %v31
  %2493 = vmatmul.mubr.bf16.gmra.mrb[0].mxu0 %v30
  %v2494 = vpop.f32.mrb[0].mxu0
  %v2495 = vadd.f32 %v2454, %v2494
  %v2496 = vpop.f32.mrb[0].mxu0
  %v2497 = vadd.f32 %v2456, %v2496
  %v2498 = vpop.f32.mrb[0].mxu0
  %v2499 = vpop.f32.mrb[0].mxu0
  %2500 = vdwg.mxu0
  %2501 = vmatprep.subr.bf16.mxu0 %v1760
  %2502 = vmatpush1.bf16.msra.mxu0 %v1759
  %2503 = vmatprep.subr.bf16.mxu0 %v1764
  %2504 = vmatpush1.bf16.msra.mxu0 %v1763
  %2505 = vmatprep.subr.bf16.mxu0 %v1768
  %2506 = vmatpush1.bf16.msra.mxu0 %v1767
  %2507 = vmatprep.subr.bf16.mxu0 %v1772
  %2508 = vmatpush1.bf16.msra.mxu0 %v1771
  %2509 = vmatprep.subr.bf16.mxu0 %v1776
  %2510 = vmatpush1.bf16.msra.mxu0 %v1775
  %2511 = vmatprep.subr.bf16.mxu0 %v1780
  %2512 = vmatpush1.bf16.msra.mxu0 %v1779
  %2513 = vmatprep.subr.bf16.mxu0 %v1784
  %2514 = vmatpush1.bf16.msra.mxu0 %v1783
  %2515 = vmatprep.subr.bf16.mxu0 %v1788
  %2516 = vmatpush1.bf16.msra.mxu0 %v1787
  %2517 = vmatprep.subr.bf16.mxu0 %v1792
  %2518 = vmatpush1.bf16.msra.mxu0 %v1791
  %2519 = vmatprep.subr.bf16.mxu0 %v1796
  %2520 = vmatpush1.bf16.msra.mxu0 %v1795
  %2521 = vmatprep.subr.bf16.mxu0 %v1800
  %2522 = vmatpush1.bf16.msra.mxu0 %v1799
  %2523 = vmatprep.subr.bf16.mxu0 %v1804
  %2524 = vmatpush1.bf16.msra.mxu0 %v1803
  %2525 = vmatprep.subr.bf16.mxu0 %v1808
  %2526 = vmatpush1.bf16.msra.mxu0 %v1807
  %2527 = vmatprep.subr.bf16.mxu0 %v1812
  %2528 = vmatpush1.bf16.msra.mxu0 %v1811
  %2529 = vmatprep.subr.bf16.mxu0 %v1816
  %2530 = vmatpush1.bf16.msra.mxu0 %v1815
  %2531 = vmatprep.subr.bf16.mxu0 %v1820
  %2532 = vmatpush1.bf16.msra.mxu0 %v1819
  %2533 = vmatprep.mubr.bf16.mxu0 %v33
  %2534 = vmatmul.mubr.bf16.gmra.mrb[0].mxu0 %v32
  %v2535 = vpop.f32.mrb[0].mxu0
  %v2536 = vadd.f32 %v2495, %v2535
  %v2537 = vpop.f32.mrb[0].mxu0
  %v2538 = vadd.f32 %v2497, %v2537
  %v2539 = vpop.f32.mrb[0].mxu0
  %v2540 = vpop.f32.mrb[0].mxu0
  %2541 = vdwg.mxu0
  %2542 = vmatprep.subr.bf16.mxu0 %v1824
  %2543 = vmatpush1.bf16.msra.mxu0 %v1823
  %2544 = vmatprep.subr.bf16.mxu0 %v1828
  %2545 = vmatpush1.bf16.msra.mxu0 %v1827
  %2546 = vmatprep.subr.bf16.mxu0 %v1832
  %2547 = vmatpush1.bf16.msra.mxu0 %v1831
  %2548 = vmatprep.subr.bf16.mxu0 %v1836
  %2549 = vmatpush1.bf16.msra.mxu0 %v1835
  %2550 = vmatprep.subr.bf16.mxu0 %v1840
  %2551 = vmatpush1.bf16.msra.mxu0 %v1839
  %2552 = vmatprep.subr.bf16.mxu0 %v1844
  %2553 = vmatpush1.bf16.msra.mxu0 %v1843
  %2554 = vmatprep.subr.bf16.mxu0 %v1848
  %2555 = vmatpush1.bf16.msra.mxu0 %v1847
  %2556 = vmatprep.subr.bf16.mxu0 %v1852
  %2557 = vmatpush1.bf16.msra.mxu0 %v1851
  %2558 = vmatprep.subr.bf16.mxu0 %v1856
  %2559 = vmatpush1.bf16.msra.mxu0 %v1855
  %2560 = vmatprep.subr.bf16.mxu0 %v1860
  %2561 = vmatpush1.bf16.msra.mxu0 %v1859
  %2562 = vmatprep.subr.bf16.mxu0 %v1864
  %2563 = vmatpush1.bf16.msra.mxu0 %v1863
  %2564 = vmatprep.subr.bf16.mxu0 %v1868
  %2565 = vmatpush1.bf16.msra.mxu0 %v1867
  %2566 = vmatprep.subr.bf16.mxu0 %v1872
  %2567 = vmatpush1.bf16.msra.mxu0 %v1871
  %2568 = vmatprep.subr.bf16.mxu0 %v1876
  %2569 = vmatpush1.bf16.msra.mxu0 %v1875
  %2570 = vmatprep.subr.bf16.mxu0 %v1880
  %2571 = vmatpush1.bf16.msra.mxu0 %v1879
  %2572 = vmatprep.subr.bf16.mxu0 %v1884
  %2573 = vmatpush1.bf16.msra.mxu0 %v1883
  %2574 = vmatprep.mubr.bf16.mxu0 %v35
  %2575 = vmatmul.mubr.bf16.gmra.mrb[0].mxu0 %v34
  %v2576 = vpop.f32.mrb[0].mxu0
  %v2577 = vadd.f32 %v2536, %v2576
  %v2578 = vpop.f32.mrb[0].mxu0
  %v2579 = vadd.f32 %v2538, %v2578
  %v2580 = vpop.f32.mrb[0].mxu0
  %v2581 = vpop.f32.mrb[0].mxu0
  %2582 = vdwg.mxu0
  %2583 = vmatprep.subr.bf16.mxu0 %v1888
  %2584 = vmatpush1.bf16.msra.mxu0 %v1887
  %2585 = vmatprep.subr.bf16.mxu0 %v1892
  %2586 = vmatpush1.bf16.msra.mxu0 %v1891
  %2587 = vmatprep.subr.bf16.mxu0 %v1896
  %2588 = vmatpush1.bf16.msra.mxu0 %v1895
  %2589 = vmatprep.subr.bf16.mxu0 %v1900
  %2590 = vmatpush1.bf16.msra.mxu0 %v1899
  %2591 = vmatprep.subr.bf16.mxu0 %v1904
  %2592 = vmatpush1.bf16.msra.mxu0 %v1903
  %2593 = vmatprep.subr.bf16.mxu0 %v1908
  %2594 = vmatpush1.bf16.msra.mxu0 %v1907
  %2595 = vmatprep.subr.bf16.mxu0 %v1912
  %2596 = vmatpush1.bf16.msra.mxu0 %v1911
  %2597 = vmatprep.subr.bf16.mxu0 %v1916
  %2598 = vmatpush1.bf16.msra.mxu0 %v1915
  %2599 = vmatprep.subr.bf16.mxu0 %v1920
  %2600 = vmatpush1.bf16.msra.mxu0 %v1919
  %2601 = vmatprep.subr.bf16.mxu0 %v1924
  %2602 = vmatpush1.bf16.msra.mxu0 %v1923
  %2603 = vmatprep.subr.bf16.mxu0 %v1928
  %2604 = vmatpush1.bf16.msra.mxu0 %v1927
  %2605 = vmatprep.subr.bf16.mxu0 %v1932
  %2606 = vmatpush1.bf16.msra.mxu0 %v1931
  %2607 = vmatprep.subr.bf16.mxu0 %v1936
  %2608 = vmatpush1.bf16.msra.mxu0 %v1935
  %2609 = vmatprep.subr.bf16.mxu0 %v1940
  %2610 = vmatpush1.bf16.msra.mxu0 %v1939
  %2611 = vmatprep.subr.bf16.mxu0 %v1944
  %2612 = vmatpush1.bf16.msra.mxu0 %v1943
  %2613 = vmatprep.subr.bf16.mxu0 %v1948
  %2614 = vmatpush1.bf16.msra.mxu0 %v1947
  %2615 = vmatprep.mubr.bf16.mxu0 %v37
  %2616 = vmatmul.mubr.bf16.gmra.mrb[0].mxu0 %v36
  %v2617 = vpop.f32.mrb[0].mxu0
  %v2618 = vadd.f32 %v2577, %v2617
  %v2619 = vpop.f32.mrb[0].mxu0
  %v2620 = vadd.f32 %v2579, %v2619
  %v2621 = vpop.f32.mrb[0].mxu0
  %v2622 = vpop.f32.mrb[0].mxu0
  %2623 = vdwg.mxu0
  %2624 = vmatprep.subr.bf16.mxu0 %v1952
  %2625 = vmatpush1.bf16.msra.mxu0 %v1951
  %2626 = vmatprep.subr.bf16.mxu0 %v1956
  %2627 = vmatpush1.bf16.msra.mxu0 %v1955
  %2628 = vmatprep.subr.bf16.mxu0 %v1960
  %2629 = vmatpush1.bf16.msra.mxu0 %v1959
  %2630 = vmatprep.subr.bf16.mxu0 %v1964
  %2631 = vmatpush1.bf16.msra.mxu0 %v1963
  %2632 = vmatprep.subr.bf16.mxu0 %v1968
  %2633 = vmatpush1.bf16.msra.mxu0 %v1967
  %2634 = vmatprep.subr.bf16.mxu0 %v1972
  %2635 = vmatpush1.bf16.msra.mxu0 %v1971
  %2636 = vmatprep.subr.bf16.mxu0 %v1976
  %2637 = vmatpush1.bf16.msra.mxu0 %v1975
  %2638 = vmatprep.subr.bf16.mxu0 %v1980
  %2639 = vmatpush1.bf16.msra.mxu0 %v1979
  %2640 = vmatprep.subr.bf16.mxu0 %v1984
  %2641 = vmatpush1.bf16.msra.mxu0 %v1983
  %2642 = vmatprep.subr.bf16.mxu0 %v1988
  %2643 = vmatpush1.bf16.msra.mxu0 %v1987
  %2644 = vmatprep.subr.bf16.mxu0 %v1992
  %2645 = vmatpush1.bf16.msra.mxu0 %v1991
  %2646 = vmatprep.subr.bf16.mxu0 %v1996
  %2647 = vmatpush1.bf16.msra.mxu0 %v1995
  %2648 = vmatprep.subr.bf16.mxu0 %v2000
  %2649 = vmatpush1.bf16.msra.mxu0 %v1999
  %2650 = vmatprep.subr.bf16.mxu0 %v2004
  %2651 = vmatpush1.bf16.msra.mxu0 %v2003
  %2652 = vmatprep.subr.bf16.mxu0 %v2008
  %2653 = vmatpush1.bf16.msra.mxu0 %v2007
  %2654 = vmatprep.subr.bf16.mxu0 %v2012
  %2655 = vmatpush1.bf16.msra.mxu0 %v2011
  %2656 = vmatprep.mubr.bf16.mxu0 %v39
  %2657 = vmatmul.mubr.bf16.gmra.mrb[0].mxu0 %v38
  %v2658 = vpop.f32.mrb[0].mxu0
  %v2659 = vadd.f32 %v2618, %v2658
  %v2660 = vpop.f32.mrb[0].mxu0
  %v2661 = vadd.f32 %v2620, %v2660
  %v2662 = vpop.f32.mrb[0].mxu0
  %v2663 = vpop.f32.mrb[0].mxu0
  %2664 = vdwg.mxu0
  %2665 = vmatprep.subr.bf16.mxu0 %v2016
  %2666 = vmatpush1.bf16.msra.mxu0 %v2015
  %2667 = vmatprep.subr.bf16.mxu0 %v2020
  %2668 = vmatpush1.bf16.msra.mxu0 %v2019
  %2669 = vmatprep.subr.bf16.mxu0 0
  %2670 = vmatpush1.bf16.msra.mxu0 0
  %2671 = vmatprep.subr.bf16.mxu0 0
  %2672 = vmatpush1.bf16.msra.mxu0 0
  %2673 = vmatprep.subr.bf16.mxu0 0
  %2674 = vmatpush1.bf16.msra.mxu0 0
  %2675 = vmatprep.subr.bf16.mxu0 0
  %2676 = vmatpush1.bf16.msra.mxu0 0
  %2677 = vmatprep.subr.bf16.mxu0 0
  %2678 = vmatpush1.bf16.msra.mxu0 0
  %2679 = vmatprep.subr.bf16.mxu0 0
  %2680 = vmatpush1.bf16.msra.mxu0 0
  %2681 = vmatprep.subr.bf16.mxu0 0
  %2682 = vmatpush1.bf16.msra.mxu0 0
  %2683 = vmatprep.subr.bf16.mxu0 0
  %2684 = vmatpush1.bf16.msra.mxu0 0
  %2685 = vmatprep.subr.bf16.mxu0 0
  %2686 = vmatpush1.bf16.msra.mxu0 0
  %2687 = vmatprep.subr.bf16.mxu0 0
  %2688 = vmatpush1.bf16.msra.mxu0 0
  %2689 = vmatprep.subr.bf16.mxu0 0
  %2690 = vmatpush1.bf16.msra.mxu0 0
  %2691 = vmatprep.subr.bf16.mxu0 0
  %2692 = vmatpush1.bf16.msra.mxu0 0
  %2693 = vmatprep.subr.bf16.mxu0 0
  %2694 = vmatpush1.bf16.msra.mxu0 0
  %2695 = vmatprep.subr.bf16.mxu0 0
  %2696 = vmatpush1.bf16.msra.mxu0 0
  %2697 = vmatprep.mubr.bf16.mxu0 0
  %2698 = vmatmul.mubr.bf16.gmra.mrb[0].mxu0 %v2417
  %v2699 = vpop.f32.mrb[0].mxu0
  %v2700 = vadd.f32 %v2659, %v2699
  %v2701 = vpop.f32.mrb[0].mxu0
  %v2702 = vadd.f32 %v2661, %v2701
  %v2703 = vpop.f32.mrb[0].mxu0
  %v2704 = vpop.f32.mrb[0].mxu0
  %2705 = vdwg.mxu0
  %2706 = vmatprep.subr.bf16.mxu0 %v1634
  %2707 = vmatpush1.bf16.msra.mxu0 %v1633
  %2708 = vmatprep.subr.bf16.mxu0 %v1638
  %2709 = vmatpush1.bf16.msra.mxu0 %v1637
  %2710 = vmatprep.subr.bf16.mxu0 %v1642
  %2711 = vmatpush1.bf16.msra.mxu0 %v1641
  %2712 = vmatprep.subr.bf16.mxu0 %v1646
  %2713 = vmatpush1.bf16.msra.mxu0 %v1645
  %2714 = vmatprep.subr.bf16.mxu0 %v1650
  %2715 = vmatpush1.bf16.msra.mxu0 %v1649
  %2716 = vmatprep.subr.bf16.mxu0 %v1654
  %2717 = vmatpush1.bf16.msra.mxu0 %v1653
  %2718 = vmatprep.subr.bf16.mxu0 %v1658
  %2719 = vmatpush1.bf16.msra.mxu0 %v1657
  %2720 = vmatprep.subr.bf16.mxu0 %v1662
  %2721 = vmatpush1.bf16.msra.mxu0 %v1661
  %2722 = vmatprep.subr.bf16.mxu0 %v1666
  %2723 = vmatpush1.bf16.msra.mxu0 %v1665
  %2724 = vmatprep.subr.bf16.mxu0 %v1670
  %2725 = vmatpush1.bf16.msra.mxu0 %v1669
  %2726 = vmatprep.subr.bf16.mxu0 %v1674
  %2727 = vmatpush1.bf16.msra.mxu0 %v1673
  %2728 = vmatprep.subr.bf16.mxu0 %v1678
  %2729 = vmatpush1.bf16.msra.mxu0 %v1677
  %2730 = vmatprep.subr.bf16.mxu0 %v1682
  %2731 = vmatpush1.bf16.msra.mxu0 %v1681
  %2732 = vmatprep.subr.bf16.mxu0 %v1686
  %2733 = vmatpush1.bf16.msra.mxu0 %v1685
  %2734 = vmatprep.subr.bf16.mxu0 %v1690
  %2735 = vmatpush1.bf16.msra.mxu0 %v1689
  %2736 = vmatprep.subr.bf16.mxu0 %v1694
  %2737 = vmatpush1.bf16.msra.mxu0 %v1693
  %2738 = vmatprep.mubr.bf16.mxu0 %v29
  %2739 = vmatmul.mubr.bf16.gmra.mrb[0].mxu0 %v28
  %v2740 = vpop.f32.mrb[0].mxu0
  %v2741 = vadd.f32 %v446, %v2740
  %v2742 = vpop.f32.mrb[0].mxu0
  %v2743 = vadd.f32 %v450, %v2742
  %v2744 = vpop.f32.mrb[0].mxu0
  %v2745 = vpop.f32.mrb[0].mxu0
  %2746 = vdwg.mxu0
  %2747 = vmatprep.subr.bf16.mxu0 %v1698
  %2748 = vmatpush1.bf16.msra.mxu0 %v1697
  %2749 = vmatprep.subr.bf16.mxu0 %v1702
  %2750 = vmatpush1.bf16.msra.mxu0 %v1701
  %2751 = vmatprep.subr.bf16.mxu0 %v1706
  %2752 = vmatpush1.bf16.msra.mxu0 %v1705
  %2753 = vmatprep.subr.bf16.mxu0 %v1710
  %2754 = vmatpush1.bf16.msra.mxu0 %v1709
  %2755 = vmatprep.subr.bf16.mxu0 %v1714
  %2756 = vmatpush1.bf16.msra.mxu0 %v1713
  %2757 = vmatprep.subr.bf16.mxu0 %v1718
  %2758 = vmatpush1.bf16.msra.mxu0 %v1717
  %2759 = vmatprep.subr.bf16.mxu0 %v1722
  %2760 = vmatpush1.bf16.msra.mxu0 %v1721
  %2761 = vmatprep.subr.bf16.mxu0 %v1726
  %2762 = vmatpush1.bf16.msra.mxu0 %v1725
  %2763 = vmatprep.subr.bf16.mxu0 %v1730
  %2764 = vmatpush1.bf16.msra.mxu0 %v1729
  %2765 = vmatprep.subr.bf16.mxu0 %v1734
  %2766 = vmatpush1.bf16.msra.mxu0 %v1733
  %2767 = vmatprep.subr.bf16.mxu0 %v1738
  %2768 = vmatpush1.bf16.msra.mxu0 %v1737
  %2769 = vmatprep.subr.bf16.mxu0 %v1742
  %2770 = vmatpush1.bf16.msra.mxu0 %v1741
  %2771 = vmatprep.subr.bf16.mxu0 %v1746
  %2772 = vmatpush1.bf16.msra.mxu0 %v1745
  %2773 = vmatprep.subr.bf16.mxu0 %v1750
  %2774 = vmatpush1.bf16.msra.mxu0 %v1749
  %2775 = vmatprep.subr.bf16.mxu0 %v1754
  %2776 = vmatpush1.bf16.msra.mxu0 %v1753
  %2777 = vmatprep.subr.bf16.mxu0 %v1758
  %2778 = vmatpush1.bf16.msra.mxu0 %v1757
  %2779 = vmatprep.mubr.bf16.mxu0 %v31
  %2780 = vmatmul.mubr.bf16.gmra.mrb[0].mxu0 %v30
  %v2781 = vpop.f32.mrb[0].mxu0
  %v2782 = vadd.f32 %v2741, %v2781
  %v2783 = vpop.f32.mrb[0].mxu0
  %v2784 = vadd.f32 %v2743, %v2783
  %v2785 = vpop.f32.mrb[0].mxu0
  %v2786 = vpop.f32.mrb[0].mxu0
  %2787 = vdwg.mxu0
  %2788 = vmatprep.subr.bf16.mxu0 %v1762
  %2789 = vmatpush1.bf16.msra.mxu0 %v1761
  %2790 = vmatprep.subr.bf16.mxu0 %v1766
  %2791 = vmatpush1.bf16.msra.mxu0 %v1765
  %2792 = vmatprep.subr.bf16.mxu0 %v1770
  %2793 = vmatpush1.bf16.msra.mxu0 %v1769
  %2794 = vmatprep.subr.bf16.mxu0 %v1774
  %2795 = vmatpush1.bf16.msra.mxu0 %v1773
  %2796 = vmatprep.subr.bf16.mxu0 %v1778
  %2797 = vmatpush1.bf16.msra.mxu0 %v1777
  %2798 = vmatprep.subr.bf16.mxu0 %v1782
  %2799 = vmatpush1.bf16.msra.mxu0 %v1781
  %2800 = vmatprep.subr.bf16.mxu0 %v1786
  %2801 = vmatpush1.bf16.msra.mxu0 %v1785
  %2802 = vmatprep.subr.bf16.mxu0 %v1790
  %2803 = vmatpush1.bf16.msra.mxu0 %v1789
  %2804 = vmatprep.subr.bf16.mxu0 %v1794
  %2805 = vmatpush1.bf16.msra.mxu0 %v1793
  %2806 = vmatprep.subr.bf16.mxu0 %v1798
  %2807 = vmatpush1.bf16.msra.mxu0 %v1797
  %2808 = vmatprep.subr.bf16.mxu0 %v1802
  %2809 = vmatpush1.bf16.msra.mxu0 %v1801
  %2810 = vmatprep.subr.bf16.mxu0 %v1806
  %2811 = vmatpush1.bf16.msra.mxu0 %v1805
  %2812 = vmatprep.subr.bf16.mxu0 %v1810
  %2813 = vmatpush1.bf16.msra.mxu0 %v1809
  %2814 = vmatprep.subr.bf16.mxu0 %v1814
  %2815 = vmatpush1.bf16.msra.mxu0 %v1813
  %2816 = vmatprep.subr.bf16.mxu0 %v1818
  %2817 = vmatpush1.bf16.msra.mxu0 %v1817
  %2818 = vmatprep.subr.bf16.mxu0 %v1822
  %2819 = vmatpush1.bf16.msra.mxu0 %v1821
  %2820 = vmatprep.mubr.bf16.mxu0 %v33
  %2821 = vmatmul.mubr.bf16.gmra.mrb[0].mxu0 %v32
  %v2822 = vpop.f32.mrb[0].mxu0
  %v2823 = vadd.f32 %v2782, %v2822
  %v2824 = vpop.f32.mrb[0].mxu0
  %v2825 = vadd.f32 %v2784, %v2824
  %v2826 = vpop.f32.mrb[0].mxu0
  %v2827 = vpop.f32.mrb[0].mxu0
  %2828 = vdwg.mxu0
  %2829 = vmatprep.subr.bf16.mxu0 %v1826
  %2830 = vmatpush1.bf16.msra.mxu0 %v1825
  %2831 = vmatprep.subr.bf16.mxu0 %v1830
  %2832 = vmatpush1.bf16.msra.mxu0 %v1829
  %2833 = vmatprep.subr.bf16.mxu0 %v1834
  %2834 = vmatpush1.bf16.msra.mxu0 %v1833
  %2835 = vmatprep.subr.bf16.mxu0 %v1838
  %2836 = vmatpush1.bf16.msra.mxu0 %v1837
  %2837 = vmatprep.subr.bf16.mxu0 %v1842
  %2838 = vmatpush1.bf16.msra.mxu0 %v1841
  %2839 = vmatprep.subr.bf16.mxu0 %v1846
  %2840 = vmatpush1.bf16.msra.mxu0 %v1845
  %2841 = vmatprep.subr.bf16.mxu0 %v1850
  %2842 = vmatpush1.bf16.msra.mxu0 %v1849
  %2843 = vmatprep.subr.bf16.mxu0 %v1854
  %2844 = vmatpush1.bf16.msra.mxu0 %v1853
  %2845 = vmatprep.subr.bf16.mxu0 %v1858
  %2846 = vmatpush1.bf16.msra.mxu0 %v1857
  %2847 = vmatprep.subr.bf16.mxu0 %v1862
  %2848 = vmatpush1.bf16.msra.mxu0 %v1861
  %2849 = vmatprep.subr.bf16.mxu0 %v1866
  %2850 = vmatpush1.bf16.msra.mxu0 %v1865
  %2851 = vmatprep.subr.bf16.mxu0 %v1870
  %2852 = vmatpush1.bf16.msra.mxu0 %v1869
  %2853 = vmatprep.subr.bf16.mxu0 %v1874
  %2854 = vmatpush1.bf16.msra.mxu0 %v1873
  %2855 = vmatprep.subr.bf16.mxu0 %v1878
  %2856 = vmatpush1.bf16.msra.mxu0 %v1877
  %2857 = vmatprep.subr.bf16.mxu0 %v1882
  %2858 = vmatpush1.bf16.msra.mxu0 %v1881
  %2859 = vmatprep.subr.bf16.mxu0 %v1886
  %2860 = vmatpush1.bf16.msra.mxu0 %v1885
  %2861 = vmatprep.mubr.bf16.mxu0 %v35
  %2862 = vmatmul.mubr.bf16.gmra.mrb[0].mxu0 %v34
  %v2863 = vpop.f32.mrb[0].mxu0
  %v2864 = vadd.f32 %v2823, %v2863
  %v2865 = vpop.f32.mrb[0].mxu0
  %v2866 = vadd.f32 %v2825, %v2865
  %v2867 = vpop.f32.mrb[0].mxu0
  %v2868 = vpop.f32.mrb[0].mxu0
  %2869 = vdwg.mxu0
  %2870 = vmatprep.subr.bf16.mxu0 %v1890
  %2871 = vmatpush1.bf16.msra.mxu0 %v1889
  %2872 = vmatprep.subr.bf16.mxu0 %v1894
  %2873 = vmatpush1.bf16.msra.mxu0 %v1893
  %2874 = vmatprep.subr.bf16.mxu0 %v1898
  %2875 = vmatpush1.bf16.msra.mxu0 %v1897
  %2876 = vmatprep.subr.bf16.mxu0 %v1902
  %2877 = vmatpush1.bf16.msra.mxu0 %v1901
  %2878 = vmatprep.subr.bf16.mxu0 %v1906
  %2879 = vmatpush1.bf16.msra.mxu0 %v1905
  %2880 = vmatprep.subr.bf16.mxu0 %v1910
  %2881 = vmatpush1.bf16.msra.mxu0 %v1909
  %2882 = vmatprep.subr.bf16.mxu0 %v1914
  %2883 = vmatpush1.bf16.msra.mxu0 %v1913
  %2884 = vmatprep.subr.bf16.mxu0 %v1918
  %2885 = vmatpush1.bf16.msra.mxu0 %v1917
  %2886 = vmatprep.subr.bf16.mxu0 %v1922
  %2887 = vmatpush1.bf16.msra.mxu0 %v1921
  %2888 = vmatprep.subr.bf16.mxu0 %v1926
  %2889 = vmatpush1.bf16.msra.mxu0 %v1925
  %2890 = vmatprep.subr.bf16.mxu0 %v1930
  %2891 = vmatpush1.bf16.msra.mxu0 %v1929
  %2892 = vmatprep.subr.bf16.mxu0 %v1934
  %2893 = vmatpush1.bf16.msra.mxu0 %v1933
  %2894 = vmatprep.subr.bf16.mxu0 %v1938
  %2895 = vmatpush1.bf16.msra.mxu0 %v1937
  %2896 = vmatprep.subr.bf16.mxu0 %v1942
  %2897 = vmatpush1.bf16.msra.mxu0 %v1941
  %2898 = vmatprep.subr.bf16.mxu0 %v1946
  %2899 = vmatpush1.bf16.msra.mxu0 %v1945
  %2900 = vmatprep.subr.bf16.mxu0 %v1950
  %2901 = vmatpush1.bf16.msra.mxu0 %v1949
  %2902 = vmatprep.mubr.bf16.mxu0 %v37
  %2903 = vmatmul.mubr.bf16.gmra.mrb[0].mxu0 %v36
  %v2904 = vpop.f32.mrb[0].mxu0
  %v2905 = vadd.f32 %v2864, %v2904
  %v2906 = vpop.f32.mrb[0].mxu0
  %v2907 = vadd.f32 %v2866, %v2906
  %v2908 = vpop.f32.mrb[0].mxu0
  %v2909 = vpop.f32.mrb[0].mxu0
  %2910 = vdwg.mxu0
  %2911 = vmatprep.subr.bf16.mxu0 %v1954
  %2912 = vmatpush1.bf16.msra.mxu0 %v1953
  %2913 = vmatprep.subr.bf16.mxu0 %v1958
  %2914 = vmatpush1.bf16.msra.mxu0 %v1957
  %2915 = vmatprep.subr.bf16.mxu0 %v1962
  %2916 = vmatpush1.bf16.msra.mxu0 %v1961
  %2917 = vmatprep.subr.bf16.mxu0 %v1966
  %2918 = vmatpush1.bf16.msra.mxu0 %v1965
  %2919 = vmatprep.subr.bf16.mxu0 %v1970
  %2920 = vmatpush1.bf16.msra.mxu0 %v1969
  %2921 = vmatprep.subr.bf16.mxu0 %v1974
  %2922 = vmatpush1.bf16.msra.mxu0 %v1973
  %2923 = vmatprep.subr.bf16.mxu0 %v1978
  %2924 = vmatpush1.bf16.msra.mxu0 %v1977
  %2925 = vmatprep.subr.bf16.mxu0 %v1982
  %2926 = vmatpush1.bf16.msra.mxu0 %v1981
  %2927 = vmatprep.subr.bf16.mxu0 %v1986
  %2928 = vmatpush1.bf16.msra.mxu0 %v1985
  %2929 = vmatprep.subr.bf16.mxu0 %v1990
  %2930 = vmatpush1.bf16.msra.mxu0 %v1989
  %2931 = vmatprep.subr.bf16.mxu0 %v1994
  %2932 = vmatpush1.bf16.msra.mxu0 %v1993
  %2933 = vmatprep.subr.bf16.mxu0 %v1998
  %2934 = vmatpush1.bf16.msra.mxu0 %v1997
  %2935 = vmatprep.subr.bf16.mxu0 %v2002
  %2936 = vmatpush1.bf16.msra.mxu0 %v2001
  %2937 = vmatprep.subr.bf16.mxu0 %v2006
  %2938 = vmatpush1.bf16.msra.mxu0 %v2005
  %2939 = vmatprep.subr.bf16.mxu0 %v2010
  %2940 = vmatpush1.bf16.msra.mxu0 %v2009
  %2941 = vmatprep.subr.bf16.mxu0 %v2014
  %2942 = vmatpush1.bf16.msra.mxu0 %v2013
  %2943 = vmatprep.mubr.bf16.mxu0 %v39
  %2944 = vmatmul.mubr.bf16.gmra.mrb[0].mxu0 %v38
  %v2945 = vpop.f32.mrb[0].mxu0
  %v2946 = vadd.f32 %v2905, %v2945
  %v2947 = vpop.f32.mrb[0].mxu0
  %v2948 = vadd.f32 %v2907, %v2947
  %v2949 = vpop.f32.mrb[0].mxu0
  %v2950 = vpop.f32.mrb[0].mxu0
  %2951 = vdwg.mxu0
  %2952 = vmatprep.subr.bf16.mxu0 %v2018
  %2953 = vmatpush1.bf16.msra.mxu0 %v2017
  %2954 = vmatprep.subr.bf16.mxu0 %v2022
  %2955 = vmatpush1.bf16.msra.mxu0 %v2021
  %2956 = vmatprep.subr.bf16.mxu0 0
  %2957 = vmatpush1.bf16.msra.mxu0 0
  %2958 = vmatprep.subr.bf16.mxu0 0
  %2959 = vmatpush1.bf16.msra.mxu0 0
  %2960 = vmatprep.subr.bf16.mxu0 0
  %2961 = vmatpush1.bf16.msra.mxu0 0
  %2962 = vmatprep.subr.bf16.mxu0 0
  %2963 = vmatpush1.bf16.msra.mxu0 0
  %2964 = vmatprep.subr.bf16.mxu0 0
  %2965 = vmatpush1.bf16.msra.mxu0 0
  %2966 = vmatprep.subr.bf16.mxu0 0
  %2967 = vmatpush1.bf16.msra.mxu0 0
  %2968 = vmatprep.subr.bf16.mxu0 0
  %2969 = vmatpush1.bf16.msra.mxu0 0
  %2970 = vmatprep.subr.bf16.mxu0 0
  %2971 = vmatpush1.bf16.msra.mxu0 0
  %2972 = vmatprep.subr.bf16.mxu0 0
  %2973 = vmatpush1.bf16.msra.mxu0 0
  %2974 = vmatprep.subr.bf16.mxu0 0
  %2975 = vmatpush1.bf16.msra.mxu0 0
  %2976 = vmatprep.subr.bf16.mxu0 0
  %2977 = vmatpush1.bf16.msra.mxu0 0
  %2978 = vmatprep.subr.bf16.mxu0 0
  %2979 = vmatpush1.bf16.msra.mxu0 0
  %2980 = vmatprep.subr.bf16.mxu0 0
  %2981 = vmatpush1.bf16.msra.mxu0 0
  %2982 = vmatprep.subr.bf16.mxu0 0
  %2983 = vmatpush1.bf16.msra.mxu0 0
  %2984 = vmatprep.mubr.bf16.mxu0 0
  %2985 = vmatmul.mubr.bf16.gmra.mrb[0].mxu0 %v2417
  %v2986 = vpop.f32.mrb[0].mxu0
  %v2987 = vadd.f32 %v2946, %v2986
  %v2988 = vpop.f32.mrb[0].mxu0
  %v2989 = vadd.f32 %v2948, %v2988
  %v2990 = vpop.f32.mrb[0].mxu0
  %v2991 = vpop.f32.mrb[0].mxu0
  %2992 = vdwg.mxu0
  %v2993 = vadd.f32 %v2700, %v2702
  %v2994 = vadd.f32 %v2993, %v2987
  %v2995 = vadd.f32 %v2994, %v2989
  %2996 = vadd.xlane.f32.xlu0 %v2995
  %v2997 = vpop.xlane.xlu0 %2996
  %v2998 = vrcp.pop 512.0
  %v2999 = vmul.f32 %v2997, %v2998
  %v3000 = vsub.f32 %v2700, %v2999
  %v3001 = vsub.f32 %v2702, %v2999
  %v3002 = vsub.f32 %v2987, %v2999
  %v3003 = vsub.f32 %v2989, %v2999
  %v3004 = vmul.f32 %v3000, %v3000
  %v3005 = vmul.f32 %v3001, %v3001
  %v3006 = vmul.f32 %v3002, %v3002
  %v3007 = vmul.f32 %v3003, %v3003
  %v3008 = vadd.f32 %v3004, %v3005
  %v3009 = vadd.f32 %v3008, %v3006
  %v3010 = vadd.f32 %v3009, %v3007
  %3011 = vadd.xlane.f32.xlu0 %v3010
  %v3012 = vpop.xlane.xlu0 %3011
  %v3013 = vmul.f32 %v3012, %v2998
  %v3014 = vadd.f32 %v3013, 1e-05
  %v3015 = vrsqrt.pop %v3014
  %v3016 = vmul.f32 %v3000, %v3015
  %v3017 = vmul.f32 %v3001, %v3015
  %v3018 = vmul.f32 %v3002, %v3015
  %v3019 = vmul.f32 %v3003, %v3015
  %vm3020 = vcmp.gt.f32.partialorder %v3016, 0.0
  %vm3021 = vcmp.gt.f32.partialorder %v3017, 0.0
  %vm3022 = vcmp.gt.f32.partialorder %v3018, 0.0
  %vm3023 = vcmp.gt.f32.partialorder %v3019, 0.0
  %v3024 = vmin.f32 %v3016, 0.0
  %v3025 = vmin.f32 %v3017, 0.0
  %v3026 = vmin.f32 %v3018, 0.0
  %v3027 = vmin.f32 %v3019, 0.0
  %v3028 = vmul.f32 %v3024, 1.442695
  %v3029 = vpow.pop %v3028
  %v3030 = vmul.f32 %v3025, 1.442695
  %v3031 = vpow.pop %v3030
  %v3032 = vmul.f32 %v3026, 1.442695
  %v3033 = vpow.pop %v3032
  %v3034 = vmul.f32 %v3027, 1.442695
  %v3035 = vpow.pop %v3034
  %v3036 = vsub.f32 %v3029, 1.0
  %v3037 = vsub.f32 %v3031, 1.0
  %v3038 = vsub.f32 %v3033, 1.0
  %v3039 = vsub.f32 %v3035, 1.0
  %v3040 = vsel %vm3020, %v3016, %v3036
  %v3041 = vsel %vm3021, %v3017, %v3037
  %v3042 = vsel %vm3022, %v3018, %v3038
  %v3043 = vsel %vm3023, %v3019, %v3039
  %3044 = vst [vmem:[%s3] sm:$0xff] %v3040
  %3045 = vst [vmem:[%s3 + $0x8] sm:$0xff] %v3041
  %3046 = vst [vmem:[%s3 + $0x10] sm:$0xff] %v3042
  %3047 = vst [vmem:[%s3 + $0x18] sm:$0xff] %v3043
  // Predicated region
  $region14: #{cnn_forward.3} parent=0 // pred_check
    _
  $region15: #{cnn_forward.3} parent=0 // pred_check_branch
    %3049 = sbr.rel (0) target = $region17
  $region16: #{cnn_forward.3} parent=0 // pred_region
    _
  $region17: #{cnn_forward.3} parent=0 // pred_fallthru
    _
  // Predicated region
  $region18: #{cnn_forward.3} parent=0 // pred_check
    _
  $region19: #{cnn_forward.3} parent=0 // pred_check_branch
    %3051 = sbr.rel (0) target = $region21
  $region20: #{cnn_forward.3} parent=0 // pred_region
    _
  $region21: #{cnn_forward.3} parent=0 // pred_fallthru
    _

</llo_original>
